<compile_context>
chip_gen: v6e
topology: v6e:2x2x1
jax: 0.10.0
libtpu: 0.0.40
codegen_flags: <defaults>
</compile_context>

<pallas_src>
import jax
import jax.numpy as jnp
from jax.experimental import pallas as pl
from jax.experimental.pallas import tpu as pltpu


_LANE = 128


def _round_up(x, m):
    return ((x + m - 1) // m) * m


def _cdiv(a, b):
    return -(-a // b)


def _leaky_relu(x, slope=0.2):
    return jnp.where(x > 0, x, slope * x)


def _mlp_kernel(x_ref,
                w1_ref, b1_ref,
                w2_ref, b2_ref,
                w3_ref, b3_ref,
                w4_ref, b4_ref,
                o_ref):
    # Matmul inputs are already in the (bf16) compute dtype; accumulate in f32
    # on the MXU; bias add + LeakyReLU in f32 on the VPU.
    cdt = w1_ref.dtype

    h = jnp.dot(x_ref[...], w1_ref[...], preferred_element_type=jnp.float32)
    h = _leaky_relu(h + b1_ref[...])

    h = jnp.dot(h.astype(cdt), w2_ref[...], preferred_element_type=jnp.float32)
    h = _leaky_relu(h + b2_ref[...])

    h = jnp.dot(h.astype(cdt), w3_ref[...], preferred_element_type=jnp.float32)
    h = _leaky_relu(h + b3_ref[...])

    out = jnp.dot(h.astype(cdt), w4_ref[...],
                  preferred_element_type=jnp.float32) + b4_ref[...]
    o_ref[...] = out.astype(o_ref.dtype)


def _pick_tile_b(B, requested):
    """Batch tile: multiple of 8, <= padded batch, >=2 (even) grid steps."""
    t = _round_up(max(int(requested), 8), 8)
    t = min(t, _round_up(B, 8))
    if B > 8:
        # Guarantee at least 2 grid steps so both v7x TensorCores get work.
        t = min(t, max(8, _round_up(_cdiv(B, 2), 8)))
    steps = _cdiv(B, t)
    if steps > 1 and steps % 2 == 1:
        # Prefer an even step count to balance the two v7x TensorCores.
        t = max(8, _round_up(_cdiv(B, steps + 1), 8))
    return t


def _vmem_tile_bytes(rows, cols, itemsize):
    return _round_up(rows, 8) * _round_up(cols, _LANE) * itemsize


def fc_discriminator(x, params, *, tile_b=512, compute_dtype=jnp.bfloat16):
    """Apply the 4-layer MLP discriminator. x: (B, input_size)."""
    (w1, b1), (w2, b2), (w3, b3), (w4, b4) = params
    B, in_dim = x.shape
    out_dim = w4.shape[1]
    out_dtype = x.dtype

    tile_b = _pick_tile_b(B, tile_b)
    b_pad = _round_up(B, tile_b)
    grid = (b_pad // tile_b,)

    # Weights in the matmul compute dtype; biases stay f32.
    w1c = w1.astype(compute_dtype)
    w2c = w2.astype(compute_dtype)
    w3c = w3.astype(compute_dtype)
    w4c = w4.astype(compute_dtype)
    b1f = b1.astype(jnp.float32).reshape(1, -1)
    b2f = b2.astype(jnp.float32).reshape(1, -1)
    b3f = b3.astype(jnp.float32).reshape(1, -1)
    b4f = b4.astype(jnp.float32).reshape(1, -1)

    # x in compute dtype (halves the streamed per-step DMA). When a ragged-tail
    # pad is needed the cast fuses into the same XLA pass as the pad.
    xc = x.astype(compute_dtype)
    if b_pad != B:
        x_in = jnp.zeros((b_pad, in_dim), compute_dtype).at[:B, :].set(xc)
    else:
        x_in = xc

    # Weights/biases: constant block index -> fetched once; single-buffered so
    # they don't reserve 2x VMEM (matters on v7x's 64 MiB VMEM).
    def resident(arr):
        return pl.BlockSpec(arr.shape, lambda i: (0, 0),
                            pipeline_mode=pl.Buffered(1))

    # VMEM budget derived from the actual footprint (+ headroom), capped at the
    # v7x per-TC physical 64 MiB.
    cds = jnp.dtype(compute_dtype).itemsize
    weight_bytes = (_vmem_tile_bytes(in_dim, 1024, cds)
                    + _vmem_tile_bytes(1024, 512, cds)
                    + _vmem_tile_bytes(512, 256, cds)
                    + _vmem_tile_bytes(256, out_dim, cds))
    bias_bytes = sum(_vmem_tile_bytes(1, n, 4)
                     for n in (1024, 512, 256, out_dim))
    x_tile_bytes = 2 * _vmem_tile_bytes(tile_b, in_dim, cds)       # 2-deep pipe
    out_tile_bytes = 2 * _vmem_tile_bytes(tile_b, out_dim, 4)      # 2-deep pipe
    act_bytes = tile_b * (1024 + 512 + 256) * (4 + cds)            # f32 + bf16 copy
    est = weight_bytes + bias_bytes + x_tile_bytes + out_tile_bytes + act_bytes
    vmem_limit_bytes = int(min(64 * 1024 * 1024,
                               max(32 * 1024 * 1024,
                                   1.5 * est + 8 * 1024 * 1024)))

    flops = 2 * b_pad * (in_dim * 1024 + 1024 * 512 + 512 * 256
                         + 256 * out_dim)
    bytes_accessed = (
        int(x_in.size) * x_in.dtype.itemsize
        + sum(int(a.size) * a.dtype.itemsize
              for a in (w1c, b1f, w2c, b2f, w3c, b3f, w4c, b4f))
        + b_pad * out_dim * jnp.dtype(out_dtype).itemsize)

    out = pl.pallas_call(
        _mlp_kernel,
        out_shape=jax.ShapeDtypeStruct((b_pad, out_dim), out_dtype),
        grid_spec=pltpu.PrefetchScalarGridSpec(
            num_scalar_prefetch=0,
            grid=grid,
            in_specs=[
                pl.BlockSpec((tile_b, in_dim), lambda i: (i, 0)),  # x tile
                resident(w1c), resident(b1f),
                resident(w2c), resident(b2f),
                resident(w3c), resident(b3f),
                resident(w4c), resident(b4f),
            ],
            out_specs=pl.BlockSpec((tile_b, out_dim), lambda i: (i, 0)),
        ),
        compiler_params=pltpu.CompilerParams(
            dimension_semantics=("parallel",),
            vmem_limit_bytes=vmem_limit_bytes,
        ),
        cost_estimate=pl.CostEstimate(
            flops=flops, transcendentals=0, bytes_accessed=bytes_accessed),
    )(x_in, w1c, b1f, w2c, b2f, w3c, b3f, w4c, b4f)

    if b_pad != B:
        out = out[:B]
    return out


def init_params(key, input_size, output_size):
    """Deterministic init. Weights stored as (in, out); biases as (1, out)."""
    dims = [(input_size, 1024), (1024, 512), (512, 256), (256, output_size)]
    params = []
    for (fan_in, fan_out) in dims:
        key, kw, kb = jax.random.split(key, 3)
        # Match torch.nn.Linear default: U(-1/sqrt(fan_in), 1/sqrt(fan_in))
        bound = 1.0 / jnp.sqrt(fan_in)
        w = jax.random.uniform(kw, (fan_in, fan_out), jnp.float32,
                               minval=-bound, maxval=bound)
        b = jax.random.uniform(kb, (1, fan_out), jnp.float32,
                               minval=-bound, maxval=bound)
        params.append((w, b))
    return params


def _reference(x, params):
    """Pure-f32 reference matching the PyTorch module."""
    (w1, b1), (w2, b2), (w3, b3), (w4, b4) = params
    h = x @ w1 + b1
    h = jnp.where(h > 0, h, 0.2 * h)
    h = h @ w2 + b2
    h = jnp.where(h > 0, h, 0.2 * h)
    h = h @ w3 + b3
    h = jnp.where(h > 0, h, 0.2 * h)
    return h @ w4 + b4


if __name__ == "__main__":
    key = jax.random.PRNGKey(0)
    # Small smoke-test shapes; batch large enough that the tile heuristic
    # produces a 2-step grid (both v7x TensorCores get work).
    B, input_size, output_size = 256, 64, 8

    k_params, k_x = jax.random.split(key)
    params = init_params(k_params, input_size, output_size)
    x = jax.random.normal(k_x, (B, input_size), jnp.float32)

    out = fc_discriminator(x, params)
    out = jax.block_until_ready(out)

    ref = _reference(x, params)
    assert out.shape == (B, output_size)
    # bf16 matmul inputs (f32 accumulation) -> loosened tolerance vs f32 ref.
    assert jnp.allclose(out, ref, atol=2e-2, rtol=2e-2), "mismatch vs reference"

    print("KERNEL_OK")
</pallas_src>

<mosaic_0001>
module attributes {stable_mosaic.version = 11 : i64} {
  func.func @_mlp_kernel(%arg0: i32, %arg1: memref<128x64xbf16, #tpu.memory_space<vmem>>, %arg2: memref<64x1024xbf16, #tpu.memory_space<vmem>>, %arg3: memref<1x1024xf32, #tpu.memory_space<vmem>>, %arg4: memref<1024x512xbf16, #tpu.memory_space<vmem>>, %arg5: memref<1x512xf32, #tpu.memory_space<vmem>>, %arg6: memref<512x256xbf16, #tpu.memory_space<vmem>>, %arg7: memref<1x256xf32, #tpu.memory_space<vmem>>, %arg8: memref<256x8xbf16, #tpu.memory_space<vmem>>, %arg9: memref<1x8xf32, #tpu.memory_space<vmem>>, %arg10: memref<128x8xf32, #tpu.memory_space<vmem>>) attributes {dimension_semantics = [#tpu.dimension_semantics<parallel>], iteration_bounds = array<i64: 2>, scalar_prefetch = 0 : i64, scratch_operands = 0 : i64, tpu.core_type = #tpu.core_type<tc>, window_params = [{transform_indices = @transform_0, window_bounds = array<i64: 128, 64>}, {pipeline_mode = #tpu.pipeline_mode<synchronous>, transform_indices = @transform_1, window_bounds = array<i64: 64, 1024>}, {pipeline_mode = #tpu.pipeline_mode<synchronous>, transform_indices = @transform_2, window_bounds = array<i64: 1, 1024>}, {pipeline_mode = #tpu.pipeline_mode<synchronous>, transform_indices = @transform_3, window_bounds = array<i64: 1024, 512>}, {pipeline_mode = #tpu.pipeline_mode<synchronous>, transform_indices = @transform_4, window_bounds = array<i64: 1, 512>}, {pipeline_mode = #tpu.pipeline_mode<synchronous>, transform_indices = @transform_5, window_bounds = array<i64: 512, 256>}, {pipeline_mode = #tpu.pipeline_mode<synchronous>, transform_indices = @transform_6, window_bounds = array<i64: 1, 256>}, {pipeline_mode = #tpu.pipeline_mode<synchronous>, transform_indices = @transform_7, window_bounds = array<i64: 256, 8>}, {pipeline_mode = #tpu.pipeline_mode<synchronous>, transform_indices = @transform_8, window_bounds = array<i64: 1, 8>}, {transform_indices = @transform_9, window_bounds = array<i64: 128, 8>}]} {
    %c0 = arith.constant 0 : index
    %c0_0 = arith.constant 0 : index
    %0 = vector.load %arg1[%c0, %c0_0] : memref<128x64xbf16, #tpu.memory_space<vmem>>, vector<128x64xbf16>
    %c0_1 = arith.constant 0 : index
    %c0_2 = arith.constant 0 : index
    %1 = vector.load %arg2[%c0_1, %c0_2] : memref<64x1024xbf16, #tpu.memory_space<vmem>>, vector<64x1024xbf16>
    %cst = arith.constant dense<0.000000e+00> : vector<128x1024xf32>
    %2 = tpu.matmul %0, %1, %cst {dimension_numbers = #tpu.dot_dimension_numbers<[1], [0], [0], [1], [0, 0, 1, 1], [], []>} : vector<128x64xbf16>, vector<64x1024xbf16>, vector<128x1024xf32> -> vector<128x1024xf32>
    %c0_3 = arith.constant 0 : index
    %c0_4 = arith.constant 0 : index
    %3 = vector.load %arg3[%c0_3, %c0_4] : memref<1x1024xf32, #tpu.memory_space<vmem>>, vector<1x1024xf32>
    %4 = vector.broadcast %3 : vector<1x1024xf32> to vector<128x1024xf32>
    %5 = arith.addf %2, %4 : vector<128x1024xf32>
    %cst_5 = arith.constant 0.000000e+00 : f32
    %6 = vector.broadcast %cst_5 : f32 to vector<128x1024xf32>
    %7 = arith.cmpf ogt, %5, %6 : vector<128x1024xf32>
    %cst_6 = arith.constant 2.000000e-01 : f32
    %8 = vector.broadcast %cst_6 : f32 to vector<128x1024xf32>
    %9 = arith.mulf %8, %5 : vector<128x1024xf32>
    %10 = arith.select %7, %5, %9 : vector<128x1024xi1>, vector<128x1024xf32>
    %11 = arith.truncf %10 : vector<128x1024xf32> to vector<128x1024xbf16>
    %c0_7 = arith.constant 0 : index
    %c0_8 = arith.constant 0 : index
    %12 = vector.load %arg4[%c0_7, %c0_8] : memref<1024x512xbf16, #tpu.memory_space<vmem>>, vector<1024x512xbf16>
    %cst_9 = arith.constant dense<0.000000e+00> : vector<128x512xf32>
    %13 = tpu.matmul %11, %12, %cst_9 {dimension_numbers = #tpu.dot_dimension_numbers<[1], [0], [0], [1], [0, 0, 1, 1], [], []>} : vector<128x1024xbf16>, vector<1024x512xbf16>, vector<128x512xf32> -> vector<128x512xf32>
    %c0_10 = arith.constant 0 : index
    %c0_11 = arith.constant 0 : index
    %14 = vector.load %arg5[%c0_10, %c0_11] : memref<1x512xf32, #tpu.memory_space<vmem>>, vector<1x512xf32>
    %15 = vector.broadcast %14 : vector<1x512xf32> to vector<128x512xf32>
    %16 = arith.addf %13, %15 : vector<128x512xf32>
    %cst_12 = arith.constant 0.000000e+00 : f32
    %17 = vector.broadcast %cst_12 : f32 to vector<128x512xf32>
    %18 = arith.cmpf ogt, %16, %17 : vector<128x512xf32>
    %cst_13 = arith.constant 2.000000e-01 : f32
    %19 = vector.broadcast %cst_13 : f32 to vector<128x512xf32>
    %20 = arith.mulf %19, %16 : vector<128x512xf32>
    %21 = arith.select %18, %16, %20 : vector<128x512xi1>, vector<128x512xf32>
    %22 = arith.truncf %21 : vector<128x512xf32> to vector<128x512xbf16>
    %c0_14 = arith.constant 0 : index
    %c0_15 = arith.constant 0 : index
    %23 = vector.load %arg6[%c0_14, %c0_15] : memref<512x256xbf16, #tpu.memory_space<vmem>>, vector<512x256xbf16>
    %cst_16 = arith.constant dense<0.000000e+00> : vector<128x256xf32>
    %24 = tpu.matmul %22, %23, %cst_16 {dimension_numbers = #tpu.dot_dimension_numbers<[1], [0], [0], [1], [0, 0, 1, 1], [], []>} : vector<128x512xbf16>, vector<512x256xbf16>, vector<128x256xf32> -> vector<128x256xf32>
    %c0_17 = arith.constant 0 : index
    %c0_18 = arith.constant 0 : index
    %25 = vector.load %arg7[%c0_17, %c0_18] : memref<1x256xf32, #tpu.memory_space<vmem>>, vector<1x256xf32>
    %26 = vector.broadcast %25 : vector<1x256xf32> to vector<128x256xf32>
    %27 = arith.addf %24, %26 : vector<128x256xf32>
    %cst_19 = arith.constant 0.000000e+00 : f32
    %28 = vector.broadcast %cst_19 : f32 to vector<128x256xf32>
    %29 = arith.cmpf ogt, %27, %28 : vector<128x256xf32>
    %cst_20 = arith.constant 2.000000e-01 : f32
    %30 = vector.broadcast %cst_20 : f32 to vector<128x256xf32>
    %31 = arith.mulf %30, %27 : vector<128x256xf32>
    %32 = arith.select %29, %27, %31 : vector<128x256xi1>, vector<128x256xf32>
    %33 = arith.truncf %32 : vector<128x256xf32> to vector<128x256xbf16>
    %c0_21 = arith.constant 0 : index
    %c0_22 = arith.constant 0 : index
    %34 = vector.load %arg8[%c0_21, %c0_22] : memref<256x8xbf16, #tpu.memory_space<vmem>>, vector<256x8xbf16>
    %cst_23 = arith.constant dense<0.000000e+00> : vector<128x8xf32>
    %35 = tpu.matmul %33, %34, %cst_23 {dimension_numbers = #tpu.dot_dimension_numbers<[1], [0], [0], [1], [0, 0, 1, 1], [], []>} : vector<128x256xbf16>, vector<256x8xbf16>, vector<128x8xf32> -> vector<128x8xf32>
    %c0_24 = arith.constant 0 : index
    %c0_25 = arith.constant 0 : index
    %36 = vector.load %arg9[%c0_24, %c0_25] : memref<1x8xf32, #tpu.memory_space<vmem>>, vector<1x8xf32>
    %37 = vector.broadcast %36 : vector<1x8xf32> to vector<128x8xf32>
    %38 = arith.addf %35, %37 : vector<128x8xf32>
    %c0_26 = arith.constant 0 : index
    %c0_27 = arith.constant 0 : index
    %39 = vector.load %arg10[%c0_26, %c0_27] : memref<128x8xf32, #tpu.memory_space<vmem>>, vector<128x8xf32>
    tpu.vector_store %arg10[%c0_26, %c0_27], %38 {strides = array<i32>} : memref<128x8xf32, #tpu.memory_space<vmem>>, vector<128x8xf32>,
    return
  }
  func.func @transform_0(%arg0: i32) -> (i32, i32) {
    %c0_i32 = arith.constant 0 : i32
    %c0_i32_0 = arith.constant 0 : i32
    return %arg0, %c0_i32 : i32, i32
  }
  func.func @transform_1(%arg0: i32) -> (i32, i32) {
    %c0_i32 = arith.constant 0 : i32
    %c0_i32_0 = arith.constant 0 : i32
    %c0_i32_1 = arith.constant 0 : i32
    return %c0_i32, %c0_i32_0 : i32, i32
  }
  func.func @transform_2(%arg0: i32) -> (i32, i32) {
    %c0_i32 = arith.constant 0 : i32
    %c0_i32_0 = arith.constant 0 : i32
    %c0_i32_1 = arith.constant 0 : i32
    return %c0_i32, %c0_i32_0 : i32, i32
  }
  func.func @transform_3(%arg0: i32) -> (i32, i32) {
    %c0_i32 = arith.constant 0 : i32
    %c0_i32_0 = arith.constant 0 : i32
    %c0_i32_1 = arith.constant 0 : i32
    return %c0_i32, %c0_i32_0 : i32, i32
  }
  func.func @transform_4(%arg0: i32) -> (i32, i32) {
    %c0_i32 = arith.constant 0 : i32
    %c0_i32_0 = arith.constant 0 : i32
    %c0_i32_1 = arith.constant 0 : i32
    return %c0_i32, %c0_i32_0 : i32, i32
  }
  func.func @transform_5(%arg0: i32) -> (i32, i32) {
    %c0_i32 = arith.constant 0 : i32
    %c0_i32_0 = arith.constant 0 : i32
    %c0_i32_1 = arith.constant 0 : i32
    return %c0_i32, %c0_i32_0 : i32, i32
  }
  func.func @transform_6(%arg0: i32) -> (i32, i32) {
    %c0_i32 = arith.constant 0 : i32
    %c0_i32_0 = arith.constant 0 : i32
    %c0_i32_1 = arith.constant 0 : i32
    return %c0_i32, %c0_i32_0 : i32, i32
  }
  func.func @transform_7(%arg0: i32) -> (i32, i32) {
    %c0_i32 = arith.constant 0 : i32
    %c0_i32_0 = arith.constant 0 : i32
    %c0_i32_1 = arith.constant 0 : i32
    return %c0_i32, %c0_i32_0 : i32, i32
  }
  func.func @transform_8(%arg0: i32) -> (i32, i32) {
    %c0_i32 = arith.constant 0 : i32
    %c0_i32_0 = arith.constant 0 : i32
    %c0_i32_1 = arith.constant 0 : i32
    return %c0_i32, %c0_i32_0 : i32, i32
  }
  func.func @transform_9(%arg0: i32) -> (i32, i32) {
    %c0_i32 = arith.constant 0 : i32
    %c0_i32_0 = arith.constant 0 : i32
    return %arg0, %c0_i32 : i32, i32
  }
}

</mosaic_0001>

<llo_original>
// kernel: tpu_custom_call.1
$region0: #{tpu_custom_call.1}
  #allocation0 [shape = 'u32[]', space=smem, size = 0x4, offset = 0x4, fixed_abs, tag = 'smem constant byte address 0x4 - core index']
  #allocation1 [shape = 'u32[144,128]{1,0:T(1,128)}', space=vmem, size = 0x12000, scoped, tag = 'internal scratch']
  %s0 = inlined_call_operand.vmem [shape: bf16[256,64], index: 0, kind: input, shape index: {}]
  %s1 = inlined_call_operand.vmem [shape: bf16[64,1024], index: 1, kind: input, shape index: {}]
  %s2 = inlined_call_operand.vmem [shape: f32[1,1024], index: 2, kind: input, shape index: {}]
  %s3 = inlined_call_operand.hbm [shape: bf16[1024,512], index: 3, kind: input, shape index: {}]
  %s4 = inlined_call_operand.vmem [shape: f32[1,512], index: 4, kind: input, shape index: {}]
  %s5 = inlined_call_operand.hbm [shape: bf16[512,256], index: 5, kind: input, shape index: {}]
  %s6 = inlined_call_operand.vmem [shape: f32[1,256], index: 6, kind: input, shape index: {}]
  %s7 = inlined_call_operand.vmem [shape: bf16[256,8], index: 7, kind: input, shape index: {}]
  %s8 = inlined_call_operand.vmem [shape: f32[1,8], index: 8, kind: input, shape index: {}]
  %s9 = inlined_call_operand.vmem [shape: f32[256,8], index: 9, kind: output, shape index: {}]
  %s10 = sld [smem:[#allocation0]]
  $region77: #{tpu_custom_call.1} parent=0
    _
  %s12 = ssub.s32 1, %s10
  %s13 = scalar_select 0, %s12, %s10
  $region1: #{tpu_custom_call.1} parent=0
    #allocation2 [shape = 'u8[1048576]{0}', space=vmem, size = 0x100000, scoped, tag = 'input window, operand 3, single buffered']
    #allocation3 [shape = 's32[2]{0}', space=sflag, size = 0x8, scoped, tag = 'scoped memory for tpu_custom_call.1']
    #allocation4 [shape = 'u8[262144]{0}', space=vmem, size = 0x40000, scoped, tag = 'input window, operand 5, single buffered']
    #allocation5 [shape = 's32[1]{0}', space=sflag, size = 0x4, scoped, tag = 'scoped memory for tpu_custom_call.1']
    %14 = vsyncpa [#allocation3], 0
    %15 = vsyncpa [#allocation5], 0
    loop: start=0, step=1, limit=4
    $region2: #{tpu_custom_call.1} parent=1 // loop_pre_header
      _
    $region3: #{tpu_custom_call.1} parent=1 // loop_header
      %s17 = sphi 0, %s21
      %p18 = scmp.ge.s32.totalorder %s17, 4
      %s27 = sphi 0, %s29
      %s30 = sphi 0, %s27
      %s31 = sphi 0, %s30
      %s47 = sphi 0, %s31
      %s51 = sphi 0, %s51
      %s53 = sphi 0, %s51
      %s54 = sphi 0, %s53
      %s68 = sphi 0, %s54
      %s72 = sphi 0, %s72
      %s74 = sphi 0, %s72
      %s75 = sphi 0, %s74
      %s89 = sphi 0, %s75
      %s93 = sphi 0, %s93
      %s95 = sphi 0, %s93
      %s96 = sphi 0, %s95
      %s110 = sphi 0, %s96
      %s114 = sphi 0, %s114
      %s116 = sphi 0, %s114
      %s117 = sphi 0, %s116
      %s131 = sphi 0, %s117
      %s135 = sphi 0, %s135
      %s137 = sphi 0, %s135
      %s138 = sphi 0, %s137
      %s152 = sphi 0, %s138
      %s156 = sphi 0, %s156
      %s158 = sphi 0, %s156
      %s159 = sphi 0, %s158
      %s173 = sphi 0, %s159
      %s177 = sphi 0, %s177
      %s179 = sphi 0, %s177
      %s180 = sphi 0, %s179
      %s194 = sphi 0, %s180
      %s198 = sphi 0, %s198
      %s200 = sphi 0, %s198
      %s201 = sphi 0, %s200
      %s215 = sphi 0, %s201
      %s221 = sphi 0, %s223
      %s224 = sphi 0, %s221
      %s225 = sphi 0, %s224
      %s241 = sphi 0, %s225
    $region4: #{tpu_custom_call.1} parent=1 // loop_header_branch
      %20 = sbr.rel (%p18) target = $region8
    $region5: #{tpu_custom_call.1} parent=1 // loop_body
      %s22 = ssub.s32 %s17, 1
      %s23 = ssub.s32 %s17, 2
      %s24 = sadd.s32 %s17, 1
      %s25 = ssub.s32 %s17, %s24
      %p26 = scmp.eq.s32.totalorder %s25, 0
      %s28 = sadd.s32 %s27, 1
      %s29 = scalar_select %p26, %s27, %s28
      %p32 = pneg %p26
      %p33 = scmp.eq.s32.totalorder %s17, 1
      %p34 = por %p32, %p33
      %p35 = scmp.ne.s32.totalorder %s27, %s30
      %p36 = scmp.eq.s32.totalorder %s17, 0
      %p37 = por %p35, %p36
      %p38 = scmp.ne.s32.totalorder %s27, %s30
      %p39 = scmp.eq.s32.totalorder %s22, 1
      %p40 = por %p38, %p39
      %p41 = scmp.ne.s32.totalorder %s30, %s31
      %p42 = scmp.eq.s32.totalorder %s22, 0
      %p43 = por %p41, %p42
      %p44 = scmp.ne.s32.totalorder %s30, %s31
      %p45 = scmp.eq.s32.totalorder %s23, 1
      %p46 = por %p44, %p45
      %p48 = scmp.ne.s32.totalorder %s31, %s47
      %p49 = scmp.eq.s32.totalorder %s23, 0
      %p50 = por %p48, %p49
      %s52 = sadd.s32 %s51, 1
      %p55 = scmp.eq.s32.totalorder %s17, 1
      %p56 = scmp.ne.s32.totalorder %s51, %s53
      %p57 = scmp.eq.s32.totalorder %s17, 0
      %p58 = por %p56, %p57
      %p59 = scmp.ne.s32.totalorder %s51, %s53
      %p60 = scmp.eq.s32.totalorder %s22, 1
      %p61 = por %p59, %p60
      %p62 = scmp.ne.s32.totalorder %s53, %s54
      %p63 = scmp.eq.s32.totalorder %s22, 0
      %p64 = por %p62, %p63
      %p65 = scmp.ne.s32.totalorder %s53, %s54
      %p66 = scmp.eq.s32.totalorder %s23, 1
      %p67 = por %p65, %p66
      %p69 = scmp.ne.s32.totalorder %s54, %s68
      %p70 = scmp.eq.s32.totalorder %s23, 0
      %p71 = por %p69, %p70
      %s73 = sadd.s32 %s72, 1
      %p76 = scmp.eq.s32.totalorder %s17, 1
      %p77 = scmp.ne.s32.totalorder %s72, %s74
      %p78 = scmp.eq.s32.totalorder %s17, 0
      %p79 = por %p77, %p78
      %p80 = scmp.ne.s32.totalorder %s72, %s74
      %p81 = scmp.eq.s32.totalorder %s22, 1
      %p82 = por %p80, %p81
      %p83 = scmp.ne.s32.totalorder %s74, %s75
      %p84 = scmp.eq.s32.totalorder %s22, 0
      %p85 = por %p83, %p84
      %p86 = scmp.ne.s32.totalorder %s74, %s75
      %p87 = scmp.eq.s32.totalorder %s23, 1
      %p88 = por %p86, %p87
      %p90 = scmp.ne.s32.totalorder %s75, %s89
      %p91 = scmp.eq.s32.totalorder %s23, 0
      %p92 = por %p90, %p91
      %s94 = sadd.s32 %s93, 1
      %p97 = scmp.eq.s32.totalorder %s17, 1
      %p98 = scmp.ne.s32.totalorder %s93, %s95
      %p99 = scmp.eq.s32.totalorder %s17, 0
      %p100 = por %p98, %p99
      %p101 = scmp.ne.s32.totalorder %s93, %s95
      %p102 = scmp.eq.s32.totalorder %s22, 1
      %p103 = por %p101, %p102
      %p104 = scmp.ne.s32.totalorder %s95, %s96
      %p105 = scmp.eq.s32.totalorder %s22, 0
      %p106 = por %p104, %p105
      %p107 = scmp.ne.s32.totalorder %s95, %s96
      %p108 = scmp.eq.s32.totalorder %s23, 1
      %p109 = por %p107, %p108
      %p111 = scmp.ne.s32.totalorder %s96, %s110
      %p112 = scmp.eq.s32.totalorder %s23, 0
      %p113 = por %p111, %p112
      %s115 = sadd.s32 %s114, 1
      %p118 = scmp.eq.s32.totalorder %s17, 1
      %p119 = scmp.ne.s32.totalorder %s114, %s116
      %p120 = scmp.eq.s32.totalorder %s17, 0
      %p121 = por %p119, %p120
      %p122 = scmp.ne.s32.totalorder %s114, %s116
      %p123 = scmp.eq.s32.totalorder %s22, 1
      %p124 = por %p122, %p123
      %p125 = scmp.ne.s32.totalorder %s116, %s117
      %p126 = scmp.eq.s32.totalorder %s22, 0
      %p127 = por %p125, %p126
      %p128 = scmp.ne.s32.totalorder %s116, %s117
      %p129 = scmp.eq.s32.totalorder %s23, 1
      %p130 = por %p128, %p129
      %p132 = scmp.ne.s32.totalorder %s117, %s131
      %p133 = scmp.eq.s32.totalorder %s23, 0
      %p134 = por %p132, %p133
      %s136 = sadd.s32 %s135, 1
      %p139 = scmp.eq.s32.totalorder %s17, 1
      %p140 = scmp.ne.s32.totalorder %s135, %s137
      %p141 = scmp.eq.s32.totalorder %s17, 0
      %p142 = por %p140, %p141
      %p143 = scmp.ne.s32.totalorder %s135, %s137
      %p144 = scmp.eq.s32.totalorder %s22, 1
      %p145 = por %p143, %p144
      %p146 = scmp.ne.s32.totalorder %s137, %s138
      %p147 = scmp.eq.s32.totalorder %s22, 0
      %p148 = por %p146, %p147
      %p149 = scmp.ne.s32.totalorder %s137, %s138
      %p150 = scmp.eq.s32.totalorder %s23, 1
      %p151 = por %p149, %p150
      %p153 = scmp.ne.s32.totalorder %s138, %s152
      %p154 = scmp.eq.s32.totalorder %s23, 0
      %p155 = por %p153, %p154
      %s157 = sadd.s32 %s156, 1
      %p160 = scmp.eq.s32.totalorder %s17, 1
      %p161 = scmp.ne.s32.totalorder %s156, %s158
      %p162 = scmp.eq.s32.totalorder %s17, 0
      %p163 = por %p161, %p162
      %p164 = scmp.ne.s32.totalorder %s156, %s158
      %p165 = scmp.eq.s32.totalorder %s22, 1
      %p166 = por %p164, %p165
      %p167 = scmp.ne.s32.totalorder %s158, %s159
      %p168 = scmp.eq.s32.totalorder %s22, 0
      %p169 = por %p167, %p168
      %p170 = scmp.ne.s32.totalorder %s158, %s159
      %p171 = scmp.eq.s32.totalorder %s23, 1
      %p172 = por %p170, %p171
      %p174 = scmp.ne.s32.totalorder %s159, %s173
      %p175 = scmp.eq.s32.totalorder %s23, 0
      %p176 = por %p174, %p175
      %s178 = sadd.s32 %s177, 1
      %p181 = scmp.eq.s32.totalorder %s17, 1
      %p182 = scmp.ne.s32.totalorder %s177, %s179
      %p183 = scmp.eq.s32.totalorder %s17, 0
      %p184 = por %p182, %p183
      %p185 = scmp.ne.s32.totalorder %s177, %s179
      %p186 = scmp.eq.s32.totalorder %s22, 1
      %p187 = por %p185, %p186
      %p188 = scmp.ne.s32.totalorder %s179, %s180
      %p189 = scmp.eq.s32.totalorder %s22, 0
      %p190 = por %p188, %p189
      %p191 = scmp.ne.s32.totalorder %s179, %s180
      %p192 = scmp.eq.s32.totalorder %s23, 1
      %p193 = por %p191, %p192
      %p195 = scmp.ne.s32.totalorder %s180, %s194
      %p196 = scmp.eq.s32.totalorder %s23, 0
      %p197 = por %p195, %p196
      %s199 = sadd.s32 %s198, 1
      %p202 = scmp.eq.s32.totalorder %s17, 1
      %p203 = scmp.ne.s32.totalorder %s198, %s200
      %p204 = scmp.eq.s32.totalorder %s17, 0
      %p205 = por %p203, %p204
      %p206 = scmp.ne.s32.totalorder %s198, %s200
      %p207 = scmp.eq.s32.totalorder %s22, 1
      %p208 = por %p206, %p207
      %p209 = scmp.ne.s32.totalorder %s200, %s201
      %p210 = scmp.eq.s32.totalorder %s22, 0
      %p211 = por %p209, %p210
      %p212 = scmp.ne.s32.totalorder %s200, %s201
      %p213 = scmp.eq.s32.totalorder %s23, 1
      %p214 = por %p212, %p213
      %p216 = scmp.ne.s32.totalorder %s201, %s215
      %p217 = scmp.eq.s32.totalorder %s23, 0
      %p218 = por %p216, %p217
      %s219 = ssub.s32 %s17, %s24
      %p220 = scmp.eq.s32.totalorder %s219, 0
      %s222 = sadd.s32 %s221, 1
      %s223 = scalar_select %p220, %s221, %s222
      %p226 = pneg %p220
      %p227 = scmp.eq.s32.totalorder %s17, 1
      %p228 = por %p226, %p227
      %p229 = scmp.ne.s32.totalorder %s221, %s224
      %p230 = scmp.eq.s32.totalorder %s17, 0
      %p231 = por %p229, %p230
      %p232 = scmp.ne.s32.totalorder %s221, %s224
      %p233 = scmp.eq.s32.totalorder %s22, 1
      %p234 = por %p232, %p233
      %p235 = scmp.ne.s32.totalorder %s224, %s225
      %p236 = scmp.eq.s32.totalorder %s22, 0
      %p237 = por %p235, %p236
      %p238 = scmp.ne.s32.totalorder %s224, %s225
      %p239 = scmp.eq.s32.totalorder %s23, 1
      %p240 = por %p238, %p239
      %p242 = scmp.ne.s32.totalorder %s225, %s241
      %p243 = scmp.eq.s32.totalorder %s23, 0
      %p244 = por %p242, %p243
      %p245 = scmp.le.s32.totalorder 1, %s17
      %p246 = scmp.lt.s32.totalorder %s17, 3
      %p247 = pnand %p245, %p246
      %p248 = pneg %p247
      // Predicated region
      $region9: #{tpu_custom_call.1} parent=5 // pred_check
        _
      $region10: #{tpu_custom_call.1} parent=5 // pred_check_branch
        %250 = sbr.rel (%p247) target = $region12
      $region11: #{tpu_custom_call.1} parent=5 // pred_region
        %s251 = ssub.s32 %s17, 1
        // Predicated region
        $region13: #{tpu_custom_call.1} parent=11 // pred_check
          %p252 = pneg %p64
        $region14: #{tpu_custom_call.1} parent=11 // pred_check_branch
          %254 = sbr.rel (%p252) target = $region16
        $region15: #{tpu_custom_call.1} parent=11 // pred_region
          _
        $region16: #{tpu_custom_call.1} parent=11 // pred_fallthru
          _
        // Predicated region
        $region17: #{tpu_custom_call.1} parent=11 // pred_check
          %p255 = pneg %p85
        $region18: #{tpu_custom_call.1} parent=11 // pred_check_branch
          %257 = sbr.rel (%p255) target = $region20
        $region19: #{tpu_custom_call.1} parent=11 // pred_region
          _
        $region20: #{tpu_custom_call.1} parent=11 // pred_fallthru
          _
        // Predicated region
        $region21: #{tpu_custom_call.1} parent=11 // pred_check
          %p258 = pneg %p106
        $region22: #{tpu_custom_call.1} parent=11 // pred_check_branch
          %260 = sbr.rel (%p258) target = $region24
        $region23: #{tpu_custom_call.1} parent=11 // pred_region
          %s262 = ssub.s32 32768, 32768
          %263 = vsyncadd [#allocation3], %s262
          %s264 = sshll.u32 [#allocation2], 4
          %s265 = int_to_ptr.vmem [resolvable:$true] %s264
          %270 = dma.hbm_to_vmem [thread:$0]  %s3, 32768, %s265, [#allocation3], 256, 256, 16
        $region24: #{tpu_custom_call.1} parent=11 // pred_fallthru
          _
        // Predicated region
        $region25: #{tpu_custom_call.1} parent=11 // pred_check
          %p271 = pneg %p127
        $region26: #{tpu_custom_call.1} parent=11 // pred_check_branch
          %273 = sbr.rel (%p271) target = $region28
        $region27: #{tpu_custom_call.1} parent=11 // pred_region
          _
        $region28: #{tpu_custom_call.1} parent=11 // pred_fallthru
          _
        // Predicated region
        $region29: #{tpu_custom_call.1} parent=11 // pred_check
          %p274 = pneg %p148
        $region30: #{tpu_custom_call.1} parent=11 // pred_check_branch
          %276 = sbr.rel (%p274) target = $region32
        $region31: #{tpu_custom_call.1} parent=11 // pred_region
          %s278 = ssub.s32 8192, 8192
          %279 = vsyncadd [#allocation5], %s278
          %s280 = sshll.u32 [#allocation4], 4
          %s281 = int_to_ptr.vmem [resolvable:$true] %s280
          %286 = dma.hbm_to_vmem [thread:$0]  %s5, 8192, %s281, [#allocation5], 128, 128, 8
        $region32: #{tpu_custom_call.1} parent=11 // pred_fallthru
          _
        // Predicated region
        $region33: #{tpu_custom_call.1} parent=11 // pred_check
          %p287 = pneg %p169
        $region34: #{tpu_custom_call.1} parent=11 // pred_check_branch
          %289 = sbr.rel (%p287) target = $region36
        $region35: #{tpu_custom_call.1} parent=11 // pred_region
          _
        $region36: #{tpu_custom_call.1} parent=11 // pred_fallthru
          _
        // Predicated region
        $region37: #{tpu_custom_call.1} parent=11 // pred_check
          %p290 = pneg %p190
        $region38: #{tpu_custom_call.1} parent=11 // pred_check_branch
          %292 = sbr.rel (%p290) target = $region40
        $region39: #{tpu_custom_call.1} parent=11 // pred_region
          _
        $region40: #{tpu_custom_call.1} parent=11 // pred_fallthru
          _
        // Predicated region
        $region41: #{tpu_custom_call.1} parent=11 // pred_check
          %p293 = pneg %p211
        $region42: #{tpu_custom_call.1} parent=11 // pred_check_branch
          %295 = sbr.rel (%p293) target = $region44
        $region43: #{tpu_custom_call.1} parent=11 // pred_region
          _
        $region44: #{tpu_custom_call.1} parent=11 // pred_fallthru
          _
      $region12: #{tpu_custom_call.1} parent=5 // pred_fallthru
        _
      %p296 = scmp.lt.s32.totalorder %s17, 2
      // Predicated region
      $region45: #{tpu_custom_call.1} parent=5 // pred_check
        %p297 = pneg %p296
      $region46: #{tpu_custom_call.1} parent=5 // pred_check_branch
        %299 = sbr.rel (%p297) target = $region48
      $region47: #{tpu_custom_call.1} parent=5 // pred_region
        // Predicated region
        $region49: #{tpu_custom_call.1} parent=47 // pred_check
          %p300 = pneg %p37
        $region50: #{tpu_custom_call.1} parent=47 // pred_check_branch
          %302 = sbr.rel (%p300) target = $region52
        $region51: #{tpu_custom_call.1} parent=47 // pred_region
          %s303 = smul.u32 16, %s17
          %p304 = scmp.lt.s32.totalorder %s303, 31
          %s305 = scalar_select %p304, %s303, 31
          %s306 = smul.addr %s305, 4
          %s307 = scalar_lea.vmem %s0, %s306
          %s308 = smul.u32 16, %s17
        $region52: #{tpu_custom_call.1} parent=47 // pred_fallthru
          _
      $region48: #{tpu_custom_call.1} parent=5 // pred_fallthru
        _
      %p309 = scmp.le.s32.totalorder 1, %s17
      %p310 = scmp.lt.s32.totalorder %s17, 3
      %p311 = pnand %p309, %p310
      %p312 = pneg %p311
      // Predicated region
      $region53: #{tpu_custom_call.1} parent=5 // pred_check
        _
      $region54: #{tpu_custom_call.1} parent=5 // pred_check_branch
        %314 = sbr.rel (%p311) target = $region56
      $region55: #{tpu_custom_call.1} parent=5 // pred_region
        %s315 = ssub.s32 %s17, 1
        // Predicated region
        $region57: #{tpu_custom_call.1} parent=55 // pred_check
          %p316 = pneg %p106
        $region58: #{tpu_custom_call.1} parent=55 // pred_check_branch
          %318 = sbr.rel (%p316) target = $region60
        $region59: #{tpu_custom_call.1} parent=55 // pred_region
          %319 = dma.done [#allocation3], 32768
        $region60: #{tpu_custom_call.1} parent=55 // pred_fallthru
          _
        // Predicated region
        $region61: #{tpu_custom_call.1} parent=55 // pred_check
          %p320 = pneg %p148
        $region62: #{tpu_custom_call.1} parent=55 // pred_check_branch
          %322 = sbr.rel (%p320) target = $region64
        $region63: #{tpu_custom_call.1} parent=55 // pred_region
          %323 = dma.done [#allocation5], 8192
        $region64: #{tpu_custom_call.1} parent=55 // pred_fallthru
          _
        %s324 = smul.u32 16, %s22
        %p325 = scmp.lt.s32.totalorder %s324, 31
        %s326 = scalar_select %p325, %s324, 31
        %s327 = smul.addr %s326, 4
        %s328 = scalar_lea.vmem %s0, %s327
        %p329 = pneg %p43
        %p330 = pneg %p40
        %p331 = pneg %p64
        %p332 = pneg %p61
        %p333 = pneg %p85
        %p334 = pneg %p82
        %p335 = pneg %p106
        %p336 = pneg %p103
        %p337 = pneg %p127
        %p338 = pneg %p124
        %p339 = pneg %p148
        %p340 = pneg %p145
        %p341 = pneg %p169
        %p342 = pneg %p166
        %p343 = pneg %p190
        %p344 = pneg %p187
        %p345 = pneg %p211
        %p346 = pneg %p208
        %p347 = pneg %p237
        %p348 = pneg %p234
        %s349 = smul.u32 16, %s22
        %p350 = scmp.lt.s32.totalorder %s349, 31
        %s351 = scalar_select %p350, %s349, 31
        %s352 = smul.addr %s351, 8
        %s353 = scalar_lea.vmem %s9, %s352
        %s354 = smul.u32 16, %s22
        %p355 = scmp.lt.s32.totalorder %s354, 31
        %s356 = scalar_select %p355, %s354, 31
        %s357 = smul.addr %s356, 4
        %s358 = scalar_lea.vmem %s0, %s357
        %s359 = smul.u32 16, %s22
        %s360 = smul.u32 16, %s22
        %p361 = scmp.lt.s32.totalorder %s360, 31
        %s362 = scalar_select %p361, %s360, 31
        %s363 = smul.addr %s362, 8
        %s364 = scalar_lea.vmem %s9, %s363
        %s365 = smul.u32 16, %s22
        %v367 = vld [vmem:[%s358] sm:$0xf]
        %v368 = vld [vmem:[%s358 + $0x4] sm:$0xf]
        %v369 = vld [vmem:[%s358 + $0x8] sm:$0xf]
        %v370 = vld [vmem:[%s358 + $0xc] sm:$0xf]
        %v371 = vld [vmem:[%s358 + $0x10] sm:$0xf]
        %v372 = vld [vmem:[%s358 + $0x14] sm:$0xf]
        %v373 = vld [vmem:[%s358 + $0x18] sm:$0xf]
        %v374 = vld [vmem:[%s358 + $0x1c] sm:$0xf]
        %v375 = vld [vmem:[%s358 + $0x20] sm:$0xf]
        %v376 = vld [vmem:[%s358 + $0x24] sm:$0xf]
        %v377 = vld [vmem:[%s358 + $0x28] sm:$0xf]
        %v378 = vld [vmem:[%s358 + $0x2c] sm:$0xf]
        %v379 = vld [vmem:[%s358 + $0x30] sm:$0xf]
        %v380 = vld [vmem:[%s358 + $0x34] sm:$0xf]
        %v381 = vld [vmem:[%s358 + $0x38] sm:$0xf]
        %v382 = vld [vmem:[%s358 + $0x3c] sm:$0xf]
        %v383 = vld [vmem:[%s1] sm:$0xff]
        %v384 = vld [vmem:[%s1 + $0x8] sm:$0xff]
        %v385 = vld [vmem:[%s1 + $0x10] sm:$0xff]
        %v386 = vld [vmem:[%s1 + $0x18] sm:$0xff]
        %v387 = vld [vmem:[%s1 + $0x20] sm:$0xff]
        %v388 = vld [vmem:[%s1 + $0x28] sm:$0xff]
        %v389 = vld [vmem:[%s1 + $0x30] sm:$0xff]
        %v390 = vld [vmem:[%s1 + $0x38] sm:$0xff]
        %v391 = vld [vmem:[%s1 + $0x40] sm:$0xff]
        %v392 = vld [vmem:[%s1 + $0x48] sm:$0xff]
        %v393 = vld [vmem:[%s1 + $0x50] sm:$0xff]
        %v394 = vld [vmem:[%s1 + $0x58] sm:$0xff]
        %v395 = vld [vmem:[%s1 + $0x60] sm:$0xff]
        %v396 = vld [vmem:[%s1 + $0x68] sm:$0xff]
        %v397 = vld [vmem:[%s1 + $0x70] sm:$0xff]
        %v398 = vld [vmem:[%s1 + $0x78] sm:$0xff]
        %v399 = vld [vmem:[%s1 + $0x80] sm:$0xff]
        %v400 = vld [vmem:[%s1 + $0x88] sm:$0xff]
        %v401 = vld [vmem:[%s1 + $0x90] sm:$0xff]
        %v402 = vld [vmem:[%s1 + $0x98] sm:$0xff]
        %v403 = vld [vmem:[%s1 + $0xa0] sm:$0xff]
        %v404 = vld [vmem:[%s1 + $0xa8] sm:$0xff]
        %v405 = vld [vmem:[%s1 + $0xb0] sm:$0xff]
        %v406 = vld [vmem:[%s1 + $0xb8] sm:$0xff]
        %v407 = vld [vmem:[%s1 + $0xc0] sm:$0xff]
        %v408 = vld [vmem:[%s1 + $0xc8] sm:$0xff]
        %v409 = vld [vmem:[%s1 + $0xd0] sm:$0xff]
        %v410 = vld [vmem:[%s1 + $0xd8] sm:$0xff]
        %v411 = vld [vmem:[%s1 + $0xe0] sm:$0xff]
        %v412 = vld [vmem:[%s1 + $0xe8] sm:$0xff]
        %v413 = vld [vmem:[%s1 + $0xf0] sm:$0xff]
        %v414 = vld [vmem:[%s1 + $0xf8] sm:$0xff]
        %v415 = vld [vmem:[%s2] sm:$0xff]
        %v417 = vlaneseq
        %v418 = vshrl.u32 %v417, 7
        %v419 = vsub.s32 0, %v418
        %v420 = vrot.slane %v415, %v419
        %v421 = vlaneseq
        %v422 = vshrl.u32 %v421, 7
        %v423 = vsub.s32 1, %v422
        %v424 = vrot.slane %v415, %v423
        %v425 = vlaneseq
        %v426 = vshrl.u32 %v425, 7
        %v427 = vsub.s32 2, %v426
        %v428 = vrot.slane %v415, %v427
        %v429 = vlaneseq
        %v430 = vshrl.u32 %v429, 7
        %v431 = vsub.s32 3, %v430
        %v432 = vrot.slane %v415, %v431
        %v433 = vlaneseq
        %v434 = vshrl.u32 %v433, 7
        %v435 = vsub.s32 4, %v434
        %v436 = vrot.slane %v415, %v435
        %v437 = vlaneseq
        %v438 = vshrl.u32 %v437, 7
        %v439 = vsub.s32 5, %v438
        %v440 = vrot.slane %v415, %v439
        %v441 = vlaneseq
        %v442 = vshrl.u32 %v441, 7
        %v443 = vsub.s32 6, %v442
        %v444 = vrot.slane %v415, %v443
        %v445 = vlaneseq
        %v446 = vshrl.u32 %v445, 7
        %v447 = vsub.s32 7, %v446
        %v448 = vrot.slane %v415, %v447
        %v473 = vunpack.c.l.b16 %v367
        %v474 = vunpack.c.l.b16 %v368
        %v475 = vunpack.c.l.b16 %v369
        %v476 = vunpack.c.l.b16 %v370
        %v477 = vunpack.c.l.b16 %v371
        %v478 = vunpack.c.l.b16 %v372
        %v479 = vunpack.c.l.b16 %v373
        %v480 = vunpack.c.l.b16 %v374
        %v481 = vunpack.c.l.b16 %v375
        %v482 = vunpack.c.l.b16 %v376
        %v483 = vunpack.c.l.b16 %v377
        %v484 = vunpack.c.l.b16 %v378
        %v485 = vunpack.c.l.b16 %v379
        %v486 = vunpack.c.l.b16 %v380
        %v487 = vunpack.c.l.b16 %v381
        %v488 = vunpack.c.l.b16 %v382
        %v489 = vpack.c.b16 %v474, %v473
        %v490 = vpack.c.b16 %v476, %v475
        %v491 = vpack.c.b16 %v478, %v477
        %v492 = vpack.c.b16 %v480, %v479
        %v493 = vpack.c.b16 %v482, %v481
        %v494 = vpack.c.b16 %v484, %v483
        %v495 = vpack.c.b16 %v486, %v485
        %v496 = vpack.c.b16 %v488, %v487
        %v529 = vunpack.c.l.b16 %v383
        %v530 = vunpack.c.h.b16 %v383
        %v531 = vunpack.c.l.b16 %v384
        %v532 = vunpack.c.h.b16 %v384
        %v533 = vunpack.c.l.b16 %v385
        %v534 = vunpack.c.h.b16 %v385
        %v535 = vunpack.c.l.b16 %v386
        %v536 = vunpack.c.h.b16 %v386
        %v537 = vunpack.c.l.b16 %v387
        %v538 = vunpack.c.h.b16 %v387
        %v539 = vunpack.c.l.b16 %v388
        %v540 = vunpack.c.h.b16 %v388
        %v541 = vunpack.c.l.b16 %v389
        %v542 = vunpack.c.h.b16 %v389
        %v543 = vunpack.c.l.b16 %v390
        %v544 = vunpack.c.h.b16 %v390
        %v545 = vunpack.c.l.b16 %v391
        %v546 = vunpack.c.h.b16 %v391
        %v547 = vunpack.c.l.b16 %v392
        %v548 = vunpack.c.h.b16 %v392
        %v549 = vunpack.c.l.b16 %v393
        %v550 = vunpack.c.h.b16 %v393
        %v551 = vunpack.c.l.b16 %v394
        %v552 = vunpack.c.h.b16 %v394
        %v553 = vunpack.c.l.b16 %v395
        %v554 = vunpack.c.h.b16 %v395
        %v555 = vunpack.c.l.b16 %v396
        %v556 = vunpack.c.h.b16 %v396
        %v557 = vunpack.c.l.b16 %v397
        %v558 = vunpack.c.h.b16 %v397
        %v559 = vunpack.c.l.b16 %v398
        %v560 = vunpack.c.h.b16 %v398
        %v561 = vunpack.c.l.b16 %v399
        %v562 = vunpack.c.h.b16 %v399
        %v563 = vunpack.c.l.b16 %v400
        %v564 = vunpack.c.h.b16 %v400
        %v565 = vunpack.c.l.b16 %v401
        %v566 = vunpack.c.h.b16 %v401
        %v567 = vunpack.c.l.b16 %v402
        %v568 = vunpack.c.h.b16 %v402
        %v569 = vunpack.c.l.b16 %v403
        %v570 = vunpack.c.h.b16 %v403
        %v571 = vunpack.c.l.b16 %v404
        %v572 = vunpack.c.h.b16 %v404
        %v573 = vunpack.c.l.b16 %v405
        %v574 = vunpack.c.h.b16 %v405
        %v575 = vunpack.c.l.b16 %v406
        %v576 = vunpack.c.h.b16 %v406
        %v577 = vunpack.c.l.b16 %v407
        %v578 = vunpack.c.h.b16 %v407
        %v579 = vunpack.c.l.b16 %v408
        %v580 = vunpack.c.h.b16 %v408
        %v581 = vunpack.c.l.b16 %v409
        %v582 = vunpack.c.h.b16 %v409
        %v583 = vunpack.c.l.b16 %v410
        %v584 = vunpack.c.h.b16 %v410
        %v585 = vunpack.c.l.b16 %v411
        %v586 = vunpack.c.h.b16 %v411
        %v587 = vunpack.c.l.b16 %v412
        %v588 = vunpack.c.h.b16 %v412
        %v589 = vunpack.c.l.b16 %v413
        %v590 = vunpack.c.h.b16 %v413
        %v591 = vunpack.c.l.b16 %v414
        %v592 = vunpack.c.h.b16 %v414
        %v593 = vpack.c.b16 %v537, %v529
        %v594 = vpack.c.b16 %v538, %v530
        %v595 = vpack.c.b16 %v539, %v531
        %v596 = vpack.c.b16 %v540, %v532
        %v597 = vpack.c.b16 %v541, %v533
        %v598 = vpack.c.b16 %v542, %v534
        %v599 = vpack.c.b16 %v543, %v535
        %v600 = vpack.c.b16 %v544, %v536
        %v601 = vpack.c.b16 %v553, %v545
        %v602 = vpack.c.b16 %v554, %v546
        %v603 = vpack.c.b16 %v555, %v547
        %v604 = vpack.c.b16 %v556, %v548
        %v605 = vpack.c.b16 %v557, %v549
        %v606 = vpack.c.b16 %v558, %v550
        %v607 = vpack.c.b16 %v559, %v551
        %v608 = vpack.c.b16 %v560, %v552
        %v609 = vpack.c.b16 %v569, %v561
        %v610 = vpack.c.b16 %v570, %v562
        %v611 = vpack.c.b16 %v571, %v563
        %v612 = vpack.c.b16 %v572, %v564
        %v613 = vpack.c.b16 %v573, %v565
        %v614 = vpack.c.b16 %v574, %v566
        %v615 = vpack.c.b16 %v575, %v567
        %v616 = vpack.c.b16 %v576, %v568
        %v617 = vpack.c.b16 %v585, %v577
        %v618 = vpack.c.b16 %v586, %v578
        %v619 = vpack.c.b16 %v587, %v579
        %v620 = vpack.c.b16 %v588, %v580
        %v621 = vpack.c.b16 %v589, %v581
        %v622 = vpack.c.b16 %v590, %v582
        %v623 = vpack.c.b16 %v591, %v583
        %v624 = vpack.c.b16 %v592, %v584
        %vm657 = vcmask 523264
        %v659 = vsel %vm657, %v489, 0
        %v662 = vsel %vm657, %v490, 0
        %v665 = vsel %vm657, %v491, 0
        %v668 = vsel %vm657, %v492, 0
        %v671 = vsel %vm657, %v493, 0
        %v674 = vsel %vm657, %v494, 0
        %v677 = vsel %vm657, %v495, 0
        %v680 = vsel %vm657, %v496, 0
        %682 = vmatprep.subr.bf16.mxu0 0
        %683 = vmatpush1.bf16.msra.mxu0 0
        %684 = vmatprep.subr.bf16.mxu0 0
        %685 = vmatpush1.bf16.msra.mxu0 0
        %686 = vmatprep.subr.bf16.mxu0 0
        %687 = vmatpush1.bf16.msra.mxu0 0
        %688 = vmatprep.subr.bf16.mxu0 0
        %689 = vmatpush1.bf16.msra.mxu0 0
        %690 = vmatprep.subr.bf16.mxu0 %v618
        %691 = vmatpush1.bf16.msra.mxu0 %v617
        %692 = vmatprep.subr.bf16.mxu0 %v610
        %693 = vmatpush1.bf16.msra.mxu0 %v609
        %694 = vmatprep.subr.bf16.mxu0 %v602
        %695 = vmatpush1.bf16.msra.mxu0 %v601
        %696 = vmatprep.subr.bf16.mxu0 %v594
        %697 = vmatpush1.bf16.msra.mxu0 %v593
        %698 = vmatprep.subr.bf16.mxu0 0
        %699 = vmatpush2.bf16.msra.mxu0 0
        %700 = vmatprep.subr.bf16.mxu0 0
        %701 = vmatpush2.bf16.msra.mxu0 0
        %702 = vmatprep.subr.bf16.mxu0 0
        %703 = vmatpush2.bf16.msra.mxu0 0
        %704 = vmatprep.subr.bf16.mxu0 0
        %705 = vmatpush2.bf16.msra.mxu0 0
        %706 = vmatprep.subr.bf16.mxu0 0
        %707 = vmatpush2.bf16.msra.mxu0 0
        %708 = vmatprep.subr.bf16.mxu0 0
        %709 = vmatpush2.bf16.msra.mxu0 0
        %710 = vmatprep.subr.bf16.mxu0 0
        %711 = vmatpush2.bf16.msra.mxu0 0
        %712 = vmatprep.subr.bf16.mxu0 0
        %713 = vmatpush2.bf16.msra.mxu0 0
        %714 = vmatprep.mubr.bf16.mxu0 0
        %715 = vmatmul.mubr.bf16.gmra.mxu0 %v659
        %v716 = vpop.f32.mrf.mxu0
        %v717 = vadd.f32 %v420, %v716
        %v718 = vpop.f32.mrf.mxu0
        %v719 = vadd.f32 %v424, %v718
        %v720 = vpop.f32.mrf.mxu0
        %v721 = vadd.f32 %v420, %v720
        %v722 = vpop.f32.mrf.mxu0
        %v723 = vadd.f32 %v424, %v722
        %724 = vmatprep.mubr.bf16.mxu0 0
        %725 = vmatmul.mubr.bf16.gmra.mxu0 %v662
        %v726 = vpop.f32.mrf.mxu0
        %v727 = vadd.f32 %v420, %v726
        %v728 = vpop.f32.mrf.mxu0
        %v729 = vadd.f32 %v424, %v728
        %v730 = vpop.f32.mrf.mxu0
        %v731 = vadd.f32 %v420, %v730
        %v732 = vpop.f32.mrf.mxu0
        %v733 = vadd.f32 %v424, %v732
        %734 = vmatprep.mubr.bf16.mxu0 0
        %735 = vmatmul.mubr.bf16.gmra.mxu0 %v665
        %v736 = vpop.f32.mrf.mxu0
        %v737 = vadd.f32 %v420, %v736
        %v738 = vpop.f32.mrf.mxu0
        %v739 = vadd.f32 %v424, %v738
        %v740 = vpop.f32.mrf.mxu0
        %v741 = vadd.f32 %v420, %v740
        %v742 = vpop.f32.mrf.mxu0
        %v743 = vadd.f32 %v424, %v742
        %744 = vmatprep.mubr.bf16.mxu0 0
        %745 = vmatmul.mubr.bf16.gmra.mxu0 %v668
        %v746 = vpop.f32.mrf.mxu0
        %v747 = vadd.f32 %v420, %v746
        %v748 = vpop.f32.mrf.mxu0
        %v749 = vadd.f32 %v424, %v748
        %v750 = vpop.f32.mrf.mxu0
        %v751 = vadd.f32 %v420, %v750
        %v752 = vpop.f32.mrf.mxu0
        %v753 = vadd.f32 %v424, %v752
        %754 = vmatprep.mubr.bf16.mxu0 0
        %755 = vmatmul.mubr.bf16.gmra.mxu0 %v671
        %v756 = vpop.f32.mrf.mxu0
        %v757 = vadd.f32 %v420, %v756
        %v758 = vpop.f32.mrf.mxu0
        %v759 = vadd.f32 %v424, %v758
        %v760 = vpop.f32.mrf.mxu0
        %v761 = vadd.f32 %v420, %v760
        %v762 = vpop.f32.mrf.mxu0
        %v763 = vadd.f32 %v424, %v762
        %764 = vmatprep.mubr.bf16.mxu0 0
        %765 = vmatmul.mubr.bf16.gmra.mxu0 %v674
        %v766 = vpop.f32.mrf.mxu0
        %v767 = vadd.f32 %v420, %v766
        %v768 = vpop.f32.mrf.mxu0
        %v769 = vadd.f32 %v424, %v768
        %v770 = vpop.f32.mrf.mxu0
        %v771 = vadd.f32 %v420, %v770
        %v772 = vpop.f32.mrf.mxu0
        %v773 = vadd.f32 %v424, %v772
        %774 = vmatprep.mubr.bf16.mxu0 0
        %775 = vmatmul.mubr.bf16.gmra.mxu0 %v677
        %v776 = vpop.f32.mrf.mxu0
        %v777 = vadd.f32 %v420, %v776
        %v778 = vpop.f32.mrf.mxu0
        %v779 = vadd.f32 %v424, %v778
        %v780 = vpop.f32.mrf.mxu0
        %v781 = vadd.f32 %v420, %v780
        %v782 = vpop.f32.mrf.mxu0
        %v783 = vadd.f32 %v424, %v782
        %784 = vmatprep.mubr.bf16.mxu0 0
        %785 = vmatmul.mubr.bf16.gmra.mxu0 %v680
        %v786 = vpop.f32.mrf.mxu0
        %v787 = vadd.f32 %v420, %v786
        %v788 = vpop.f32.mrf.mxu0
        %v789 = vadd.f32 %v424, %v788
        %v790 = vpop.f32.mrf.mxu0
        %v791 = vadd.f32 %v420, %v790
        %v792 = vpop.f32.mrf.mxu0
        %v793 = vadd.f32 %v424, %v792
        %794 = vdwg.mxu0
        %795 = vmatprep.subr.bf16.mxu0 0
        %796 = vmatpush1.bf16.msra.mxu0 0
        %797 = vmatprep.subr.bf16.mxu0 0
        %798 = vmatpush1.bf16.msra.mxu0 0
        %799 = vmatprep.subr.bf16.mxu0 0
        %800 = vmatpush1.bf16.msra.mxu0 0
        %801 = vmatprep.subr.bf16.mxu0 0
        %802 = vmatpush1.bf16.msra.mxu0 0
        %803 = vmatprep.subr.bf16.mxu0 %v620
        %804 = vmatpush1.bf16.msra.mxu0 %v619
        %805 = vmatprep.subr.bf16.mxu0 %v612
        %806 = vmatpush1.bf16.msra.mxu0 %v611
        %807 = vmatprep.subr.bf16.mxu0 %v604
        %808 = vmatpush1.bf16.msra.mxu0 %v603
        %809 = vmatprep.subr.bf16.mxu0 %v596
        %810 = vmatpush1.bf16.msra.mxu0 %v595
        %811 = vmatprep.subr.bf16.mxu0 0
        %812 = vmatpush2.bf16.msra.mxu0 0
        %813 = vmatprep.subr.bf16.mxu0 0
        %814 = vmatpush2.bf16.msra.mxu0 0
        %815 = vmatprep.subr.bf16.mxu0 0
        %816 = vmatpush2.bf16.msra.mxu0 0
        %817 = vmatprep.subr.bf16.mxu0 0
        %818 = vmatpush2.bf16.msra.mxu0 0
        %819 = vmatprep.subr.bf16.mxu0 0
        %820 = vmatpush2.bf16.msra.mxu0 0
        %821 = vmatprep.subr.bf16.mxu0 0
        %822 = vmatpush2.bf16.msra.mxu0 0
        %823 = vmatprep.subr.bf16.mxu0 0
        %824 = vmatpush2.bf16.msra.mxu0 0
        %825 = vmatprep.subr.bf16.mxu0 0
        %826 = vmatpush2.bf16.msra.mxu0 0
        %827 = vmatprep.mubr.bf16.mxu0 0
        %828 = vmatmul.mubr.bf16.gmra.mxu0 %v659
        %v829 = vpop.f32.mrf.mxu0
        %v830 = vadd.f32 %v428, %v829
        %v831 = vpop.f32.mrf.mxu0
        %v832 = vadd.f32 %v432, %v831
        %v833 = vpop.f32.mrf.mxu0
        %v834 = vadd.f32 %v428, %v833
        %v835 = vpop.f32.mrf.mxu0
        %v836 = vadd.f32 %v432, %v835
        %837 = vmatprep.mubr.bf16.mxu0 0
        %838 = vmatmul.mubr.bf16.gmra.mxu0 %v662
        %v839 = vpop.f32.mrf.mxu0
        %v840 = vadd.f32 %v428, %v839
        %v841 = vpop.f32.mrf.mxu0
        %v842 = vadd.f32 %v432, %v841
        %v843 = vpop.f32.mrf.mxu0
        %v844 = vadd.f32 %v428, %v843
        %v845 = vpop.f32.mrf.mxu0
        %v846 = vadd.f32 %v432, %v845
        %847 = vmatprep.mubr.bf16.mxu0 0
        %848 = vmatmul.mubr.bf16.gmra.mxu0 %v665
        %v849 = vpop.f32.mrf.mxu0
        %v850 = vadd.f32 %v428, %v849
        %v851 = vpop.f32.mrf.mxu0
        %v852 = vadd.f32 %v432, %v851
        %v853 = vpop.f32.mrf.mxu0
        %v854 = vadd.f32 %v428, %v853
        %v855 = vpop.f32.mrf.mxu0
        %v856 = vadd.f32 %v432, %v855
        %857 = vmatprep.mubr.bf16.mxu0 0
        %858 = vmatmul.mubr.bf16.gmra.mxu0 %v668
        %v859 = vpop.f32.mrf.mxu0
        %v860 = vadd.f32 %v428, %v859
        %v861 = vpop.f32.mrf.mxu0
        %v862 = vadd.f32 %v432, %v861
        %v863 = vpop.f32.mrf.mxu0
        %v864 = vadd.f32 %v428, %v863
        %v865 = vpop.f32.mrf.mxu0
        %v866 = vadd.f32 %v432, %v865
        %867 = vmatprep.mubr.bf16.mxu0 0
        %868 = vmatmul.mubr.bf16.gmra.mxu0 %v671
        %v869 = vpop.f32.mrf.mxu0
        %v870 = vadd.f32 %v428, %v869
        %v871 = vpop.f32.mrf.mxu0
        %v872 = vadd.f32 %v432, %v871
        %v873 = vpop.f32.mrf.mxu0
        %v874 = vadd.f32 %v428, %v873
        %v875 = vpop.f32.mrf.mxu0
        %v876 = vadd.f32 %v432, %v875
        %877 = vmatprep.mubr.bf16.mxu0 0
        %878 = vmatmul.mubr.bf16.gmra.mxu0 %v674
        %v879 = vpop.f32.mrf.mxu0
        %v880 = vadd.f32 %v428, %v879
        %v881 = vpop.f32.mrf.mxu0
        %v882 = vadd.f32 %v432, %v881
        %v883 = vpop.f32.mrf.mxu0
        %v884 = vadd.f32 %v428, %v883
        %v885 = vpop.f32.mrf.mxu0
        %v886 = vadd.f32 %v432, %v885
        %887 = vmatprep.mubr.bf16.mxu0 0
        %888 = vmatmul.mubr.bf16.gmra.mxu0 %v677
        %v889 = vpop.f32.mrf.mxu0
        %v890 = vadd.f32 %v428, %v889
        %v891 = vpop.f32.mrf.mxu0
        %v892 = vadd.f32 %v432, %v891
        %v893 = vpop.f32.mrf.mxu0
        %v894 = vadd.f32 %v428, %v893
        %v895 = vpop.f32.mrf.mxu0
        %v896 = vadd.f32 %v432, %v895
        %897 = vmatprep.mubr.bf16.mxu0 0
        %898 = vmatmul.mubr.bf16.gmra.mxu0 %v680
        %v899 = vpop.f32.mrf.mxu0
        %v900 = vadd.f32 %v428, %v899
        %v901 = vpop.f32.mrf.mxu0
        %v902 = vadd.f32 %v432, %v901
        %v903 = vpop.f32.mrf.mxu0
        %v904 = vadd.f32 %v428, %v903
        %v905 = vpop.f32.mrf.mxu0
        %v906 = vadd.f32 %v432, %v905
        %907 = vdwg.mxu0
        %908 = vmatprep.subr.bf16.mxu0 0
        %909 = vmatpush1.bf16.msra.mxu0 0
        %910 = vmatprep.subr.bf16.mxu0 0
        %911 = vmatpush1.bf16.msra.mxu0 0
        %912 = vmatprep.subr.bf16.mxu0 0
        %913 = vmatpush1.bf16.msra.mxu0 0
        %914 = vmatprep.subr.bf16.mxu0 0
        %915 = vmatpush1.bf16.msra.mxu0 0
        %916 = vmatprep.subr.bf16.mxu0 %v622
        %917 = vmatpush1.bf16.msra.mxu0 %v621
        %918 = vmatprep.subr.bf16.mxu0 %v614
        %919 = vmatpush1.bf16.msra.mxu0 %v613
        %920 = vmatprep.subr.bf16.mxu0 %v606
        %921 = vmatpush1.bf16.msra.mxu0 %v605
        %922 = vmatprep.subr.bf16.mxu0 %v598
        %923 = vmatpush1.bf16.msra.mxu0 %v597
        %924 = vmatprep.subr.bf16.mxu0 0
        %925 = vmatpush2.bf16.msra.mxu0 0
        %926 = vmatprep.subr.bf16.mxu0 0
        %927 = vmatpush2.bf16.msra.mxu0 0
        %928 = vmatprep.subr.bf16.mxu0 0
        %929 = vmatpush2.bf16.msra.mxu0 0
        %930 = vmatprep.subr.bf16.mxu0 0
        %931 = vmatpush2.bf16.msra.mxu0 0
        %932 = vmatprep.subr.bf16.mxu0 0
        %933 = vmatpush2.bf16.msra.mxu0 0
        %934 = vmatprep.subr.bf16.mxu0 0
        %935 = vmatpush2.bf16.msra.mxu0 0
        %936 = vmatprep.subr.bf16.mxu0 0
        %937 = vmatpush2.bf16.msra.mxu0 0
        %938 = vmatprep.subr.bf16.mxu0 0
        %939 = vmatpush2.bf16.msra.mxu0 0
        %940 = vmatprep.mubr.bf16.mxu0 0
        %941 = vmatmul.mubr.bf16.gmra.mxu0 %v659
        %v942 = vpop.f32.mrf.mxu0
        %v943 = vadd.f32 %v436, %v942
        %v944 = vpop.f32.mrf.mxu0
        %v945 = vadd.f32 %v440, %v944
        %v946 = vpop.f32.mrf.mxu0
        %v947 = vadd.f32 %v436, %v946
        %v948 = vpop.f32.mrf.mxu0
        %v949 = vadd.f32 %v440, %v948
        %950 = vmatprep.mubr.bf16.mxu0 0
        %951 = vmatmul.mubr.bf16.gmra.mxu0 %v662
        %v952 = vpop.f32.mrf.mxu0
        %v953 = vadd.f32 %v436, %v952
        %v954 = vpop.f32.mrf.mxu0
        %v955 = vadd.f32 %v440, %v954
        %v956 = vpop.f32.mrf.mxu0
        %v957 = vadd.f32 %v436, %v956
        %v958 = vpop.f32.mrf.mxu0
        %v959 = vadd.f32 %v440, %v958
        %960 = vmatprep.mubr.bf16.mxu0 0
        %961 = vmatmul.mubr.bf16.gmra.mxu0 %v665
        %v962 = vpop.f32.mrf.mxu0
        %v963 = vadd.f32 %v436, %v962
        %v964 = vpop.f32.mrf.mxu0
        %v965 = vadd.f32 %v440, %v964
        %v966 = vpop.f32.mrf.mxu0
        %v967 = vadd.f32 %v436, %v966
        %v968 = vpop.f32.mrf.mxu0
        %v969 = vadd.f32 %v440, %v968
        %970 = vmatprep.mubr.bf16.mxu0 0
        %971 = vmatmul.mubr.bf16.gmra.mxu0 %v668
        %v972 = vpop.f32.mrf.mxu0
        %v973 = vadd.f32 %v436, %v972
        %v974 = vpop.f32.mrf.mxu0
        %v975 = vadd.f32 %v440, %v974
        %v976 = vpop.f32.mrf.mxu0
        %v977 = vadd.f32 %v436, %v976
        %v978 = vpop.f32.mrf.mxu0
        %v979 = vadd.f32 %v440, %v978
        %980 = vmatprep.mubr.bf16.mxu0 0
        %981 = vmatmul.mubr.bf16.gmra.mxu0 %v671
        %v982 = vpop.f32.mrf.mxu0
        %v983 = vadd.f32 %v436, %v982
        %v984 = vpop.f32.mrf.mxu0
        %v985 = vadd.f32 %v440, %v984
        %v986 = vpop.f32.mrf.mxu0
        %v987 = vadd.f32 %v436, %v986
        %v988 = vpop.f32.mrf.mxu0
        %v989 = vadd.f32 %v440, %v988
        %990 = vmatprep.mubr.bf16.mxu0 0
        %991 = vmatmul.mubr.bf16.gmra.mxu0 %v674
        %v992 = vpop.f32.mrf.mxu0
        %v993 = vadd.f32 %v436, %v992
        %v994 = vpop.f32.mrf.mxu0
        %v995 = vadd.f32 %v440, %v994
        %v996 = vpop.f32.mrf.mxu0
        %v997 = vadd.f32 %v436, %v996
        %v998 = vpop.f32.mrf.mxu0
        %v999 = vadd.f32 %v440, %v998
        %1000 = vmatprep.mubr.bf16.mxu0 0
        %1001 = vmatmul.mubr.bf16.gmra.mxu0 %v677
        %v1002 = vpop.f32.mrf.mxu0
        %v1003 = vadd.f32 %v436, %v1002
        %v1004 = vpop.f32.mrf.mxu0
        %v1005 = vadd.f32 %v440, %v1004
        %v1006 = vpop.f32.mrf.mxu0
        %v1007 = vadd.f32 %v436, %v1006
        %v1008 = vpop.f32.mrf.mxu0
        %v1009 = vadd.f32 %v440, %v1008
        %1010 = vmatprep.mubr.bf16.mxu0 0
        %1011 = vmatmul.mubr.bf16.gmra.mxu0 %v680
        %v1012 = vpop.f32.mrf.mxu0
        %v1013 = vadd.f32 %v436, %v1012
        %v1014 = vpop.f32.mrf.mxu0
        %v1015 = vadd.f32 %v440, %v1014
        %v1016 = vpop.f32.mrf.mxu0
        %v1017 = vadd.f32 %v436, %v1016
        %v1018 = vpop.f32.mrf.mxu0
        %v1019 = vadd.f32 %v440, %v1018
        %1020 = vdwg.mxu0
        %1021 = vmatprep.subr.bf16.mxu0 0
        %1022 = vmatpush1.bf16.msra.mxu0 0
        %1023 = vmatprep.subr.bf16.mxu0 0
        %1024 = vmatpush1.bf16.msra.mxu0 0
        %1025 = vmatprep.subr.bf16.mxu0 0
        %1026 = vmatpush1.bf16.msra.mxu0 0
        %1027 = vmatprep.subr.bf16.mxu0 0
        %1028 = vmatpush1.bf16.msra.mxu0 0
        %1029 = vmatprep.subr.bf16.mxu0 %v624
        %1030 = vmatpush1.bf16.msra.mxu0 %v623
        %1031 = vmatprep.subr.bf16.mxu0 %v616
        %1032 = vmatpush1.bf16.msra.mxu0 %v615
        %1033 = vmatprep.subr.bf16.mxu0 %v608
        %1034 = vmatpush1.bf16.msra.mxu0 %v607
        %1035 = vmatprep.subr.bf16.mxu0 %v600
        %1036 = vmatpush1.bf16.msra.mxu0 %v599
        %1037 = vmatprep.subr.bf16.mxu0 0
        %1038 = vmatpush2.bf16.msra.mxu0 0
        %1039 = vmatprep.subr.bf16.mxu0 0
        %1040 = vmatpush2.bf16.msra.mxu0 0
        %1041 = vmatprep.subr.bf16.mxu0 0
        %1042 = vmatpush2.bf16.msra.mxu0 0
        %1043 = vmatprep.subr.bf16.mxu0 0
        %1044 = vmatpush2.bf16.msra.mxu0 0
        %1045 = vmatprep.subr.bf16.mxu0 0
        %1046 = vmatpush2.bf16.msra.mxu0 0
        %1047 = vmatprep.subr.bf16.mxu0 0
        %1048 = vmatpush2.bf16.msra.mxu0 0
        %1049 = vmatprep.subr.bf16.mxu0 0
        %1050 = vmatpush2.bf16.msra.mxu0 0
        %1051 = vmatprep.subr.bf16.mxu0 0
        %1052 = vmatpush2.bf16.msra.mxu0 0
        %1053 = vmatprep.mubr.bf16.mxu0 0
        %1054 = vmatmul.mubr.bf16.gmra.mxu0 %v659
        %v1055 = vpop.f32.mrf.mxu0
        %v1056 = vadd.f32 %v444, %v1055
        %v1057 = vpop.f32.mrf.mxu0
        %v1058 = vadd.f32 %v448, %v1057
        %v1059 = vpop.f32.mrf.mxu0
        %v1060 = vadd.f32 %v444, %v1059
        %v1061 = vpop.f32.mrf.mxu0
        %v1062 = vadd.f32 %v448, %v1061
        %1063 = vmatprep.mubr.bf16.mxu0 0
        %1064 = vmatmul.mubr.bf16.gmra.mxu0 %v662
        %v1065 = vpop.f32.mrf.mxu0
        %v1066 = vadd.f32 %v444, %v1065
        %v1067 = vpop.f32.mrf.mxu0
        %v1068 = vadd.f32 %v448, %v1067
        %v1069 = vpop.f32.mrf.mxu0
        %v1070 = vadd.f32 %v444, %v1069
        %v1071 = vpop.f32.mrf.mxu0
        %v1072 = vadd.f32 %v448, %v1071
        %1073 = vmatprep.mubr.bf16.mxu0 0
        %1074 = vmatmul.mubr.bf16.gmra.mxu0 %v665
        %v1075 = vpop.f32.mrf.mxu0
        %v1076 = vadd.f32 %v444, %v1075
        %v1077 = vpop.f32.mrf.mxu0
        %v1078 = vadd.f32 %v448, %v1077
        %v1079 = vpop.f32.mrf.mxu0
        %v1080 = vadd.f32 %v444, %v1079
        %v1081 = vpop.f32.mrf.mxu0
        %v1082 = vadd.f32 %v448, %v1081
        %1083 = vmatprep.mubr.bf16.mxu0 0
        %1084 = vmatmul.mubr.bf16.gmra.mxu0 %v668
        %v1085 = vpop.f32.mrf.mxu0
        %v1086 = vadd.f32 %v444, %v1085
        %v1087 = vpop.f32.mrf.mxu0
        %v1088 = vadd.f32 %v448, %v1087
        %v1089 = vpop.f32.mrf.mxu0
        %v1090 = vadd.f32 %v444, %v1089
        %v1091 = vpop.f32.mrf.mxu0
        %v1092 = vadd.f32 %v448, %v1091
        %1093 = vmatprep.mubr.bf16.mxu0 0
        %1094 = vmatmul.mubr.bf16.gmra.mxu0 %v671
        %v1095 = vpop.f32.mrf.mxu0
        %v1096 = vadd.f32 %v444, %v1095
        %v1097 = vpop.f32.mrf.mxu0
        %v1098 = vadd.f32 %v448, %v1097
        %v1099 = vpop.f32.mrf.mxu0
        %v1100 = vadd.f32 %v444, %v1099
        %v1101 = vpop.f32.mrf.mxu0
        %v1102 = vadd.f32 %v448, %v1101
        %1103 = vmatprep.mubr.bf16.mxu0 0
        %1104 = vmatmul.mubr.bf16.gmra.mxu0 %v674
        %v1105 = vpop.f32.mrf.mxu0
        %v1106 = vadd.f32 %v444, %v1105
        %v1107 = vpop.f32.mrf.mxu0
        %v1108 = vadd.f32 %v448, %v1107
        %v1109 = vpop.f32.mrf.mxu0
        %v1110 = vadd.f32 %v444, %v1109
        %v1111 = vpop.f32.mrf.mxu0
        %v1112 = vadd.f32 %v448, %v1111
        %1113 = vmatprep.mubr.bf16.mxu0 0
        %1114 = vmatmul.mubr.bf16.gmra.mxu0 %v677
        %v1115 = vpop.f32.mrf.mxu0
        %v1116 = vadd.f32 %v444, %v1115
        %v1117 = vpop.f32.mrf.mxu0
        %v1118 = vadd.f32 %v448, %v1117
        %v1119 = vpop.f32.mrf.mxu0
        %v1120 = vadd.f32 %v444, %v1119
        %v1121 = vpop.f32.mrf.mxu0
        %v1122 = vadd.f32 %v448, %v1121
        %1123 = vmatprep.mubr.bf16.mxu0 0
        %1124 = vmatmul.mubr.bf16.gmra.mxu0 %v680
        %v1125 = vpop.f32.mrf.mxu0
        %v1126 = vadd.f32 %v444, %v1125
        %v1127 = vpop.f32.mrf.mxu0
        %v1128 = vadd.f32 %v448, %v1127
        %v1129 = vpop.f32.mrf.mxu0
        %v1130 = vadd.f32 %v444, %v1129
        %v1131 = vpop.f32.mrf.mxu0
        %v1132 = vadd.f32 %v448, %v1131
        %1133 = vdwg.mxu0
        %vm1134 = vcmp.gt.f32.partialorder %v717, 0.0
        %vm1135 = vcmp.gt.f32.partialorder %v719, 0.0
        %vm1136 = vcmp.gt.f32.partialorder %v830, 0.0
        %vm1137 = vcmp.gt.f32.partialorder %v832, 0.0
        %vm1138 = vcmp.gt.f32.partialorder %v943, 0.0
        %vm1139 = vcmp.gt.f32.partialorder %v945, 0.0
        %vm1140 = vcmp.gt.f32.partialorder %v1056, 0.0
        %vm1141 = vcmp.gt.f32.partialorder %v1058, 0.0
        %vm1142 = vcmp.gt.f32.partialorder %v721, 0.0
        %vm1143 = vcmp.gt.f32.partialorder %v723, 0.0
        %vm1144 = vcmp.gt.f32.partialorder %v834, 0.0
        %vm1145 = vcmp.gt.f32.partialorder %v836, 0.0
        %vm1146 = vcmp.gt.f32.partialorder %v947, 0.0
        %vm1147 = vcmp.gt.f32.partialorder %v949, 0.0
        %vm1148 = vcmp.gt.f32.partialorder %v1060, 0.0
        %vm1149 = vcmp.gt.f32.partialorder %v1062, 0.0
        %vm1150 = vcmp.gt.f32.partialorder %v727, 0.0
        %vm1151 = vcmp.gt.f32.partialorder %v729, 0.0
        %vm1152 = vcmp.gt.f32.partialorder %v840, 0.0
        %vm1153 = vcmp.gt.f32.partialorder %v842, 0.0
        %vm1154 = vcmp.gt.f32.partialorder %v953, 0.0
        %vm1155 = vcmp.gt.f32.partialorder %v955, 0.0
        %vm1156 = vcmp.gt.f32.partialorder %v1066, 0.0
        %vm1157 = vcmp.gt.f32.partialorder %v1068, 0.0
        %vm1158 = vcmp.gt.f32.partialorder %v731, 0.0
        %vm1159 = vcmp.gt.f32.partialorder %v733, 0.0
        %vm1160 = vcmp.gt.f32.partialorder %v844, 0.0
        %vm1161 = vcmp.gt.f32.partialorder %v846, 0.0
        %vm1162 = vcmp.gt.f32.partialorder %v957, 0.0
        %vm1163 = vcmp.gt.f32.partialorder %v959, 0.0
        %vm1164 = vcmp.gt.f32.partialorder %v1070, 0.0
        %vm1165 = vcmp.gt.f32.partialorder %v1072, 0.0
        %vm1166 = vcmp.gt.f32.partialorder %v737, 0.0
        %vm1167 = vcmp.gt.f32.partialorder %v739, 0.0
        %vm1168 = vcmp.gt.f32.partialorder %v850, 0.0
        %vm1169 = vcmp.gt.f32.partialorder %v852, 0.0
        %vm1170 = vcmp.gt.f32.partialorder %v963, 0.0
        %vm1171 = vcmp.gt.f32.partialorder %v965, 0.0
        %vm1172 = vcmp.gt.f32.partialorder %v1076, 0.0
        %vm1173 = vcmp.gt.f32.partialorder %v1078, 0.0
        %vm1174 = vcmp.gt.f32.partialorder %v741, 0.0
        %vm1175 = vcmp.gt.f32.partialorder %v743, 0.0
        %vm1176 = vcmp.gt.f32.partialorder %v854, 0.0
        %vm1177 = vcmp.gt.f32.partialorder %v856, 0.0
        %vm1178 = vcmp.gt.f32.partialorder %v967, 0.0
        %vm1179 = vcmp.gt.f32.partialorder %v969, 0.0
        %vm1180 = vcmp.gt.f32.partialorder %v1080, 0.0
        %vm1181 = vcmp.gt.f32.partialorder %v1082, 0.0
        %vm1182 = vcmp.gt.f32.partialorder %v747, 0.0
        %vm1183 = vcmp.gt.f32.partialorder %v749, 0.0
        %vm1184 = vcmp.gt.f32.partialorder %v860, 0.0
        %vm1185 = vcmp.gt.f32.partialorder %v862, 0.0
        %vm1186 = vcmp.gt.f32.partialorder %v973, 0.0
        %vm1187 = vcmp.gt.f32.partialorder %v975, 0.0
        %vm1188 = vcmp.gt.f32.partialorder %v1086, 0.0
        %vm1189 = vcmp.gt.f32.partialorder %v1088, 0.0
        %vm1190 = vcmp.gt.f32.partialorder %v751, 0.0
        %vm1191 = vcmp.gt.f32.partialorder %v753, 0.0
        %vm1192 = vcmp.gt.f32.partialorder %v864, 0.0
        %vm1193 = vcmp.gt.f32.partialorder %v866, 0.0
        %vm1194 = vcmp.gt.f32.partialorder %v977, 0.0
        %vm1195 = vcmp.gt.f32.partialorder %v979, 0.0
        %vm1196 = vcmp.gt.f32.partialorder %v1090, 0.0
        %vm1197 = vcmp.gt.f32.partialorder %v1092, 0.0
        %vm1198 = vcmp.gt.f32.partialorder %v757, 0.0
        %vm1199 = vcmp.gt.f32.partialorder %v759, 0.0
        %vm1200 = vcmp.gt.f32.partialorder %v870, 0.0
        %vm1201 = vcmp.gt.f32.partialorder %v872, 0.0
        %vm1202 = vcmp.gt.f32.partialorder %v983, 0.0
        %vm1203 = vcmp.gt.f32.partialorder %v985, 0.0
        %vm1204 = vcmp.gt.f32.partialorder %v1096, 0.0
        %vm1205 = vcmp.gt.f32.partialorder %v1098, 0.0
        %vm1206 = vcmp.gt.f32.partialorder %v761, 0.0
        %vm1207 = vcmp.gt.f32.partialorder %v763, 0.0
        %vm1208 = vcmp.gt.f32.partialorder %v874, 0.0
        %vm1209 = vcmp.gt.f32.partialorder %v876, 0.0
        %vm1210 = vcmp.gt.f32.partialorder %v987, 0.0
        %vm1211 = vcmp.gt.f32.partialorder %v989, 0.0
        %vm1212 = vcmp.gt.f32.partialorder %v1100, 0.0
        %vm1213 = vcmp.gt.f32.partialorder %v1102, 0.0
        %vm1214 = vcmp.gt.f32.partialorder %v767, 0.0
        %vm1215 = vcmp.gt.f32.partialorder %v769, 0.0
        %vm1216 = vcmp.gt.f32.partialorder %v880, 0.0
        %vm1217 = vcmp.gt.f32.partialorder %v882, 0.0
        %vm1218 = vcmp.gt.f32.partialorder %v993, 0.0
        %vm1219 = vcmp.gt.f32.partialorder %v995, 0.0
        %vm1220 = vcmp.gt.f32.partialorder %v1106, 0.0
        %vm1221 = vcmp.gt.f32.partialorder %v1108, 0.0
        %vm1222 = vcmp.gt.f32.partialorder %v771, 0.0
        %vm1223 = vcmp.gt.f32.partialorder %v773, 0.0
        %vm1224 = vcmp.gt.f32.partialorder %v884, 0.0
        %vm1225 = vcmp.gt.f32.partialorder %v886, 0.0
        %vm1226 = vcmp.gt.f32.partialorder %v997, 0.0
        %vm1227 = vcmp.gt.f32.partialorder %v999, 0.0
        %vm1228 = vcmp.gt.f32.partialorder %v1110, 0.0
        %vm1229 = vcmp.gt.f32.partialorder %v1112, 0.0
        %vm1230 = vcmp.gt.f32.partialorder %v777, 0.0
        %vm1231 = vcmp.gt.f32.partialorder %v779, 0.0
        %vm1232 = vcmp.gt.f32.partialorder %v890, 0.0
        %vm1233 = vcmp.gt.f32.partialorder %v892, 0.0
        %vm1234 = vcmp.gt.f32.partialorder %v1003, 0.0
        %vm1235 = vcmp.gt.f32.partialorder %v1005, 0.0
        %vm1236 = vcmp.gt.f32.partialorder %v1116, 0.0
        %vm1237 = vcmp.gt.f32.partialorder %v1118, 0.0
        %vm1238 = vcmp.gt.f32.partialorder %v781, 0.0
        %vm1239 = vcmp.gt.f32.partialorder %v783, 0.0
        %vm1240 = vcmp.gt.f32.partialorder %v894, 0.0
        %vm1241 = vcmp.gt.f32.partialorder %v896, 0.0
        %vm1242 = vcmp.gt.f32.partialorder %v1007, 0.0
        %vm1243 = vcmp.gt.f32.partialorder %v1009, 0.0
        %vm1244 = vcmp.gt.f32.partialorder %v1120, 0.0
        %vm1245 = vcmp.gt.f32.partialorder %v1122, 0.0
        %vm1246 = vcmp.gt.f32.partialorder %v787, 0.0
        %vm1247 = vcmp.gt.f32.partialorder %v789, 0.0
        %vm1248 = vcmp.gt.f32.partialorder %v900, 0.0
        %vm1249 = vcmp.gt.f32.partialorder %v902, 0.0
        %vm1250 = vcmp.gt.f32.partialorder %v1013, 0.0
        %vm1251 = vcmp.gt.f32.partialorder %v1015, 0.0
        %vm1252 = vcmp.gt.f32.partialorder %v1126, 0.0
        %vm1253 = vcmp.gt.f32.partialorder %v1128, 0.0
        %vm1254 = vcmp.gt.f32.partialorder %v791, 0.0
        %vm1255 = vcmp.gt.f32.partialorder %v793, 0.0
        %vm1256 = vcmp.gt.f32.partialorder %v904, 0.0
        %vm1257 = vcmp.gt.f32.partialorder %v906, 0.0
        %vm1258 = vcmp.gt.f32.partialorder %v1017, 0.0
        %vm1259 = vcmp.gt.f32.partialorder %v1019, 0.0
        %vm1260 = vcmp.gt.f32.partialorder %v1130, 0.0
        %vm1261 = vcmp.gt.f32.partialorder %v1132, 0.0
        %v1262 = vmul.f32 %v717, 0.2
        %v1263 = vmul.f32 %v719, 0.2
        %v1264 = vmul.f32 %v830, 0.2
        %v1265 = vmul.f32 %v832, 0.2
        %v1266 = vmul.f32 %v943, 0.2
        %v1267 = vmul.f32 %v945, 0.2
        %v1268 = vmul.f32 %v1056, 0.2
        %v1269 = vmul.f32 %v1058, 0.2
        %v1270 = vmul.f32 %v721, 0.2
        %v1271 = vmul.f32 %v723, 0.2
        %v1272 = vmul.f32 %v834, 0.2
        %v1273 = vmul.f32 %v836, 0.2
        %v1274 = vmul.f32 %v947, 0.2
        %v1275 = vmul.f32 %v949, 0.2
        %v1276 = vmul.f32 %v1060, 0.2
        %v1277 = vmul.f32 %v1062, 0.2
        %v1278 = vmul.f32 %v727, 0.2
        %v1279 = vmul.f32 %v729, 0.2
        %v1280 = vmul.f32 %v840, 0.2
        %v1281 = vmul.f32 %v842, 0.2
        %v1282 = vmul.f32 %v953, 0.2
        %v1283 = vmul.f32 %v955, 0.2
        %v1284 = vmul.f32 %v1066, 0.2
        %v1285 = vmul.f32 %v1068, 0.2
        %v1286 = vmul.f32 %v731, 0.2
        %v1287 = vmul.f32 %v733, 0.2
        %v1288 = vmul.f32 %v844, 0.2
        %v1289 = vmul.f32 %v846, 0.2
        %v1290 = vmul.f32 %v957, 0.2
        %v1291 = vmul.f32 %v959, 0.2
        %v1292 = vmul.f32 %v1070, 0.2
        %v1293 = vmul.f32 %v1072, 0.2
        %v1294 = vmul.f32 %v737, 0.2
        %v1295 = vmul.f32 %v739, 0.2
        %v1296 = vmul.f32 %v850, 0.2
        %v1297 = vmul.f32 %v852, 0.2
        %v1298 = vmul.f32 %v963, 0.2
        %v1299 = vmul.f32 %v965, 0.2
        %v1300 = vmul.f32 %v1076, 0.2
        %v1301 = vmul.f32 %v1078, 0.2
        %v1302 = vmul.f32 %v741, 0.2
        %v1303 = vmul.f32 %v743, 0.2
        %v1304 = vmul.f32 %v854, 0.2
        %v1305 = vmul.f32 %v856, 0.2
        %v1306 = vmul.f32 %v967, 0.2
        %v1307 = vmul.f32 %v969, 0.2
        %v1308 = vmul.f32 %v1080, 0.2
        %v1309 = vmul.f32 %v1082, 0.2
        %v1310 = vmul.f32 %v747, 0.2
        %v1311 = vmul.f32 %v749, 0.2
        %v1312 = vmul.f32 %v860, 0.2
        %v1313 = vmul.f32 %v862, 0.2
        %v1314 = vmul.f32 %v973, 0.2
        %v1315 = vmul.f32 %v975, 0.2
        %v1316 = vmul.f32 %v1086, 0.2
        %v1317 = vmul.f32 %v1088, 0.2
        %v1318 = vmul.f32 %v751, 0.2
        %v1319 = vmul.f32 %v753, 0.2
        %v1320 = vmul.f32 %v864, 0.2
        %v1321 = vmul.f32 %v866, 0.2
        %v1322 = vmul.f32 %v977, 0.2
        %v1323 = vmul.f32 %v979, 0.2
        %v1324 = vmul.f32 %v1090, 0.2
        %v1325 = vmul.f32 %v1092, 0.2
        %v1326 = vmul.f32 %v757, 0.2
        %v1327 = vmul.f32 %v759, 0.2
        %v1328 = vmul.f32 %v870, 0.2
        %v1329 = vmul.f32 %v872, 0.2
        %v1330 = vmul.f32 %v983, 0.2
        %v1331 = vmul.f32 %v985, 0.2
        %v1332 = vmul.f32 %v1096, 0.2
        %v1333 = vmul.f32 %v1098, 0.2
        %v1334 = vmul.f32 %v761, 0.2
        %v1335 = vmul.f32 %v763, 0.2
        %v1336 = vmul.f32 %v874, 0.2
        %v1337 = vmul.f32 %v876, 0.2
        %v1338 = vmul.f32 %v987, 0.2
        %v1339 = vmul.f32 %v989, 0.2
        %v1340 = vmul.f32 %v1100, 0.2
        %v1341 = vmul.f32 %v1102, 0.2
        %v1342 = vmul.f32 %v767, 0.2
        %v1343 = vmul.f32 %v769, 0.2
        %v1344 = vmul.f32 %v880, 0.2
        %v1345 = vmul.f32 %v882, 0.2
        %v1346 = vmul.f32 %v993, 0.2
        %v1347 = vmul.f32 %v995, 0.2
        %v1348 = vmul.f32 %v1106, 0.2
        %v1349 = vmul.f32 %v1108, 0.2
        %v1350 = vmul.f32 %v771, 0.2
        %v1351 = vmul.f32 %v773, 0.2
        %v1352 = vmul.f32 %v884, 0.2
        %v1353 = vmul.f32 %v886, 0.2
        %v1354 = vmul.f32 %v997, 0.2
        %v1355 = vmul.f32 %v999, 0.2
        %v1356 = vmul.f32 %v1110, 0.2
        %v1357 = vmul.f32 %v1112, 0.2
        %v1358 = vmul.f32 %v777, 0.2
        %v1359 = vmul.f32 %v779, 0.2
        %v1360 = vmul.f32 %v890, 0.2
        %v1361 = vmul.f32 %v892, 0.2
        %v1362 = vmul.f32 %v1003, 0.2
        %v1363 = vmul.f32 %v1005, 0.2
        %v1364 = vmul.f32 %v1116, 0.2
        %v1365 = vmul.f32 %v1118, 0.2
        %v1366 = vmul.f32 %v781, 0.2
        %v1367 = vmul.f32 %v783, 0.2
        %v1368 = vmul.f32 %v894, 0.2
        %v1369 = vmul.f32 %v896, 0.2
        %v1370 = vmul.f32 %v1007, 0.2
        %v1371 = vmul.f32 %v1009, 0.2
        %v1372 = vmul.f32 %v1120, 0.2
        %v1373 = vmul.f32 %v1122, 0.2
        %v1374 = vmul.f32 %v787, 0.2
        %v1375 = vmul.f32 %v789, 0.2
        %v1376 = vmul.f32 %v900, 0.2
        %v1377 = vmul.f32 %v902, 0.2
        %v1378 = vmul.f32 %v1013, 0.2
        %v1379 = vmul.f32 %v1015, 0.2
        %v1380 = vmul.f32 %v1126, 0.2
        %v1381 = vmul.f32 %v1128, 0.2
        %v1382 = vmul.f32 %v791, 0.2
        %v1383 = vmul.f32 %v793, 0.2
        %v1384 = vmul.f32 %v904, 0.2
        %v1385 = vmul.f32 %v906, 0.2
        %v1386 = vmul.f32 %v1017, 0.2
        %v1387 = vmul.f32 %v1019, 0.2
        %v1388 = vmul.f32 %v1130, 0.2
        %v1389 = vmul.f32 %v1132, 0.2
        %v1390 = vsel %vm1134, %v717, %v1262
        %v1391 = vsel %vm1135, %v719, %v1263
        %v1392 = vsel %vm1136, %v830, %v1264
        %v1393 = vsel %vm1137, %v832, %v1265
        %v1394 = vsel %vm1138, %v943, %v1266
        %v1395 = vsel %vm1139, %v945, %v1267
        %v1396 = vsel %vm1140, %v1056, %v1268
        %v1397 = vsel %vm1141, %v1058, %v1269
        %v1398 = vsel %vm1142, %v721, %v1270
        %v1399 = vsel %vm1143, %v723, %v1271
        %v1400 = vsel %vm1144, %v834, %v1272
        %v1401 = vsel %vm1145, %v836, %v1273
        %v1402 = vsel %vm1146, %v947, %v1274
        %v1403 = vsel %vm1147, %v949, %v1275
        %v1404 = vsel %vm1148, %v1060, %v1276
        %v1405 = vsel %vm1149, %v1062, %v1277
        %v1406 = vsel %vm1150, %v727, %v1278
        %v1407 = vsel %vm1151, %v729, %v1279
        %v1408 = vsel %vm1152, %v840, %v1280
        %v1409 = vsel %vm1153, %v842, %v1281
        %v1410 = vsel %vm1154, %v953, %v1282
        %v1411 = vsel %vm1155, %v955, %v1283
        %v1412 = vsel %vm1156, %v1066, %v1284
        %v1413 = vsel %vm1157, %v1068, %v1285
        %v1414 = vsel %vm1158, %v731, %v1286
        %v1415 = vsel %vm1159, %v733, %v1287
        %v1416 = vsel %vm1160, %v844, %v1288
        %v1417 = vsel %vm1161, %v846, %v1289
        %v1418 = vsel %vm1162, %v957, %v1290
        %v1419 = vsel %vm1163, %v959, %v1291
        %v1420 = vsel %vm1164, %v1070, %v1292
        %v1421 = vsel %vm1165, %v1072, %v1293
        %v1422 = vsel %vm1166, %v737, %v1294
        %v1423 = vsel %vm1167, %v739, %v1295
        %v1424 = vsel %vm1168, %v850, %v1296
        %v1425 = vsel %vm1169, %v852, %v1297
        %v1426 = vsel %vm1170, %v963, %v1298
        %v1427 = vsel %vm1171, %v965, %v1299
        %v1428 = vsel %vm1172, %v1076, %v1300
        %v1429 = vsel %vm1173, %v1078, %v1301
        %v1430 = vsel %vm1174, %v741, %v1302
        %v1431 = vsel %vm1175, %v743, %v1303
        %v1432 = vsel %vm1176, %v854, %v1304
        %v1433 = vsel %vm1177, %v856, %v1305
        %v1434 = vsel %vm1178, %v967, %v1306
        %v1435 = vsel %vm1179, %v969, %v1307
        %v1436 = vsel %vm1180, %v1080, %v1308
        %v1437 = vsel %vm1181, %v1082, %v1309
        %v1438 = vsel %vm1182, %v747, %v1310
        %v1439 = vsel %vm1183, %v749, %v1311
        %v1440 = vsel %vm1184, %v860, %v1312
        %v1441 = vsel %vm1185, %v862, %v1313
        %v1442 = vsel %vm1186, %v973, %v1314
        %v1443 = vsel %vm1187, %v975, %v1315
        %v1444 = vsel %vm1188, %v1086, %v1316
        %v1445 = vsel %vm1189, %v1088, %v1317
        %v1446 = vsel %vm1190, %v751, %v1318
        %v1447 = vsel %vm1191, %v753, %v1319
        %v1448 = vsel %vm1192, %v864, %v1320
        %v1449 = vsel %vm1193, %v866, %v1321
        %v1450 = vsel %vm1194, %v977, %v1322
        %v1451 = vsel %vm1195, %v979, %v1323
        %v1452 = vsel %vm1196, %v1090, %v1324
        %v1453 = vsel %vm1197, %v1092, %v1325
        %v1454 = vsel %vm1198, %v757, %v1326
        %v1455 = vsel %vm1199, %v759, %v1327
        %v1456 = vsel %vm1200, %v870, %v1328
        %v1457 = vsel %vm1201, %v872, %v1329
        %v1458 = vsel %vm1202, %v983, %v1330
        %v1459 = vsel %vm1203, %v985, %v1331
        %v1460 = vsel %vm1204, %v1096, %v1332
        %v1461 = vsel %vm1205, %v1098, %v1333
        %v1462 = vsel %vm1206, %v761, %v1334
        %v1463 = vsel %vm1207, %v763, %v1335
        %v1464 = vsel %vm1208, %v874, %v1336
        %v1465 = vsel %vm1209, %v876, %v1337
        %v1466 = vsel %vm1210, %v987, %v1338
        %v1467 = vsel %vm1211, %v989, %v1339
        %v1468 = vsel %vm1212, %v1100, %v1340
        %v1469 = vsel %vm1213, %v1102, %v1341
        %v1470 = vsel %vm1214, %v767, %v1342
        %v1471 = vsel %vm1215, %v769, %v1343
        %v1472 = vsel %vm1216, %v880, %v1344
        %v1473 = vsel %vm1217, %v882, %v1345
        %v1474 = vsel %vm1218, %v993, %v1346
        %v1475 = vsel %vm1219, %v995, %v1347
        %v1476 = vsel %vm1220, %v1106, %v1348
        %v1477 = vsel %vm1221, %v1108, %v1349
        %v1478 = vsel %vm1222, %v771, %v1350
        %v1479 = vsel %vm1223, %v773, %v1351
        %v1480 = vsel %vm1224, %v884, %v1352
        %v1481 = vsel %vm1225, %v886, %v1353
        %v1482 = vsel %vm1226, %v997, %v1354
        %v1483 = vsel %vm1227, %v999, %v1355
        %v1484 = vsel %vm1228, %v1110, %v1356
        %v1485 = vsel %vm1229, %v1112, %v1357
        %v1486 = vsel %vm1230, %v777, %v1358
        %v1487 = vsel %vm1231, %v779, %v1359
        %v1488 = vsel %vm1232, %v890, %v1360
        %v1489 = vsel %vm1233, %v892, %v1361
        %v1490 = vsel %vm1234, %v1003, %v1362
        %v1491 = vsel %vm1235, %v1005, %v1363
        %v1492 = vsel %vm1236, %v1116, %v1364
        %v1493 = vsel %vm1237, %v1118, %v1365
        %v1494 = vsel %vm1238, %v781, %v1366
        %v1495 = vsel %vm1239, %v783, %v1367
        %v1496 = vsel %vm1240, %v894, %v1368
        %v1497 = vsel %vm1241, %v896, %v1369
        %v1498 = vsel %vm1242, %v1007, %v1370
        %v1499 = vsel %vm1243, %v1009, %v1371
        %v1500 = vsel %vm1244, %v1120, %v1372
        %v1501 = vsel %vm1245, %v1122, %v1373
        %v1502 = vsel %vm1246, %v787, %v1374
        %v1503 = vsel %vm1247, %v789, %v1375
        %v1504 = vsel %vm1248, %v900, %v1376
        %v1505 = vsel %vm1249, %v902, %v1377
        %v1506 = vsel %vm1250, %v1013, %v1378
        %v1507 = vsel %vm1251, %v1015, %v1379
        %v1508 = vsel %vm1252, %v1126, %v1380
        %v1509 = vsel %vm1253, %v1128, %v1381
        %v1510 = vsel %vm1254, %v791, %v1382
        %v1511 = vsel %vm1255, %v793, %v1383
        %v1512 = vsel %vm1256, %v904, %v1384
        %v1513 = vsel %vm1257, %v906, %v1385
        %v1514 = vsel %vm1258, %v1017, %v1386
        %v1515 = vsel %vm1259, %v1019, %v1387
        %v1516 = vsel %vm1260, %v1130, %v1388
        %v1517 = vsel %vm1261, %v1132, %v1389
        %v1518 = vpack.c.bf16 %v1398, %v1390
        %v1519 = vpack.c.bf16 %v1399, %v1391
        %v1520 = vpack.c.bf16 %v1400, %v1392
        %v1521 = vpack.c.bf16 %v1401, %v1393
        %v1522 = vpack.c.bf16 %v1402, %v1394
        %v1523 = vpack.c.bf16 %v1403, %v1395
        %v1524 = vpack.c.bf16 %v1404, %v1396
        %v1525 = vpack.c.bf16 %v1405, %v1397
        %v1526 = vpack.c.bf16 %v1414, %v1406
        %v1527 = vpack.c.bf16 %v1415, %v1407
        %v1528 = vpack.c.bf16 %v1416, %v1408
        %v1529 = vpack.c.bf16 %v1417, %v1409
        %v1530 = vpack.c.bf16 %v1418, %v1410
        %v1531 = vpack.c.bf16 %v1419, %v1411
        %v1532 = vpack.c.bf16 %v1420, %v1412
        %v1533 = vpack.c.bf16 %v1421, %v1413
        %v1534 = vpack.c.bf16 %v1430, %v1422
        %v1535 = vpack.c.bf16 %v1431, %v1423
        %v1536 = vpack.c.bf16 %v1432, %v1424
        %v1537 = vpack.c.bf16 %v1433, %v1425
        %v1538 = vpack.c.bf16 %v1434, %v1426
        %v1539 = vpack.c.bf16 %v1435, %v1427
        %v1540 = vpack.c.bf16 %v1436, %v1428
        %v1541 = vpack.c.bf16 %v1437, %v1429
        %v1542 = vpack.c.bf16 %v1446, %v1438
        %v1543 = vpack.c.bf16 %v1447, %v1439
        %v1544 = vpack.c.bf16 %v1448, %v1440
        %v1545 = vpack.c.bf16 %v1449, %v1441
        %v1546 = vpack.c.bf16 %v1450, %v1442
        %v1547 = vpack.c.bf16 %v1451, %v1443
        %v1548 = vpack.c.bf16 %v1452, %v1444
        %v1549 = vpack.c.bf16 %v1453, %v1445
        %v1550 = vpack.c.bf16 %v1462, %v1454
        %v1551 = vpack.c.bf16 %v1463, %v1455
        %v1552 = vpack.c.bf16 %v1464, %v1456
        %v1553 = vpack.c.bf16 %v1465, %v1457
        %v1554 = vpack.c.bf16 %v1466, %v1458
        %v1555 = vpack.c.bf16 %v1467, %v1459
        %v1556 = vpack.c.bf16 %v1468, %v1460
        %v1557 = vpack.c.bf16 %v1469, %v1461
        %v1558 = vpack.c.bf16 %v1478, %v1470
        %v1559 = vpack.c.bf16 %v1479, %v1471
        %v1560 = vpack.c.bf16 %v1480, %v1472
        %v1561 = vpack.c.bf16 %v1481, %v1473
        %v1562 = vpack.c.bf16 %v1482, %v1474
        %v1563 = vpack.c.bf16 %v1483, %v1475
        %v1564 = vpack.c.bf16 %v1484, %v1476
        %v1565 = vpack.c.bf16 %v1485, %v1477
        %v1566 = vpack.c.bf16 %v1494, %v1486
        %v1567 = vpack.c.bf16 %v1495, %v1487
        %v1568 = vpack.c.bf16 %v1496, %v1488
        %v1569 = vpack.c.bf16 %v1497, %v1489
        %v1570 = vpack.c.bf16 %v1498, %v1490
        %v1571 = vpack.c.bf16 %v1499, %v1491
        %v1572 = vpack.c.bf16 %v1500, %v1492
        %v1573 = vpack.c.bf16 %v1501, %v1493
        %v1574 = vpack.c.bf16 %v1510, %v1502
        %v1575 = vpack.c.bf16 %v1511, %v1503
        %v1576 = vpack.c.bf16 %v1512, %v1504
        %v1577 = vpack.c.bf16 %v1513, %v1505
        %v1578 = vpack.c.bf16 %v1514, %v1506
        %v1579 = vpack.c.bf16 %v1515, %v1507
        %v1580 = vpack.c.bf16 %v1516, %v1508
        %v1581 = vpack.c.bf16 %v1517, %v1509
        %v1582 = vld [vmem:[#allocation2] sm:$0xff]
        %v1583 = vld [vmem:[#allocation2 + $0x8] sm:$0xff]
        %v1584 = vld [vmem:[#allocation2 + $0x10] sm:$0xff]
        %v1585 = vld [vmem:[#allocation2 + $0x18] sm:$0xff]
        %v1586 = vld [vmem:[#allocation2 + $0x20] sm:$0xff]
        %v1587 = vld [vmem:[#allocation2 + $0x28] sm:$0xff]
        %v1588 = vld [vmem:[#allocation2 + $0x30] sm:$0xff]
        %v1589 = vld [vmem:[#allocation2 + $0x38] sm:$0xff]
        %v1590 = vld [vmem:[#allocation2 + $0x40] sm:$0xff]
        %v1591 = vld [vmem:[#allocation2 + $0x48] sm:$0xff]
        %v1592 = vld [vmem:[#allocation2 + $0x50] sm:$0xff]
        %v1593 = vld [vmem:[#allocation2 + $0x58] sm:$0xff]
        %v1594 = vld [vmem:[#allocation2 + $0x60] sm:$0xff]
        %v1595 = vld [vmem:[#allocation2 + $0x68] sm:$0xff]
        %v1596 = vld [vmem:[#allocation2 + $0x70] sm:$0xff]
        %v1597 = vld [vmem:[#allocation2 + $0x78] sm:$0xff]
        %v1598 = vld [vmem:[#allocation2 + $0x80] sm:$0xff]
        %v1599 = vld [vmem:[#allocation2 + $0x88] sm:$0xff]
        %v1600 = vld [vmem:[#allocation2 + $0x90] sm:$0xff]
        %v1601 = vld [vmem:[#allocation2 + $0x98] sm:$0xff]
        %v1602 = vld [vmem:[#allocation2 + $0xa0] sm:$0xff]
        %v1603 = vld [vmem:[#allocation2 + $0xa8] sm:$0xff]
        %v1604 = vld [vmem:[#allocation2 + $0xb0] sm:$0xff]
        %v1605 = vld [vmem:[#allocation2 + $0xb8] sm:$0xff]
        %v1606 = vld [vmem:[#allocation2 + $0xc0] sm:$0xff]
        %v1607 = vld [vmem:[#allocation2 + $0xc8] sm:$0xff]
        %v1608 = vld [vmem:[#allocation2 + $0xd0] sm:$0xff]
        %v1609 = vld [vmem:[#allocation2 + $0xd8] sm:$0xff]
        %v1610 = vld [vmem:[#allocation2 + $0xe0] sm:$0xff]
        %v1611 = vld [vmem:[#allocation2 + $0xe8] sm:$0xff]
        %v1612 = vld [vmem:[#allocation2 + $0xf0] sm:$0xff]
        %v1613 = vld [vmem:[#allocation2 + $0xf8] sm:$0xff]
        %v1614 = vld [vmem:[#allocation2 + $0x100] sm:$0xff]
        %v1615 = vld [vmem:[#allocation2 + $0x108] sm:$0xff]
        %v1616 = vld [vmem:[#allocation2 + $0x110] sm:$0xff]
        %v1617 = vld [vmem:[#allocation2 + $0x118] sm:$0xff]
        %v1618 = vld [vmem:[#allocation2 + $0x120] sm:$0xff]
        %v1619 = vld [vmem:[#allocation2 + $0x128] sm:$0xff]
        %v1620 = vld [vmem:[#allocation2 + $0x130] sm:$0xff]
        %v1621 = vld [vmem:[#allocation2 + $0x138] sm:$0xff]
        %v1622 = vld [vmem:[#allocation2 + $0x140] sm:$0xff]
        %v1623 = vld [vmem:[#allocation2 + $0x148] sm:$0xff]
        %v1624 = vld [vmem:[#allocation2 + $0x150] sm:$0xff]
        %v1625 = vld [vmem:[#allocation2 + $0x158] sm:$0xff]
        %v1626 = vld [vmem:[#allocation2 + $0x160] sm:$0xff]
        %v1627 = vld [vmem:[#allocation2 + $0x168] sm:$0xff]
        %v1628 = vld [vmem:[#allocation2 + $0x170] sm:$0xff]
        %v1629 = vld [vmem:[#allocation2 + $0x178] sm:$0xff]
        %v1630 = vld [vmem:[#allocation2 + $0x180] sm:$0xff]
        %v1631 = vld [vmem:[#allocation2 + $0x188] sm:$0xff]
        %v1632 = vld [vmem:[#allocation2 + $0x190] sm:$0xff]
        %v1633 = vld [vmem:[#allocation2 + $0x198] sm:$0xff]
        %v1634 = vld [vmem:[#allocation2 + $0x1a0] sm:$0xff]
        %v1635 = vld [vmem:[#allocation2 + $0x1a8] sm:$0xff]
        %v1636 = vld [vmem:[#allocation2 + $0x1b0] sm:$0xff]
        %v1637 = vld [vmem:[#allocation2 + $0x1b8] sm:$0xff]
        %v1638 = vld [vmem:[#allocation2 + $0x1c0] sm:$0xff]
        %v1639 = vld [vmem:[#allocation2 + $0x1c8] sm:$0xff]
        %v1640 = vld [vmem:[#allocation2 + $0x1d0] sm:$0xff]
        %v1641 = vld [vmem:[#allocation2 + $0x1d8] sm:$0xff]
        %v1642 = vld [vmem:[#allocation2 + $0x1e0] sm:$0xff]
        %v1643 = vld [vmem:[#allocation2 + $0x1e8] sm:$0xff]
        %v1644 = vld [vmem:[#allocation2 + $0x1f0] sm:$0xff]
        %v1645 = vld [vmem:[#allocation2 + $0x1f8] sm:$0xff]
        %v1646 = vld [vmem:[#allocation2 + $0x200] sm:$0xff]
        %v1647 = vld [vmem:[#allocation2 + $0x208] sm:$0xff]
        %v1648 = vld [vmem:[#allocation2 + $0x210] sm:$0xff]
        %v1649 = vld [vmem:[#allocation2 + $0x218] sm:$0xff]
        %v1650 = vld [vmem:[#allocation2 + $0x220] sm:$0xff]
        %v1651 = vld [vmem:[#allocation2 + $0x228] sm:$0xff]
        %v1652 = vld [vmem:[#allocation2 + $0x230] sm:$0xff]
        %v1653 = vld [vmem:[#allocation2 + $0x238] sm:$0xff]
        %v1654 = vld [vmem:[#allocation2 + $0x240] sm:$0xff]
        %v1655 = vld [vmem:[#allocation2 + $0x248] sm:$0xff]
        %v1656 = vld [vmem:[#allocation2 + $0x250] sm:$0xff]
        %v1657 = vld [vmem:[#allocation2 + $0x258] sm:$0xff]
        %v1658 = vld [vmem:[#allocation2 + $0x260] sm:$0xff]
        %v1659 = vld [vmem:[#allocation2 + $0x268] sm:$0xff]
        %v1660 = vld [vmem:[#allocation2 + $0x270] sm:$0xff]
        %v1661 = vld [vmem:[#allocation2 + $0x278] sm:$0xff]
        %v1662 = vld [vmem:[#allocation2 + $0x280] sm:$0xff]
        %v1663 = vld [vmem:[#allocation2 + $0x288] sm:$0xff]
        %v1664 = vld [vmem:[#allocation2 + $0x290] sm:$0xff]
        %v1665 = vld [vmem:[#allocation2 + $0x298] sm:$0xff]
        %v1666 = vld [vmem:[#allocation2 + $0x2a0] sm:$0xff]
        %v1667 = vld [vmem:[#allocation2 + $0x2a8] sm:$0xff]
        %v1668 = vld [vmem:[#allocation2 + $0x2b0] sm:$0xff]
        %v1669 = vld [vmem:[#allocation2 + $0x2b8] sm:$0xff]
        %v1670 = vld [vmem:[#allocation2 + $0x2c0] sm:$0xff]
        %v1671 = vld [vmem:[#allocation2 + $0x2c8] sm:$0xff]
        %v1672 = vld [vmem:[#allocation2 + $0x2d0] sm:$0xff]
        %v1673 = vld [vmem:[#allocation2 + $0x2d8] sm:$0xff]
        %v1674 = vld [vmem:[#allocation2 + $0x2e0] sm:$0xff]
        %v1675 = vld [vmem:[#allocation2 + $0x2e8] sm:$0xff]
        %v1676 = vld [vmem:[#allocation2 + $0x2f0] sm:$0xff]
        %v1677 = vld [vmem:[#allocation2 + $0x2f8] sm:$0xff]
        %v1678 = vld [vmem:[#allocation2 + $0x300] sm:$0xff]
        %v1679 = vld [vmem:[#allocation2 + $0x308] sm:$0xff]
        %v1680 = vld [vmem:[#allocation2 + $0x310] sm:$0xff]
        %v1681 = vld [vmem:[#allocation2 + $0x318] sm:$0xff]
        %v1682 = vld [vmem:[#allocation2 + $0x320] sm:$0xff]
        %v1683 = vld [vmem:[#allocation2 + $0x328] sm:$0xff]
        %v1684 = vld [vmem:[#allocation2 + $0x330] sm:$0xff]
        %v1685 = vld [vmem:[#allocation2 + $0x338] sm:$0xff]
        %v1686 = vld [vmem:[#allocation2 + $0x340] sm:$0xff]
        %v1687 = vld [vmem:[#allocation2 + $0x348] sm:$0xff]
        %v1688 = vld [vmem:[#allocation2 + $0x350] sm:$0xff]
        %v1689 = vld [vmem:[#allocation2 + $0x358] sm:$0xff]
        %v1690 = vld [vmem:[#allocation2 + $0x360] sm:$0xff]
        %v1691 = vld [vmem:[#allocation2 + $0x368] sm:$0xff]
        %v1692 = vld [vmem:[#allocation2 + $0x370] sm:$0xff]
        %v1693 = vld [vmem:[#allocation2 + $0x378] sm:$0xff]
        %v1694 = vld [vmem:[#allocation2 + $0x380] sm:$0xff]
        %v1695 = vld [vmem:[#allocation2 + $0x388] sm:$0xff]
        %v1696 = vld [vmem:[#allocation2 + $0x390] sm:$0xff]
        %v1697 = vld [vmem:[#allocation2 + $0x398] sm:$0xff]
        %v1698 = vld [vmem:[#allocation2 + $0x3a0] sm:$0xff]
        %v1699 = vld [vmem:[#allocation2 + $0x3a8] sm:$0xff]
        %v1700 = vld [vmem:[#allocation2 + $0x3b0] sm:$0xff]
        %v1701 = vld [vmem:[#allocation2 + $0x3b8] sm:$0xff]
        %v1702 = vld [vmem:[#allocation2 + $0x3c0] sm:$0xff]
        %v1703 = vld [vmem:[#allocation2 + $0x3c8] sm:$0xff]
        %v1704 = vld [vmem:[#allocation2 + $0x3d0] sm:$0xff]
        %v1705 = vld [vmem:[#allocation2 + $0x3d8] sm:$0xff]
        %v1706 = vld [vmem:[#allocation2 + $0x3e0] sm:$0xff]
        %v1707 = vld [vmem:[#allocation2 + $0x3e8] sm:$0xff]
        %v1708 = vld [vmem:[#allocation2 + $0x3f0] sm:$0xff]
        %v1709 = vld [vmem:[#allocation2 + $0x3f8] sm:$0xff]
        %v1710 = vld [vmem:[#allocation2 + $0x400] sm:$0xff]
        %v1711 = vld [vmem:[#allocation2 + $0x408] sm:$0xff]
        %v1712 = vld [vmem:[#allocation2 + $0x410] sm:$0xff]
        %v1713 = vld [vmem:[#allocation2 + $0x418] sm:$0xff]
        %v1714 = vld [vmem:[#allocation2 + $0x420] sm:$0xff]
        %v1715 = vld [vmem:[#allocation2 + $0x428] sm:$0xff]
        %v1716 = vld [vmem:[#allocation2 + $0x430] sm:$0xff]
        %v1717 = vld [vmem:[#allocation2 + $0x438] sm:$0xff]
        %v1718 = vld [vmem:[#allocation2 + $0x440] sm:$0xff]
        %v1719 = vld [vmem:[#allocation2 + $0x448] sm:$0xff]
        %v1720 = vld [vmem:[#allocation2 + $0x450] sm:$0xff]
        %v1721 = vld [vmem:[#allocation2 + $0x458] sm:$0xff]
        %v1722 = vld [vmem:[#allocation2 + $0x460] sm:$0xff]
        %v1723 = vld [vmem:[#allocation2 + $0x468] sm:$0xff]
        %v1724 = vld [vmem:[#allocation2 + $0x470] sm:$0xff]
        %v1725 = vld [vmem:[#allocation2 + $0x478] sm:$0xff]
        %v1726 = vld [vmem:[#allocation2 + $0x480] sm:$0xff]
        %v1727 = vld [vmem:[#allocation2 + $0x488] sm:$0xff]
        %v1728 = vld [vmem:[#allocation2 + $0x490] sm:$0xff]
        %v1729 = vld [vmem:[#allocation2 + $0x498] sm:$0xff]
        %v1730 = vld [vmem:[#allocation2 + $0x4a0] sm:$0xff]
        %v1731 = vld [vmem:[#allocation2 + $0x4a8] sm:$0xff]
        %v1732 = vld [vmem:[#allocation2 + $0x4b0] sm:$0xff]
        %v1733 = vld [vmem:[#allocation2 + $0x4b8] sm:$0xff]
        %v1734 = vld [vmem:[#allocation2 + $0x4c0] sm:$0xff]
        %v1735 = vld [vmem:[#allocation2 + $0x4c8] sm:$0xff]
        %v1736 = vld [vmem:[#allocation2 + $0x4d0] sm:$0xff]
        %v1737 = vld [vmem:[#allocation2 + $0x4d8] sm:$0xff]
        %v1738 = vld [vmem:[#allocation2 + $0x4e0] sm:$0xff]
        %v1739 = vld [vmem:[#allocation2 + $0x4e8] sm:$0xff]
        %v1740 = vld [vmem:[#allocation2 + $0x4f0] sm:$0xff]
        %v1741 = vld [vmem:[#allocation2 + $0x4f8] sm:$0xff]
        %v1742 = vld [vmem:[#allocation2 + $0x500] sm:$0xff]
        %v1743 = vld [vmem:[#allocation2 + $0x508] sm:$0xff]
        %v1744 = vld [vmem:[#allocation2 + $0x510] sm:$0xff]
        %v1745 = vld [vmem:[#allocation2 + $0x518] sm:$0xff]
        %v1746 = vld [vmem:[#allocation2 + $0x520] sm:$0xff]
        %v1747 = vld [vmem:[#allocation2 + $0x528] sm:$0xff]
        %v1748 = vld [vmem:[#allocation2 + $0x530] sm:$0xff]
        %v1749 = vld [vmem:[#allocation2 + $0x538] sm:$0xff]
        %v1750 = vld [vmem:[#allocation2 + $0x540] sm:$0xff]
        %v1751 = vld [vmem:[#allocation2 + $0x548] sm:$0xff]
        %v1752 = vld [vmem:[#allocation2 + $0x550] sm:$0xff]
        %v1753 = vld [vmem:[#allocation2 + $0x558] sm:$0xff]
        %v1754 = vld [vmem:[#allocation2 + $0x560] sm:$0xff]
        %v1755 = vld [vmem:[#allocation2 + $0x568] sm:$0xff]
        %v1756 = vld [vmem:[#allocation2 + $0x570] sm:$0xff]
        %v1757 = vld [vmem:[#allocation2 + $0x578] sm:$0xff]
        %v1758 = vld [vmem:[#allocation2 + $0x580] sm:$0xff]
        %v1759 = vld [vmem:[#allocation2 + $0x588] sm:$0xff]
        %v1760 = vld [vmem:[#allocation2 + $0x590] sm:$0xff]
        %v1761 = vld [vmem:[#allocation2 + $0x598] sm:$0xff]
        %v1762 = vld [vmem:[#allocation2 + $0x5a0] sm:$0xff]
        %v1763 = vld [vmem:[#allocation2 + $0x5a8] sm:$0xff]
        %v1764 = vld [vmem:[#allocation2 + $0x5b0] sm:$0xff]
        %v1765 = vld [vmem:[#allocation2 + $0x5b8] sm:$0xff]
        %v1766 = vld [vmem:[#allocation2 + $0x5c0] sm:$0xff]
        %v1767 = vld [vmem:[#allocation2 + $0x5c8] sm:$0xff]
        %v1768 = vld [vmem:[#allocation2 + $0x5d0] sm:$0xff]
        %v1769 = vld [vmem:[#allocation2 + $0x5d8] sm:$0xff]
        %v1770 = vld [vmem:[#allocation2 + $0x5e0] sm:$0xff]
        %v1771 = vld [vmem:[#allocation2 + $0x5e8] sm:$0xff]
        %v1772 = vld [vmem:[#allocation2 + $0x5f0] sm:$0xff]
        %v1773 = vld [vmem:[#allocation2 + $0x5f8] sm:$0xff]
        %v1774 = vld [vmem:[#allocation2 + $0x600] sm:$0xff]
        %v1775 = vld [vmem:[#allocation2 + $0x608] sm:$0xff]
        %v1776 = vld [vmem:[#allocation2 + $0x610] sm:$0xff]
        %v1777 = vld [vmem:[#allocation2 + $0x618] sm:$0xff]
        %v1778 = vld [vmem:[#allocation2 + $0x620] sm:$0xff]
        %v1779 = vld [vmem:[#allocation2 + $0x628] sm:$0xff]
        %v1780 = vld [vmem:[#allocation2 + $0x630] sm:$0xff]
        %v1781 = vld [vmem:[#allocation2 + $0x638] sm:$0xff]
        %v1782 = vld [vmem:[#allocation2 + $0x640] sm:$0xff]
        %v1783 = vld [vmem:[#allocation2 + $0x648] sm:$0xff]
        %v1784 = vld [vmem:[#allocation2 + $0x650] sm:$0xff]
        %v1785 = vld [vmem:[#allocation2 + $0x658] sm:$0xff]
        %v1786 = vld [vmem:[#allocation2 + $0x660] sm:$0xff]
        %v1787 = vld [vmem:[#allocation2 + $0x668] sm:$0xff]
        %v1788 = vld [vmem:[#allocation2 + $0x670] sm:$0xff]
        %v1789 = vld [vmem:[#allocation2 + $0x678] sm:$0xff]
        %v1790 = vld [vmem:[#allocation2 + $0x680] sm:$0xff]
        %v1791 = vld [vmem:[#allocation2 + $0x688] sm:$0xff]
        %v1792 = vld [vmem:[#allocation2 + $0x690] sm:$0xff]
        %v1793 = vld [vmem:[#allocation2 + $0x698] sm:$0xff]
        %v1794 = vld [vmem:[#allocation2 + $0x6a0] sm:$0xff]
        %v1795 = vld [vmem:[#allocation2 + $0x6a8] sm:$0xff]
        %v1796 = vld [vmem:[#allocation2 + $0x6b0] sm:$0xff]
        %v1797 = vld [vmem:[#allocation2 + $0x6b8] sm:$0xff]
        %v1798 = vld [vmem:[#allocation2 + $0x6c0] sm:$0xff]
        %v1799 = vld [vmem:[#allocation2 + $0x6c8] sm:$0xff]
        %v1800 = vld [vmem:[#allocation2 + $0x6d0] sm:$0xff]
        %v1801 = vld [vmem:[#allocation2 + $0x6d8] sm:$0xff]
        %v1802 = vld [vmem:[#allocation2 + $0x6e0] sm:$0xff]
        %v1803 = vld [vmem:[#allocation2 + $0x6e8] sm:$0xff]
        %v1804 = vld [vmem:[#allocation2 + $0x6f0] sm:$0xff]
        %v1805 = vld [vmem:[#allocation2 + $0x6f8] sm:$0xff]
        %v1806 = vld [vmem:[#allocation2 + $0x700] sm:$0xff]
        %v1807 = vld [vmem:[#allocation2 + $0x708] sm:$0xff]
        %v1808 = vld [vmem:[#allocation2 + $0x710] sm:$0xff]
        %v1809 = vld [vmem:[#allocation2 + $0x718] sm:$0xff]
        %v1810 = vld [vmem:[#allocation2 + $0x720] sm:$0xff]
        %v1811 = vld [vmem:[#allocation2 + $0x728] sm:$0xff]
        %v1812 = vld [vmem:[#allocation2 + $0x730] sm:$0xff]
        %v1813 = vld [vmem:[#allocation2 + $0x738] sm:$0xff]
        %v1814 = vld [vmem:[#allocation2 + $0x740] sm:$0xff]
        %v1815 = vld [vmem:[#allocation2 + $0x748] sm:$0xff]
        %v1816 = vld [vmem:[#allocation2 + $0x750] sm:$0xff]
        %v1817 = vld [vmem:[#allocation2 + $0x758] sm:$0xff]
        %v1818 = vld [vmem:[#allocation2 + $0x760] sm:$0xff]
        %v1819 = vld [vmem:[#allocation2 + $0x768] sm:$0xff]
        %v1820 = vld [vmem:[#allocation2 + $0x770] sm:$0xff]
        %v1821 = vld [vmem:[#allocation2 + $0x778] sm:$0xff]
        %v1822 = vld [vmem:[#allocation2 + $0x780] sm:$0xff]
        %v1823 = vld [vmem:[#allocation2 + $0x788] sm:$0xff]
        %v1824 = vld [vmem:[#allocation2 + $0x790] sm:$0xff]
        %v1825 = vld [vmem:[#allocation2 + $0x798] sm:$0xff]
        %v1826 = vld [vmem:[#allocation2 + $0x7a0] sm:$0xff]
        %v1827 = vld [vmem:[#allocation2 + $0x7a8] sm:$0xff]
        %v1828 = vld [vmem:[#allocation2 + $0x7b0] sm:$0xff]
        %v1829 = vld [vmem:[#allocation2 + $0x7b8] sm:$0xff]
        %v1830 = vld [vmem:[#allocation2 + $0x7c0] sm:$0xff]
        %v1831 = vld [vmem:[#allocation2 + $0x7c8] sm:$0xff]
        %v1832 = vld [vmem:[#allocation2 + $0x7d0] sm:$0xff]
        %v1833 = vld [vmem:[#allocation2 + $0x7d8] sm:$0xff]
        %v1834 = vld [vmem:[#allocation2 + $0x7e0] sm:$0xff]
        %v1835 = vld [vmem:[#allocation2 + $0x7e8] sm:$0xff]
        %v1836 = vld [vmem:[#allocation2 + $0x7f0] sm:$0xff]
        %v1837 = vld [vmem:[#allocation2 + $0x7f8] sm:$0xff]
        %v1838 = vld [vmem:[%s4] sm:$0xf]
        %v1840 = vlaneseq
        %v1841 = vshrl.u32 %v1840, 7
        %v1842 = vsub.s32 0, %v1841
        %v1843 = vrot.slane %v1838, %v1842
        %v1844 = vlaneseq
        %v1845 = vshrl.u32 %v1844, 7
        %v1846 = vsub.s32 1, %v1845
        %v1847 = vrot.slane %v1838, %v1846
        %v1848 = vlaneseq
        %v1849 = vshrl.u32 %v1848, 7
        %v1850 = vsub.s32 2, %v1849
        %v1851 = vrot.slane %v1838, %v1850
        %v1852 = vlaneseq
        %v1853 = vshrl.u32 %v1852, 7
        %v1854 = vsub.s32 3, %v1853
        %v1855 = vrot.slane %v1838, %v1854
        %v2116 = vunpack.c.l.b16 %v1582
        %v2117 = vunpack.c.h.b16 %v1582
        %v2118 = vunpack.c.l.b16 %v1583
        %v2119 = vunpack.c.h.b16 %v1583
        %v2120 = vunpack.c.l.b16 %v1584
        %v2121 = vunpack.c.h.b16 %v1584
        %v2122 = vunpack.c.l.b16 %v1585
        %v2123 = vunpack.c.h.b16 %v1585
        %v2124 = vunpack.c.l.b16 %v1586
        %v2125 = vunpack.c.h.b16 %v1586
        %v2126 = vunpack.c.l.b16 %v1587
        %v2127 = vunpack.c.h.b16 %v1587
        %v2128 = vunpack.c.l.b16 %v1588
        %v2129 = vunpack.c.h.b16 %v1588
        %v2130 = vunpack.c.l.b16 %v1589
        %v2131 = vunpack.c.h.b16 %v1589
        %v2132 = vunpack.c.l.b16 %v1590
        %v2133 = vunpack.c.h.b16 %v1590
        %v2134 = vunpack.c.l.b16 %v1591
        %v2135 = vunpack.c.h.b16 %v1591
        %v2136 = vunpack.c.l.b16 %v1592
        %v2137 = vunpack.c.h.b16 %v1592
        %v2138 = vunpack.c.l.b16 %v1593
        %v2139 = vunpack.c.h.b16 %v1593
        %v2140 = vunpack.c.l.b16 %v1594
        %v2141 = vunpack.c.h.b16 %v1594
        %v2142 = vunpack.c.l.b16 %v1595
        %v2143 = vunpack.c.h.b16 %v1595
        %v2144 = vunpack.c.l.b16 %v1596
        %v2145 = vunpack.c.h.b16 %v1596
        %v2146 = vunpack.c.l.b16 %v1597
        %v2147 = vunpack.c.h.b16 %v1597
        %v2148 = vunpack.c.l.b16 %v1598
        %v2149 = vunpack.c.h.b16 %v1598
        %v2150 = vunpack.c.l.b16 %v1599
        %v2151 = vunpack.c.h.b16 %v1599
        %v2152 = vunpack.c.l.b16 %v1600
        %v2153 = vunpack.c.h.b16 %v1600
        %v2154 = vunpack.c.l.b16 %v1601
        %v2155 = vunpack.c.h.b16 %v1601
        %v2156 = vunpack.c.l.b16 %v1602
        %v2157 = vunpack.c.h.b16 %v1602
        %v2158 = vunpack.c.l.b16 %v1603
        %v2159 = vunpack.c.h.b16 %v1603
        %v2160 = vunpack.c.l.b16 %v1604
        %v2161 = vunpack.c.h.b16 %v1604
        %v2162 = vunpack.c.l.b16 %v1605
        %v2163 = vunpack.c.h.b16 %v1605
        %v2164 = vunpack.c.l.b16 %v1606
        %v2165 = vunpack.c.h.b16 %v1606
        %v2166 = vunpack.c.l.b16 %v1607
        %v2167 = vunpack.c.h.b16 %v1607
        %v2168 = vunpack.c.l.b16 %v1608
        %v2169 = vunpack.c.h.b16 %v1608
        %v2170 = vunpack.c.l.b16 %v1609
        %v2171 = vunpack.c.h.b16 %v1609
        %v2172 = vunpack.c.l.b16 %v1610
        %v2173 = vunpack.c.h.b16 %v1610
        %v2174 = vunpack.c.l.b16 %v1611
        %v2175 = vunpack.c.h.b16 %v1611
        %v2176 = vunpack.c.l.b16 %v1612
        %v2177 = vunpack.c.h.b16 %v1612
        %v2178 = vunpack.c.l.b16 %v1613
        %v2179 = vunpack.c.h.b16 %v1613
        %v2180 = vunpack.c.l.b16 %v1614
        %v2181 = vunpack.c.h.b16 %v1614
        %v2182 = vunpack.c.l.b16 %v1615
        %v2183 = vunpack.c.h.b16 %v1615
        %v2184 = vunpack.c.l.b16 %v1616
        %v2185 = vunpack.c.h.b16 %v1616
        %v2186 = vunpack.c.l.b16 %v1617
        %v2187 = vunpack.c.h.b16 %v1617
        %v2188 = vunpack.c.l.b16 %v1618
        %v2189 = vunpack.c.h.b16 %v1618
        %v2190 = vunpack.c.l.b16 %v1619
        %v2191 = vunpack.c.h.b16 %v1619
        %v2192 = vunpack.c.l.b16 %v1620
        %v2193 = vunpack.c.h.b16 %v1620
        %v2194 = vunpack.c.l.b16 %v1621
        %v2195 = vunpack.c.h.b16 %v1621
        %v2196 = vunpack.c.l.b16 %v1622
        %v2197 = vunpack.c.h.b16 %v1622
        %v2198 = vunpack.c.l.b16 %v1623
        %v2199 = vunpack.c.h.b16 %v1623
        %v2200 = vunpack.c.l.b16 %v1624
        %v2201 = vunpack.c.h.b16 %v1624
        %v2202 = vunpack.c.l.b16 %v1625
        %v2203 = vunpack.c.h.b16 %v1625
        %v2204 = vunpack.c.l.b16 %v1626
        %v2205 = vunpack.c.h.b16 %v1626
        %v2206 = vunpack.c.l.b16 %v1627
        %v2207 = vunpack.c.h.b16 %v1627
        %v2208 = vunpack.c.l.b16 %v1628
        %v2209 = vunpack.c.h.b16 %v1628
        %v2210 = vunpack.c.l.b16 %v1629
        %v2211 = vunpack.c.h.b16 %v1629
        %v2212 = vunpack.c.l.b16 %v1630
        %v2213 = vunpack.c.h.b16 %v1630
        %v2214 = vunpack.c.l.b16 %v1631
        %v2215 = vunpack.c.h.b16 %v1631
        %v2216 = vunpack.c.l.b16 %v1632
        %v2217 = vunpack.c.h.b16 %v1632
        %v2218 = vunpack.c.l.b16 %v1633
        %v2219 = vunpack.c.h.b16 %v1633
        %v2220 = vunpack.c.l.b16 %v1634
        %v2221 = vunpack.c.h.b16 %v1634
        %v2222 = vunpack.c.l.b16 %v1635
        %v2223 = vunpack.c.h.b16 %v1635
        %v2224 = vunpack.c.l.b16 %v1636
        %v2225 = vunpack.c.h.b16 %v1636
        %v2226 = vunpack.c.l.b16 %v1637
        %v2227 = vunpack.c.h.b16 %v1637
        %v2228 = vunpack.c.l.b16 %v1638
        %v2229 = vunpack.c.h.b16 %v1638
        %v2230 = vunpack.c.l.b16 %v1639
        %v2231 = vunpack.c.h.b16 %v1639
        %v2232 = vunpack.c.l.b16 %v1640
        %v2233 = vunpack.c.h.b16 %v1640
        %v2234 = vunpack.c.l.b16 %v1641
        %v2235 = vunpack.c.h.b16 %v1641
        %v2236 = vunpack.c.l.b16 %v1642
        %v2237 = vunpack.c.h.b16 %v1642
        %v2238 = vunpack.c.l.b16 %v1643
        %v2239 = vunpack.c.h.b16 %v1643
        %v2240 = vunpack.c.l.b16 %v1644
        %v2241 = vunpack.c.h.b16 %v1644
        %v2242 = vunpack.c.l.b16 %v1645
        %v2243 = vunpack.c.h.b16 %v1645
        %v2244 = vunpack.c.l.b16 %v1646
        %v2245 = vunpack.c.h.b16 %v1646
        %v2246 = vunpack.c.l.b16 %v1647
        %v2247 = vunpack.c.h.b16 %v1647
        %v2248 = vunpack.c.l.b16 %v1648
        %v2249 = vunpack.c.h.b16 %v1648
        %v2250 = vunpack.c.l.b16 %v1649
        %v2251 = vunpack.c.h.b16 %v1649
        %v2252 = vunpack.c.l.b16 %v1650
        %v2253 = vunpack.c.h.b16 %v1650
        %v2254 = vunpack.c.l.b16 %v1651
        %v2255 = vunpack.c.h.b16 %v1651
        %v2256 = vunpack.c.l.b16 %v1652
        %v2257 = vunpack.c.h.b16 %v1652
        %v2258 = vunpack.c.l.b16 %v1653
        %v2259 = vunpack.c.h.b16 %v1653
        %v2260 = vunpack.c.l.b16 %v1654
        %v2261 = vunpack.c.h.b16 %v1654
        %v2262 = vunpack.c.l.b16 %v1655
        %v2263 = vunpack.c.h.b16 %v1655
        %v2264 = vunpack.c.l.b16 %v1656
        %v2265 = vunpack.c.h.b16 %v1656
        %v2266 = vunpack.c.l.b16 %v1657
        %v2267 = vunpack.c.h.b16 %v1657
        %v2268 = vunpack.c.l.b16 %v1658
        %v2269 = vunpack.c.h.b16 %v1658
        %v2270 = vunpack.c.l.b16 %v1659
        %v2271 = vunpack.c.h.b16 %v1659
        %v2272 = vunpack.c.l.b16 %v1660
        %v2273 = vunpack.c.h.b16 %v1660
        %v2274 = vunpack.c.l.b16 %v1661
        %v2275 = vunpack.c.h.b16 %v1661
        %v2276 = vunpack.c.l.b16 %v1662
        %v2277 = vunpack.c.h.b16 %v1662
        %v2278 = vunpack.c.l.b16 %v1663
        %v2279 = vunpack.c.h.b16 %v1663
        %v2280 = vunpack.c.l.b16 %v1664
        %v2281 = vunpack.c.h.b16 %v1664
        %v2282 = vunpack.c.l.b16 %v1665
        %v2283 = vunpack.c.h.b16 %v1665
        %v2284 = vunpack.c.l.b16 %v1666
        %v2285 = vunpack.c.h.b16 %v1666
        %v2286 = vunpack.c.l.b16 %v1667
        %v2287 = vunpack.c.h.b16 %v1667
        %v2288 = vunpack.c.l.b16 %v1668
        %v2289 = vunpack.c.h.b16 %v1668
        %v2290 = vunpack.c.l.b16 %v1669
        %v2291 = vunpack.c.h.b16 %v1669
        %v2292 = vunpack.c.l.b16 %v1670
        %v2293 = vunpack.c.h.b16 %v1670
        %v2294 = vunpack.c.l.b16 %v1671
        %v2295 = vunpack.c.h.b16 %v1671
        %v2296 = vunpack.c.l.b16 %v1672
        %v2297 = vunpack.c.h.b16 %v1672
        %v2298 = vunpack.c.l.b16 %v1673
        %v2299 = vunpack.c.h.b16 %v1673
        %v2300 = vunpack.c.l.b16 %v1674
        %v2301 = vunpack.c.h.b16 %v1674
        %v2302 = vunpack.c.l.b16 %v1675
        %v2303 = vunpack.c.h.b16 %v1675
        %v2304 = vunpack.c.l.b16 %v1676
        %v2305 = vunpack.c.h.b16 %v1676
        %v2306 = vunpack.c.l.b16 %v1677
        %v2307 = vunpack.c.h.b16 %v1677
        %v2308 = vunpack.c.l.b16 %v1678
        %v2309 = vunpack.c.h.b16 %v1678
        %v2310 = vunpack.c.l.b16 %v1679
        %v2311 = vunpack.c.h.b16 %v1679
        %v2312 = vunpack.c.l.b16 %v1680
        %v2313 = vunpack.c.h.b16 %v1680
        %v2314 = vunpack.c.l.b16 %v1681
        %v2315 = vunpack.c.h.b16 %v1681
        %v2316 = vunpack.c.l.b16 %v1682
        %v2317 = vunpack.c.h.b16 %v1682
        %v2318 = vunpack.c.l.b16 %v1683
        %v2319 = vunpack.c.h.b16 %v1683
        %v2320 = vunpack.c.l.b16 %v1684
        %v2321 = vunpack.c.h.b16 %v1684
        %v2322 = vunpack.c.l.b16 %v1685
        %v2323 = vunpack.c.h.b16 %v1685
        %v2324 = vunpack.c.l.b16 %v1686
        %v2325 = vunpack.c.h.b16 %v1686
        %v2326 = vunpack.c.l.b16 %v1687
        %v2327 = vunpack.c.h.b16 %v1687
        %v2328 = vunpack.c.l.b16 %v1688
        %v2329 = vunpack.c.h.b16 %v1688
        %v2330 = vunpack.c.l.b16 %v1689
        %v2331 = vunpack.c.h.b16 %v1689
        %v2332 = vunpack.c.l.b16 %v1690
        %v2333 = vunpack.c.h.b16 %v1690
        %v2334 = vunpack.c.l.b16 %v1691
        %v2335 = vunpack.c.h.b16 %v1691
        %v2336 = vunpack.c.l.b16 %v1692
        %v2337 = vunpack.c.h.b16 %v1692
        %v2338 = vunpack.c.l.b16 %v1693
        %v2339 = vunpack.c.h.b16 %v1693
        %v2340 = vunpack.c.l.b16 %v1694
        %v2341 = vunpack.c.h.b16 %v1694
        %v2342 = vunpack.c.l.b16 %v1695
        %v2343 = vunpack.c.h.b16 %v1695
        %v2344 = vunpack.c.l.b16 %v1696
        %v2345 = vunpack.c.h.b16 %v1696
        %v2346 = vunpack.c.l.b16 %v1697
        %v2347 = vunpack.c.h.b16 %v1697
        %v2348 = vunpack.c.l.b16 %v1698
        %v2349 = vunpack.c.h.b16 %v1698
        %v2350 = vunpack.c.l.b16 %v1699
        %v2351 = vunpack.c.h.b16 %v1699
        %v2352 = vunpack.c.l.b16 %v1700
        %v2353 = vunpack.c.h.b16 %v1700
        %v2354 = vunpack.c.l.b16 %v1701
        %v2355 = vunpack.c.h.b16 %v1701
        %v2356 = vunpack.c.l.b16 %v1702
        %v2357 = vunpack.c.h.b16 %v1702
        %v2358 = vunpack.c.l.b16 %v1703
        %v2359 = vunpack.c.h.b16 %v1703
        %v2360 = vunpack.c.l.b16 %v1704
        %v2361 = vunpack.c.h.b16 %v1704
        %v2362 = vunpack.c.l.b16 %v1705
        %v2363 = vunpack.c.h.b16 %v1705
        %v2364 = vunpack.c.l.b16 %v1706
        %v2365 = vunpack.c.h.b16 %v1706
        %v2366 = vunpack.c.l.b16 %v1707
        %v2367 = vunpack.c.h.b16 %v1707
        %v2368 = vunpack.c.l.b16 %v1708
        %v2369 = vunpack.c.h.b16 %v1708
        %v2370 = vunpack.c.l.b16 %v1709
        %v2371 = vunpack.c.h.b16 %v1709
        %v2372 = vunpack.c.l.b16 %v1710
        %v2373 = vunpack.c.h.b16 %v1710
        %v2374 = vunpack.c.l.b16 %v1711
        %v2375 = vunpack.c.h.b16 %v1711
        %v2376 = vunpack.c.l.b16 %v1712
        %v2377 = vunpack.c.h.b16 %v1712
        %v2378 = vunpack.c.l.b16 %v1713
        %v2379 = vunpack.c.h.b16 %v1713
        %v2380 = vunpack.c.l.b16 %v1714
        %v2381 = vunpack.c.h.b16 %v1714
        %v2382 = vunpack.c.l.b16 %v1715
        %v2383 = vunpack.c.h.b16 %v1715
        %v2384 = vunpack.c.l.b16 %v1716
        %v2385 = vunpack.c.h.b16 %v1716
        %v2386 = vunpack.c.l.b16 %v1717
        %v2387 = vunpack.c.h.b16 %v1717
        %v2388 = vunpack.c.l.b16 %v1718
        %v2389 = vunpack.c.h.b16 %v1718
        %v2390 = vunpack.c.l.b16 %v1719
        %v2391 = vunpack.c.h.b16 %v1719
        %v2392 = vunpack.c.l.b16 %v1720
        %v2393 = vunpack.c.h.b16 %v1720
        %v2394 = vunpack.c.l.b16 %v1721
        %v2395 = vunpack.c.h.b16 %v1721
        %v2396 = vunpack.c.l.b16 %v1722
        %v2397 = vunpack.c.h.b16 %v1722
        %v2398 = vunpack.c.l.b16 %v1723
        %v2399 = vunpack.c.h.b16 %v1723
        %v2400 = vunpack.c.l.b16 %v1724
        %v2401 = vunpack.c.h.b16 %v1724
        %v2402 = vunpack.c.l.b16 %v1725
        %v2403 = vunpack.c.h.b16 %v1725
        %v2404 = vunpack.c.l.b16 %v1726
        %v2405 = vunpack.c.h.b16 %v1726
        %v2406 = vunpack.c.l.b16 %v1727
        %v2407 = vunpack.c.h.b16 %v1727
        %v2408 = vunpack.c.l.b16 %v1728
        %v2409 = vunpack.c.h.b16 %v1728
        %v2410 = vunpack.c.l.b16 %v1729
        %v2411 = vunpack.c.h.b16 %v1729
        %v2412 = vunpack.c.l.b16 %v1730
        %v2413 = vunpack.c.h.b16 %v1730
        %v2414 = vunpack.c.l.b16 %v1731
        %v2415 = vunpack.c.h.b16 %v1731
        %v2416 = vunpack.c.l.b16 %v1732
        %v2417 = vunpack.c.h.b16 %v1732
        %v2418 = vunpack.c.l.b16 %v1733
        %v2419 = vunpack.c.h.b16 %v1733
        %v2420 = vunpack.c.l.b16 %v1734
        %v2421 = vunpack.c.h.b16 %v1734
        %v2422 = vunpack.c.l.b16 %v1735
        %v2423 = vunpack.c.h.b16 %v1735
        %v2424 = vunpack.c.l.b16 %v1736
        %v2425 = vunpack.c.h.b16 %v1736
        %v2426 = vunpack.c.l.b16 %v1737
        %v2427 = vunpack.c.h.b16 %v1737
        %v2428 = vunpack.c.l.b16 %v1738
        %v2429 = vunpack.c.h.b16 %v1738
        %v2430 = vunpack.c.l.b16 %v1739
        %v2431 = vunpack.c.h.b16 %v1739
        %v2432 = vunpack.c.l.b16 %v1740
        %v2433 = vunpack.c.h.b16 %v1740
        %v2434 = vunpack.c.l.b16 %v1741
        %v2435 = vunpack.c.h.b16 %v1741
        %v2436 = vunpack.c.l.b16 %v1742
        %v2437 = vunpack.c.h.b16 %v1742
        %v2438 = vunpack.c.l.b16 %v1743
        %v2439 = vunpack.c.h.b16 %v1743
        %v2440 = vunpack.c.l.b16 %v1744
        %v2441 = vunpack.c.h.b16 %v1744
        %v2442 = vunpack.c.l.b16 %v1745
        %v2443 = vunpack.c.h.b16 %v1745
        %v2444 = vunpack.c.l.b16 %v1746
        %v2445 = vunpack.c.h.b16 %v1746
        %v2446 = vunpack.c.l.b16 %v1747
        %v2447 = vunpack.c.h.b16 %v1747
        %v2448 = vunpack.c.l.b16 %v1748
        %v2449 = vunpack.c.h.b16 %v1748
        %v2450 = vunpack.c.l.b16 %v1749
        %v2451 = vunpack.c.h.b16 %v1749
        %v2452 = vunpack.c.l.b16 %v1750
        %v2453 = vunpack.c.h.b16 %v1750
        %v2454 = vunpack.c.l.b16 %v1751
        %v2455 = vunpack.c.h.b16 %v1751
        %v2456 = vunpack.c.l.b16 %v1752
        %v2457 = vunpack.c.h.b16 %v1752
        %v2458 = vunpack.c.l.b16 %v1753
        %v2459 = vunpack.c.h.b16 %v1753
        %v2460 = vunpack.c.l.b16 %v1754
        %v2461 = vunpack.c.h.b16 %v1754
        %v2462 = vunpack.c.l.b16 %v1755
        %v2463 = vunpack.c.h.b16 %v1755
        %v2464 = vunpack.c.l.b16 %v1756
        %v2465 = vunpack.c.h.b16 %v1756
        %v2466 = vunpack.c.l.b16 %v1757
        %v2467 = vunpack.c.h.b16 %v1757
        %v2468 = vunpack.c.l.b16 %v1758
        %v2469 = vunpack.c.h.b16 %v1758
        %v2470 = vunpack.c.l.b16 %v1759
        %v2471 = vunpack.c.h.b16 %v1759
        %v2472 = vunpack.c.l.b16 %v1760
        %v2473 = vunpack.c.h.b16 %v1760
        %v2474 = vunpack.c.l.b16 %v1761
        %v2475 = vunpack.c.h.b16 %v1761
        %v2476 = vunpack.c.l.b16 %v1762
        %v2477 = vunpack.c.h.b16 %v1762
        %v2478 = vunpack.c.l.b16 %v1763
        %v2479 = vunpack.c.h.b16 %v1763
        %v2480 = vunpack.c.l.b16 %v1764
        %v2481 = vunpack.c.h.b16 %v1764
        %v2482 = vunpack.c.l.b16 %v1765
        %v2483 = vunpack.c.h.b16 %v1765
        %v2484 = vunpack.c.l.b16 %v1766
        %v2485 = vunpack.c.h.b16 %v1766
        %v2486 = vunpack.c.l.b16 %v1767
        %v2487 = vunpack.c.h.b16 %v1767
        %v2488 = vunpack.c.l.b16 %v1768
        %v2489 = vunpack.c.h.b16 %v1768
        %v2490 = vunpack.c.l.b16 %v1769
        %v2491 = vunpack.c.h.b16 %v1769
        %v2492 = vunpack.c.l.b16 %v1770
        %v2493 = vunpack.c.h.b16 %v1770
        %v2494 = vunpack.c.l.b16 %v1771
        %v2495 = vunpack.c.h.b16 %v1771
        %v2496 = vunpack.c.l.b16 %v1772
        %v2497 = vunpack.c.h.b16 %v1772
        %v2498 = vunpack.c.l.b16 %v1773
        %v2499 = vunpack.c.h.b16 %v1773
        %v2500 = vunpack.c.l.b16 %v1774
        %v2501 = vunpack.c.h.b16 %v1774
        %v2502 = vunpack.c.l.b16 %v1775
        %v2503 = vunpack.c.h.b16 %v1775
        %v2504 = vunpack.c.l.b16 %v1776
        %v2505 = vunpack.c.h.b16 %v1776
        %v2506 = vunpack.c.l.b16 %v1777
        %v2507 = vunpack.c.h.b16 %v1777
        %v2508 = vunpack.c.l.b16 %v1778
        %v2509 = vunpack.c.h.b16 %v1778
        %v2510 = vunpack.c.l.b16 %v1779
        %v2511 = vunpack.c.h.b16 %v1779
        %v2512 = vunpack.c.l.b16 %v1780
        %v2513 = vunpack.c.h.b16 %v1780
        %v2514 = vunpack.c.l.b16 %v1781
        %v2515 = vunpack.c.h.b16 %v1781
        %v2516 = vunpack.c.l.b16 %v1782
        %v2517 = vunpack.c.h.b16 %v1782
        %v2518 = vunpack.c.l.b16 %v1783
        %v2519 = vunpack.c.h.b16 %v1783
        %v2520 = vunpack.c.l.b16 %v1784
        %v2521 = vunpack.c.h.b16 %v1784
        %v2522 = vunpack.c.l.b16 %v1785
        %v2523 = vunpack.c.h.b16 %v1785
        %v2524 = vunpack.c.l.b16 %v1786
        %v2525 = vunpack.c.h.b16 %v1786
        %v2526 = vunpack.c.l.b16 %v1787
        %v2527 = vunpack.c.h.b16 %v1787
        %v2528 = vunpack.c.l.b16 %v1788
        %v2529 = vunpack.c.h.b16 %v1788
        %v2530 = vunpack.c.l.b16 %v1789
        %v2531 = vunpack.c.h.b16 %v1789
        %v2532 = vunpack.c.l.b16 %v1790
        %v2533 = vunpack.c.h.b16 %v1790
        %v2534 = vunpack.c.l.b16 %v1791
        %v2535 = vunpack.c.h.b16 %v1791
        %v2536 = vunpack.c.l.b16 %v1792
        %v2537 = vunpack.c.h.b16 %v1792
        %v2538 = vunpack.c.l.b16 %v1793
        %v2539 = vunpack.c.h.b16 %v1793
        %v2540 = vunpack.c.l.b16 %v1794
        %v2541 = vunpack.c.h.b16 %v1794
        %v2542 = vunpack.c.l.b16 %v1795
        %v2543 = vunpack.c.h.b16 %v1795
        %v2544 = vunpack.c.l.b16 %v1796
        %v2545 = vunpack.c.h.b16 %v1796
        %v2546 = vunpack.c.l.b16 %v1797
        %v2547 = vunpack.c.h.b16 %v1797
        %v2548 = vunpack.c.l.b16 %v1798
        %v2549 = vunpack.c.h.b16 %v1798
        %v2550 = vunpack.c.l.b16 %v1799
        %v2551 = vunpack.c.h.b16 %v1799
        %v2552 = vunpack.c.l.b16 %v1800
        %v2553 = vunpack.c.h.b16 %v1800
        %v2554 = vunpack.c.l.b16 %v1801
        %v2555 = vunpack.c.h.b16 %v1801
        %v2556 = vunpack.c.l.b16 %v1802
        %v2557 = vunpack.c.h.b16 %v1802
        %v2558 = vunpack.c.l.b16 %v1803
        %v2559 = vunpack.c.h.b16 %v1803
        %v2560 = vunpack.c.l.b16 %v1804
        %v2561 = vunpack.c.h.b16 %v1804
        %v2562 = vunpack.c.l.b16 %v1805
        %v2563 = vunpack.c.h.b16 %v1805
        %v2564 = vunpack.c.l.b16 %v1806
        %v2565 = vunpack.c.h.b16 %v1806
        %v2566 = vunpack.c.l.b16 %v1807
        %v2567 = vunpack.c.h.b16 %v1807
        %v2568 = vunpack.c.l.b16 %v1808
        %v2569 = vunpack.c.h.b16 %v1808
        %v2570 = vunpack.c.l.b16 %v1809
        %v2571 = vunpack.c.h.b16 %v1809
        %v2572 = vunpack.c.l.b16 %v1810
        %v2573 = vunpack.c.h.b16 %v1810
        %v2574 = vunpack.c.l.b16 %v1811
        %v2575 = vunpack.c.h.b16 %v1811
        %v2576 = vunpack.c.l.b16 %v1812
        %v2577 = vunpack.c.h.b16 %v1812
        %v2578 = vunpack.c.l.b16 %v1813
        %v2579 = vunpack.c.h.b16 %v1813
        %v2580 = vunpack.c.l.b16 %v1814
        %v2581 = vunpack.c.h.b16 %v1814
        %v2582 = vunpack.c.l.b16 %v1815
        %v2583 = vunpack.c.h.b16 %v1815
        %v2584 = vunpack.c.l.b16 %v1816
        %v2585 = vunpack.c.h.b16 %v1816
        %v2586 = vunpack.c.l.b16 %v1817
        %v2587 = vunpack.c.h.b16 %v1817
        %v2588 = vunpack.c.l.b16 %v1818
        %v2589 = vunpack.c.h.b16 %v1818
        %v2590 = vunpack.c.l.b16 %v1819
        %v2591 = vunpack.c.h.b16 %v1819
        %v2592 = vunpack.c.l.b16 %v1820
        %v2593 = vunpack.c.h.b16 %v1820
        %v2594 = vunpack.c.l.b16 %v1821
        %v2595 = vunpack.c.h.b16 %v1821
        %v2596 = vunpack.c.l.b16 %v1822
        %v2597 = vunpack.c.h.b16 %v1822
        %v2598 = vunpack.c.l.b16 %v1823
        %v2599 = vunpack.c.h.b16 %v1823
        %v2600 = vunpack.c.l.b16 %v1824
        %v2601 = vunpack.c.h.b16 %v1824
        %v2602 = vunpack.c.l.b16 %v1825
        %v2603 = vunpack.c.h.b16 %v1825
        %v2604 = vunpack.c.l.b16 %v1826
        %v2605 = vunpack.c.h.b16 %v1826
        %v2606 = vunpack.c.l.b16 %v1827
        %v2607 = vunpack.c.h.b16 %v1827
        %v2608 = vunpack.c.l.b16 %v1828
        %v2609 = vunpack.c.h.b16 %v1828
        %v2610 = vunpack.c.l.b16 %v1829
        %v2611 = vunpack.c.h.b16 %v1829
        %v2612 = vunpack.c.l.b16 %v1830
        %v2613 = vunpack.c.h.b16 %v1830
        %v2614 = vunpack.c.l.b16 %v1831
        %v2615 = vunpack.c.h.b16 %v1831
        %v2616 = vunpack.c.l.b16 %v1832
        %v2617 = vunpack.c.h.b16 %v1832
        %v2618 = vunpack.c.l.b16 %v1833
        %v2619 = vunpack.c.h.b16 %v1833
        %v2620 = vunpack.c.l.b16 %v1834
        %v2621 = vunpack.c.h.b16 %v1834
        %v2622 = vunpack.c.l.b16 %v1835
        %v2623 = vunpack.c.h.b16 %v1835
        %v2624 = vunpack.c.l.b16 %v1836
        %v2625 = vunpack.c.h.b16 %v1836
        %v2626 = vunpack.c.l.b16 %v1837
        %v2627 = vunpack.c.h.b16 %v1837
        %v2628 = vpack.c.b16 %v2120, %v2116
        %v2629 = vpack.c.b16 %v2121, %v2117
        %v2630 = vpack.c.b16 %v2122, %v2118
        %v2631 = vpack.c.b16 %v2123, %v2119
        %v2632 = vpack.c.b16 %v2128, %v2124
        %v2633 = vpack.c.b16 %v2129, %v2125
        %v2634 = vpack.c.b16 %v2130, %v2126
        %v2635 = vpack.c.b16 %v2131, %v2127
        %v2636 = vpack.c.b16 %v2136, %v2132
        %v2637 = vpack.c.b16 %v2137, %v2133
        %v2638 = vpack.c.b16 %v2138, %v2134
        %v2639 = vpack.c.b16 %v2139, %v2135
        %v2640 = vpack.c.b16 %v2144, %v2140
        %v2641 = vpack.c.b16 %v2145, %v2141
        %v2642 = vpack.c.b16 %v2146, %v2142
        %v2643 = vpack.c.b16 %v2147, %v2143
        %v2644 = vpack.c.b16 %v2152, %v2148
        %v2645 = vpack.c.b16 %v2153, %v2149
        %v2646 = vpack.c.b16 %v2154, %v2150
        %v2647 = vpack.c.b16 %v2155, %v2151
        %v2648 = vpack.c.b16 %v2160, %v2156
        %v2649 = vpack.c.b16 %v2161, %v2157
        %v2650 = vpack.c.b16 %v2162, %v2158
        %v2651 = vpack.c.b16 %v2163, %v2159
        %v2652 = vpack.c.b16 %v2168, %v2164
        %v2653 = vpack.c.b16 %v2169, %v2165
        %v2654 = vpack.c.b16 %v2170, %v2166
        %v2655 = vpack.c.b16 %v2171, %v2167
        %v2656 = vpack.c.b16 %v2176, %v2172
        %v2657 = vpack.c.b16 %v2177, %v2173
        %v2658 = vpack.c.b16 %v2178, %v2174
        %v2659 = vpack.c.b16 %v2179, %v2175
        %v2660 = vpack.c.b16 %v2184, %v2180
        %v2661 = vpack.c.b16 %v2185, %v2181
        %v2662 = vpack.c.b16 %v2186, %v2182
        %v2663 = vpack.c.b16 %v2187, %v2183
        %v2664 = vpack.c.b16 %v2192, %v2188
        %v2665 = vpack.c.b16 %v2193, %v2189
        %v2666 = vpack.c.b16 %v2194, %v2190
        %v2667 = vpack.c.b16 %v2195, %v2191
        %v2668 = vpack.c.b16 %v2200, %v2196
        %v2669 = vpack.c.b16 %v2201, %v2197
        %v2670 = vpack.c.b16 %v2202, %v2198
        %v2671 = vpack.c.b16 %v2203, %v2199
        %v2672 = vpack.c.b16 %v2208, %v2204
        %v2673 = vpack.c.b16 %v2209, %v2205
        %v2674 = vpack.c.b16 %v2210, %v2206
        %v2675 = vpack.c.b16 %v2211, %v2207
        %v2676 = vpack.c.b16 %v2216, %v2212
        %v2677 = vpack.c.b16 %v2217, %v2213
        %v2678 = vpack.c.b16 %v2218, %v2214
        %v2679 = vpack.c.b16 %v2219, %v2215
        %v2680 = vpack.c.b16 %v2224, %v2220
        %v2681 = vpack.c.b16 %v2225, %v2221
        %v2682 = vpack.c.b16 %v2226, %v2222
        %v2683 = vpack.c.b16 %v2227, %v2223
        %v2684 = vpack.c.b16 %v2232, %v2228
        %v2685 = vpack.c.b16 %v2233, %v2229
        %v2686 = vpack.c.b16 %v2234, %v2230
        %v2687 = vpack.c.b16 %v2235, %v2231
        %v2688 = vpack.c.b16 %v2240, %v2236
        %v2689 = vpack.c.b16 %v2241, %v2237
        %v2690 = vpack.c.b16 %v2242, %v2238
        %v2691 = vpack.c.b16 %v2243, %v2239
        %v2692 = vpack.c.b16 %v2248, %v2244
        %v2693 = vpack.c.b16 %v2249, %v2245
        %v2694 = vpack.c.b16 %v2250, %v2246
        %v2695 = vpack.c.b16 %v2251, %v2247
        %v2696 = vpack.c.b16 %v2256, %v2252
        %v2697 = vpack.c.b16 %v2257, %v2253
        %v2698 = vpack.c.b16 %v2258, %v2254
        %v2699 = vpack.c.b16 %v2259, %v2255
        %v2700 = vpack.c.b16 %v2264, %v2260
        %v2701 = vpack.c.b16 %v2265, %v2261
        %v2702 = vpack.c.b16 %v2266, %v2262
        %v2703 = vpack.c.b16 %v2267, %v2263
        %v2704 = vpack.c.b16 %v2272, %v2268
        %v2705 = vpack.c.b16 %v2273, %v2269
        %v2706 = vpack.c.b16 %v2274, %v2270
        %v2707 = vpack.c.b16 %v2275, %v2271
        %v2708 = vpack.c.b16 %v2280, %v2276
        %v2709 = vpack.c.b16 %v2281, %v2277
        %v2710 = vpack.c.b16 %v2282, %v2278
        %v2711 = vpack.c.b16 %v2283, %v2279
        %v2712 = vpack.c.b16 %v2288, %v2284
        %v2713 = vpack.c.b16 %v2289, %v2285
        %v2714 = vpack.c.b16 %v2290, %v2286
        %v2715 = vpack.c.b16 %v2291, %v2287
        %v2716 = vpack.c.b16 %v2296, %v2292
        %v2717 = vpack.c.b16 %v2297, %v2293
        %v2718 = vpack.c.b16 %v2298, %v2294
        %v2719 = vpack.c.b16 %v2299, %v2295
        %v2720 = vpack.c.b16 %v2304, %v2300
        %v2721 = vpack.c.b16 %v2305, %v2301
        %v2722 = vpack.c.b16 %v2306, %v2302
        %v2723 = vpack.c.b16 %v2307, %v2303
        %v2724 = vpack.c.b16 %v2312, %v2308
        %v2725 = vpack.c.b16 %v2313, %v2309
        %v2726 = vpack.c.b16 %v2314, %v2310
        %v2727 = vpack.c.b16 %v2315, %v2311
        %v2728 = vpack.c.b16 %v2320, %v2316
        %v2729 = vpack.c.b16 %v2321, %v2317
        %v2730 = vpack.c.b16 %v2322, %v2318
        %v2731 = vpack.c.b16 %v2323, %v2319
        %v2732 = vpack.c.b16 %v2328, %v2324
        %v2733 = vpack.c.b16 %v2329, %v2325
        %v2734 = vpack.c.b16 %v2330, %v2326
        %v2735 = vpack.c.b16 %v2331, %v2327
        %v2736 = vpack.c.b16 %v2336, %v2332
        %v2737 = vpack.c.b16 %v2337, %v2333
        %v2738 = vpack.c.b16 %v2338, %v2334
        %v2739 = vpack.c.b16 %v2339, %v2335
        %v2740 = vpack.c.b16 %v2344, %v2340
        %v2741 = vpack.c.b16 %v2345, %v2341
        %v2742 = vpack.c.b16 %v2346, %v2342
        %v2743 = vpack.c.b16 %v2347, %v2343
        %v2744 = vpack.c.b16 %v2352, %v2348
        %v2745 = vpack.c.b16 %v2353, %v2349
        %v2746 = vpack.c.b16 %v2354, %v2350
        %v2747 = vpack.c.b16 %v2355, %v2351
        %v2748 = vpack.c.b16 %v2360, %v2356
        %v2749 = vpack.c.b16 %v2361, %v2357
        %v2750 = vpack.c.b16 %v2362, %v2358
        %v2751 = vpack.c.b16 %v2363, %v2359
        %v2752 = vpack.c.b16 %v2368, %v2364
        %v2753 = vpack.c.b16 %v2369, %v2365
        %v2754 = vpack.c.b16 %v2370, %v2366
        %v2755 = vpack.c.b16 %v2371, %v2367
        %v2756 = vpack.c.b16 %v2376, %v2372
        %v2757 = vpack.c.b16 %v2377, %v2373
        %v2758 = vpack.c.b16 %v2378, %v2374
        %v2759 = vpack.c.b16 %v2379, %v2375
        %v2760 = vpack.c.b16 %v2384, %v2380
        %v2761 = vpack.c.b16 %v2385, %v2381
        %v2762 = vpack.c.b16 %v2386, %v2382
        %v2763 = vpack.c.b16 %v2387, %v2383
        %v2764 = vpack.c.b16 %v2392, %v2388
        %v2765 = vpack.c.b16 %v2393, %v2389
        %v2766 = vpack.c.b16 %v2394, %v2390
        %v2767 = vpack.c.b16 %v2395, %v2391
        %v2768 = vpack.c.b16 %v2400, %v2396
        %v2769 = vpack.c.b16 %v2401, %v2397
        %v2770 = vpack.c.b16 %v2402, %v2398
        %v2771 = vpack.c.b16 %v2403, %v2399
        %v2772 = vpack.c.b16 %v2408, %v2404
        %v2773 = vpack.c.b16 %v2409, %v2405
        %v2774 = vpack.c.b16 %v2410, %v2406
        %v2775 = vpack.c.b16 %v2411, %v2407
        %v2776 = vpack.c.b16 %v2416, %v2412
        %v2777 = vpack.c.b16 %v2417, %v2413
        %v2778 = vpack.c.b16 %v2418, %v2414
        %v2779 = vpack.c.b16 %v2419, %v2415
        %v2780 = vpack.c.b16 %v2424, %v2420
        %v2781 = vpack.c.b16 %v2425, %v2421
        %v2782 = vpack.c.b16 %v2426, %v2422
        %v2783 = vpack.c.b16 %v2427, %v2423
        %v2784 = vpack.c.b16 %v2432, %v2428
        %v2785 = vpack.c.b16 %v2433, %v2429
        %v2786 = vpack.c.b16 %v2434, %v2430
        %v2787 = vpack.c.b16 %v2435, %v2431
        %v2788 = vpack.c.b16 %v2440, %v2436
        %v2789 = vpack.c.b16 %v2441, %v2437
        %v2790 = vpack.c.b16 %v2442, %v2438
        %v2791 = vpack.c.b16 %v2443, %v2439
        %v2792 = vpack.c.b16 %v2448, %v2444
        %v2793 = vpack.c.b16 %v2449, %v2445
        %v2794 = vpack.c.b16 %v2450, %v2446
        %v2795 = vpack.c.b16 %v2451, %v2447
        %v2796 = vpack.c.b16 %v2456, %v2452
        %v2797 = vpack.c.b16 %v2457, %v2453
        %v2798 = vpack.c.b16 %v2458, %v2454
        %v2799 = vpack.c.b16 %v2459, %v2455
        %v2800 = vpack.c.b16 %v2464, %v2460
        %v2801 = vpack.c.b16 %v2465, %v2461
        %v2802 = vpack.c.b16 %v2466, %v2462
        %v2803 = vpack.c.b16 %v2467, %v2463
        %v2804 = vpack.c.b16 %v2472, %v2468
        %v2805 = vpack.c.b16 %v2473, %v2469
        %v2806 = vpack.c.b16 %v2474, %v2470
        %v2807 = vpack.c.b16 %v2475, %v2471
        %v2808 = vpack.c.b16 %v2480, %v2476
        %v2809 = vpack.c.b16 %v2481, %v2477
        %v2810 = vpack.c.b16 %v2482, %v2478
        %v2811 = vpack.c.b16 %v2483, %v2479
        %v2812 = vpack.c.b16 %v2488, %v2484
        %v2813 = vpack.c.b16 %v2489, %v2485
        %v2814 = vpack.c.b16 %v2490, %v2486
        %v2815 = vpack.c.b16 %v2491, %v2487
        %v2816 = vpack.c.b16 %v2496, %v2492
        %v2817 = vpack.c.b16 %v2497, %v2493
        %v2818 = vpack.c.b16 %v2498, %v2494
        %v2819 = vpack.c.b16 %v2499, %v2495
        %v2820 = vpack.c.b16 %v2504, %v2500
        %v2821 = vpack.c.b16 %v2505, %v2501
        %v2822 = vpack.c.b16 %v2506, %v2502
        %v2823 = vpack.c.b16 %v2507, %v2503
        %v2824 = vpack.c.b16 %v2512, %v2508
        %v2825 = vpack.c.b16 %v2513, %v2509
        %v2826 = vpack.c.b16 %v2514, %v2510
        %v2827 = vpack.c.b16 %v2515, %v2511
        %v2828 = vpack.c.b16 %v2520, %v2516
        %v2829 = vpack.c.b16 %v2521, %v2517
        %v2830 = vpack.c.b16 %v2522, %v2518
        %v2831 = vpack.c.b16 %v2523, %v2519
        %v2832 = vpack.c.b16 %v2528, %v2524
        %v2833 = vpack.c.b16 %v2529, %v2525
        %v2834 = vpack.c.b16 %v2530, %v2526
        %v2835 = vpack.c.b16 %v2531, %v2527
        %v2836 = vpack.c.b16 %v2536, %v2532
        %v2837 = vpack.c.b16 %v2537, %v2533
        %v2838 = vpack.c.b16 %v2538, %v2534
        %v2839 = vpack.c.b16 %v2539, %v2535
        %v2840 = vpack.c.b16 %v2544, %v2540
        %v2841 = vpack.c.b16 %v2545, %v2541
        %v2842 = vpack.c.b16 %v2546, %v2542
        %v2843 = vpack.c.b16 %v2547, %v2543
        %v2844 = vpack.c.b16 %v2552, %v2548
        %v2845 = vpack.c.b16 %v2553, %v2549
        %v2846 = vpack.c.b16 %v2554, %v2550
        %v2847 = vpack.c.b16 %v2555, %v2551
        %v2848 = vpack.c.b16 %v2560, %v2556
        %v2849 = vpack.c.b16 %v2561, %v2557
        %v2850 = vpack.c.b16 %v2562, %v2558
        %v2851 = vpack.c.b16 %v2563, %v2559
        %v2852 = vpack.c.b16 %v2568, %v2564
        %v2853 = vpack.c.b16 %v2569, %v2565
        %v2854 = vpack.c.b16 %v2570, %v2566
        %v2855 = vpack.c.b16 %v2571, %v2567
        %v2856 = vpack.c.b16 %v2576, %v2572
        %v2857 = vpack.c.b16 %v2577, %v2573
        %v2858 = vpack.c.b16 %v2578, %v2574
        %v2859 = vpack.c.b16 %v2579, %v2575
        %v2860 = vpack.c.b16 %v2584, %v2580
        %v2861 = vpack.c.b16 %v2585, %v2581
        %v2862 = vpack.c.b16 %v2586, %v2582
        %v2863 = vpack.c.b16 %v2587, %v2583
        %v2864 = vpack.c.b16 %v2592, %v2588
        %v2865 = vpack.c.b16 %v2593, %v2589
        %v2866 = vpack.c.b16 %v2594, %v2590
        %v2867 = vpack.c.b16 %v2595, %v2591
        %v2868 = vpack.c.b16 %v2600, %v2596
        %v2869 = vpack.c.b16 %v2601, %v2597
        %v2870 = vpack.c.b16 %v2602, %v2598
        %v2871 = vpack.c.b16 %v2603, %v2599
        %v2872 = vpack.c.b16 %v2608, %v2604
        %v2873 = vpack.c.b16 %v2609, %v2605
        %v2874 = vpack.c.b16 %v2610, %v2606
        %v2875 = vpack.c.b16 %v2611, %v2607
        %v2876 = vpack.c.b16 %v2616, %v2612
        %v2877 = vpack.c.b16 %v2617, %v2613
        %v2878 = vpack.c.b16 %v2618, %v2614
        %v2879 = vpack.c.b16 %v2619, %v2615
        %v2880 = vpack.c.b16 %v2624, %v2620
        %v2881 = vpack.c.b16 %v2625, %v2621
        %v2882 = vpack.c.b16 %v2626, %v2622
        %v2883 = vpack.c.b16 %v2627, %v2623
        %3140 = vmatprep.subr.bf16.mxu0 %v2657
        %3141 = vmatpush1.bf16.msra.mxu0 %v2656
        %3142 = vmatprep.subr.bf16.mxu0 %v2653
        %3143 = vmatpush1.bf16.msra.mxu0 %v2652
        %3144 = vmatprep.subr.bf16.mxu0 %v2649
        %3145 = vmatpush1.bf16.msra.mxu0 %v2648
        %3146 = vmatprep.subr.bf16.mxu0 %v2645
        %3147 = vmatpush1.bf16.msra.mxu0 %v2644
        %3148 = vmatprep.subr.bf16.mxu0 %v2641
        %3149 = vmatpush1.bf16.msra.mxu0 %v2640
        %3150 = vmatprep.subr.bf16.mxu0 %v2637
        %3151 = vmatpush1.bf16.msra.mxu0 %v2636
        %3152 = vmatprep.subr.bf16.mxu0 %v2633
        %3153 = vmatpush1.bf16.msra.mxu0 %v2632
        %3154 = vmatprep.subr.bf16.mxu0 %v2629
        %3155 = vmatpush1.bf16.msra.mxu0 %v2628
        %3156 = vmatprep.subr.bf16.mxu0 %v2689
        %3157 = vmatpush2.bf16.msra.mxu0 %v2688
        %3158 = vmatprep.subr.bf16.mxu0 %v2685
        %3159 = vmatpush2.bf16.msra.mxu0 %v2684
        %3160 = vmatprep.subr.bf16.mxu0 %v2681
        %3161 = vmatpush2.bf16.msra.mxu0 %v2680
        %3162 = vmatprep.subr.bf16.mxu0 %v2677
        %3163 = vmatpush2.bf16.msra.mxu0 %v2676
        %3164 = vmatprep.subr.bf16.mxu0 %v2673
        %3165 = vmatpush2.bf16.msra.mxu0 %v2672
        %3166 = vmatprep.subr.bf16.mxu0 %v2669
        %3167 = vmatpush2.bf16.msra.mxu0 %v2668
        %3168 = vmatprep.subr.bf16.mxu0 %v2665
        %3169 = vmatpush2.bf16.msra.mxu0 %v2664
        %3170 = vmatprep.subr.bf16.mxu0 %v2661
        %3171 = vmatpush2.bf16.msra.mxu0 %v2660
        %3172 = vmatprep.mubr.bf16.mxu0 %v1519
        %3173 = vmatmul.mubr.bf16.gmra.mxu0 %v1518
        %v3174 = vpop.f32.mrf.mxu0
        %v3175 = vadd.f32 %v1843, %v3174
        %v3176 = vpop.f32.mrf.mxu0
        %v3177 = vadd.f32 %v1847, %v3176
        %v3178 = vpop.f32.mrf.mxu0
        %v3179 = vadd.f32 %v1843, %v3178
        %v3180 = vpop.f32.mrf.mxu0
        %v3181 = vadd.f32 %v1847, %v3180
        %3182 = vmatprep.mubr.bf16.mxu0 %v1527
        %3183 = vmatmul.mubr.bf16.gmra.mxu0 %v1526
        %v3184 = vpop.f32.mrf.mxu0
        %v3185 = vadd.f32 %v1843, %v3184
        %v3186 = vpop.f32.mrf.mxu0
        %v3187 = vadd.f32 %v1847, %v3186
        %v3188 = vpop.f32.mrf.mxu0
        %v3189 = vadd.f32 %v1843, %v3188
        %v3190 = vpop.f32.mrf.mxu0
        %v3191 = vadd.f32 %v1847, %v3190
        %3192 = vmatprep.mubr.bf16.mxu0 %v1535
        %3193 = vmatmul.mubr.bf16.gmra.mxu0 %v1534
        %v3194 = vpop.f32.mrf.mxu0
        %v3195 = vadd.f32 %v1843, %v3194
        %v3196 = vpop.f32.mrf.mxu0
        %v3197 = vadd.f32 %v1847, %v3196
        %v3198 = vpop.f32.mrf.mxu0
        %v3199 = vadd.f32 %v1843, %v3198
        %v3200 = vpop.f32.mrf.mxu0
        %v3201 = vadd.f32 %v1847, %v3200
        %3202 = vmatprep.mubr.bf16.mxu0 %v1543
        %3203 = vmatmul.mubr.bf16.gmra.mxu0 %v1542
        %v3204 = vpop.f32.mrf.mxu0
        %v3205 = vadd.f32 %v1843, %v3204
        %v3206 = vpop.f32.mrf.mxu0
        %v3207 = vadd.f32 %v1847, %v3206
        %v3208 = vpop.f32.mrf.mxu0
        %v3209 = vadd.f32 %v1843, %v3208
        %v3210 = vpop.f32.mrf.mxu0
        %v3211 = vadd.f32 %v1847, %v3210
        %3212 = vmatprep.mubr.bf16.mxu0 %v1551
        %3213 = vmatmul.mubr.bf16.gmra.mxu0 %v1550
        %v3214 = vpop.f32.mrf.mxu0
        %v3215 = vadd.f32 %v1843, %v3214
        %v3216 = vpop.f32.mrf.mxu0
        %v3217 = vadd.f32 %v1847, %v3216
        %v3218 = vpop.f32.mrf.mxu0
        %v3219 = vadd.f32 %v1843, %v3218
        %v3220 = vpop.f32.mrf.mxu0
        %v3221 = vadd.f32 %v1847, %v3220
        %3222 = vmatprep.mubr.bf16.mxu0 %v1559
        %3223 = vmatmul.mubr.bf16.gmra.mxu0 %v1558
        %v3224 = vpop.f32.mrf.mxu0
        %v3225 = vadd.f32 %v1843, %v3224
        %v3226 = vpop.f32.mrf.mxu0
        %v3227 = vadd.f32 %v1847, %v3226
        %v3228 = vpop.f32.mrf.mxu0
        %v3229 = vadd.f32 %v1843, %v3228
        %v3230 = vpop.f32.mrf.mxu0
        %v3231 = vadd.f32 %v1847, %v3230
        %3232 = vmatprep.mubr.bf16.mxu0 %v1567
        %3233 = vmatmul.mubr.bf16.gmra.mxu0 %v1566
        %v3234 = vpop.f32.mrf.mxu0
        %v3235 = vadd.f32 %v1843, %v3234
        %v3236 = vpop.f32.mrf.mxu0
        %v3237 = vadd.f32 %v1847, %v3236
        %v3238 = vpop.f32.mrf.mxu0
        %v3239 = vadd.f32 %v1843, %v3238
        %v3240 = vpop.f32.mrf.mxu0
        %v3241 = vadd.f32 %v1847, %v3240
        %3242 = vmatprep.mubr.bf16.mxu0 %v1575
        %3243 = vmatmul.mubr.bf16.gmra.mxu0 %v1574
        %v3244 = vpop.f32.mrf.mxu0
        %v3245 = vadd.f32 %v1843, %v3244
        %v3246 = vpop.f32.mrf.mxu0
        %v3247 = vadd.f32 %v1847, %v3246
        %v3248 = vpop.f32.mrf.mxu0
        %v3249 = vadd.f32 %v1843, %v3248
        %v3250 = vpop.f32.mrf.mxu0
        %v3251 = vadd.f32 %v1847, %v3250
        %3252 = vdwg.mxu0
        %3253 = vmatprep.subr.bf16.mxu0 %v2721
        %3254 = vmatpush1.bf16.msra.mxu0 %v2720
        %3255 = vmatprep.subr.bf16.mxu0 %v2717
        %3256 = vmatpush1.bf16.msra.mxu0 %v2716
        %3257 = vmatprep.subr.bf16.mxu0 %v2713
        %3258 = vmatpush1.bf16.msra.mxu0 %v2712
        %3259 = vmatprep.subr.bf16.mxu0 %v2709
        %3260 = vmatpush1.bf16.msra.mxu0 %v2708
        %3261 = vmatprep.subr.bf16.mxu0 %v2705
        %3262 = vmatpush1.bf16.msra.mxu0 %v2704
        %3263 = vmatprep.subr.bf16.mxu0 %v2701
        %3264 = vmatpush1.bf16.msra.mxu0 %v2700
        %3265 = vmatprep.subr.bf16.mxu0 %v2697
        %3266 = vmatpush1.bf16.msra.mxu0 %v2696
        %3267 = vmatprep.subr.bf16.mxu0 %v2693
        %3268 = vmatpush1.bf16.msra.mxu0 %v2692
        %3269 = vmatprep.subr.bf16.mxu0 %v2753
        %3270 = vmatpush2.bf16.msra.mxu0 %v2752
        %3271 = vmatprep.subr.bf16.mxu0 %v2749
        %3272 = vmatpush2.bf16.msra.mxu0 %v2748
        %3273 = vmatprep.subr.bf16.mxu0 %v2745
        %3274 = vmatpush2.bf16.msra.mxu0 %v2744
        %3275 = vmatprep.subr.bf16.mxu0 %v2741
        %3276 = vmatpush2.bf16.msra.mxu0 %v2740
        %3277 = vmatprep.subr.bf16.mxu0 %v2737
        %3278 = vmatpush2.bf16.msra.mxu0 %v2736
        %3279 = vmatprep.subr.bf16.mxu0 %v2733
        %3280 = vmatpush2.bf16.msra.mxu0 %v2732
        %3281 = vmatprep.subr.bf16.mxu0 %v2729
        %3282 = vmatpush2.bf16.msra.mxu0 %v2728
        %3283 = vmatprep.subr.bf16.mxu0 %v2725
        %3284 = vmatpush2.bf16.msra.mxu0 %v2724
        %3285 = vmatprep.mubr.bf16.mxu0 %v1521
        %3286 = vmatmul.mubr.bf16.gmra.mxu0 %v1520
        %v3287 = vpop.f32.mrf.mxu0
        %v3288 = vadd.f32 %v3175, %v3287
        %v3289 = vpop.f32.mrf.mxu0
        %v3290 = vadd.f32 %v3177, %v3289
        %v3291 = vpop.f32.mrf.mxu0
        %v3292 = vadd.f32 %v3179, %v3291
        %v3293 = vpop.f32.mrf.mxu0
        %v3294 = vadd.f32 %v3181, %v3293
        %3295 = vmatprep.mubr.bf16.mxu0 %v1529
        %3296 = vmatmul.mubr.bf16.gmra.mxu0 %v1528
        %v3297 = vpop.f32.mrf.mxu0
        %v3298 = vadd.f32 %v3185, %v3297
        %v3299 = vpop.f32.mrf.mxu0
        %v3300 = vadd.f32 %v3187, %v3299
        %v3301 = vpop.f32.mrf.mxu0
        %v3302 = vadd.f32 %v3189, %v3301
        %v3303 = vpop.f32.mrf.mxu0
        %v3304 = vadd.f32 %v3191, %v3303
        %3305 = vmatprep.mubr.bf16.mxu0 %v1537
        %3306 = vmatmul.mubr.bf16.gmra.mxu0 %v1536
        %v3307 = vpop.f32.mrf.mxu0
        %v3308 = vadd.f32 %v3195, %v3307
        %v3309 = vpop.f32.mrf.mxu0
        %v3310 = vadd.f32 %v3197, %v3309
        %v3311 = vpop.f32.mrf.mxu0
        %v3312 = vadd.f32 %v3199, %v3311
        %v3313 = vpop.f32.mrf.mxu0
        %v3314 = vadd.f32 %v3201, %v3313
        %3315 = vmatprep.mubr.bf16.mxu0 %v1545
        %3316 = vmatmul.mubr.bf16.gmra.mxu0 %v1544
        %v3317 = vpop.f32.mrf.mxu0
        %v3318 = vadd.f32 %v3205, %v3317
        %v3319 = vpop.f32.mrf.mxu0
        %v3320 = vadd.f32 %v3207, %v3319
        %v3321 = vpop.f32.mrf.mxu0
        %v3322 = vadd.f32 %v3209, %v3321
        %v3323 = vpop.f32.mrf.mxu0
        %v3324 = vadd.f32 %v3211, %v3323
        %3325 = vmatprep.mubr.bf16.mxu0 %v1553
        %3326 = vmatmul.mubr.bf16.gmra.mxu0 %v1552
        %v3327 = vpop.f32.mrf.mxu0
        %v3328 = vadd.f32 %v3215, %v3327
        %v3329 = vpop.f32.mrf.mxu0
        %v3330 = vadd.f32 %v3217, %v3329
        %v3331 = vpop.f32.mrf.mxu0
        %v3332 = vadd.f32 %v3219, %v3331
        %v3333 = vpop.f32.mrf.mxu0
        %v3334 = vadd.f32 %v3221, %v3333
        %3335 = vmatprep.mubr.bf16.mxu0 %v1561
        %3336 = vmatmul.mubr.bf16.gmra.mxu0 %v1560
        %v3337 = vpop.f32.mrf.mxu0
        %v3338 = vadd.f32 %v3225, %v3337
        %v3339 = vpop.f32.mrf.mxu0
        %v3340 = vadd.f32 %v3227, %v3339
        %v3341 = vpop.f32.mrf.mxu0
        %v3342 = vadd.f32 %v3229, %v3341
        %v3343 = vpop.f32.mrf.mxu0
        %v3344 = vadd.f32 %v3231, %v3343
        %3345 = vmatprep.mubr.bf16.mxu0 %v1569
        %3346 = vmatmul.mubr.bf16.gmra.mxu0 %v1568
        %v3347 = vpop.f32.mrf.mxu0
        %v3348 = vadd.f32 %v3235, %v3347
        %v3349 = vpop.f32.mrf.mxu0
        %v3350 = vadd.f32 %v3237, %v3349
        %v3351 = vpop.f32.mrf.mxu0
        %v3352 = vadd.f32 %v3239, %v3351
        %v3353 = vpop.f32.mrf.mxu0
        %v3354 = vadd.f32 %v3241, %v3353
        %3355 = vmatprep.mubr.bf16.mxu0 %v1577
        %3356 = vmatmul.mubr.bf16.gmra.mxu0 %v1576
        %v3357 = vpop.f32.mrf.mxu0
        %v3358 = vadd.f32 %v3245, %v3357
        %v3359 = vpop.f32.mrf.mxu0
        %v3360 = vadd.f32 %v3247, %v3359
        %v3361 = vpop.f32.mrf.mxu0
        %v3362 = vadd.f32 %v3249, %v3361
        %v3363 = vpop.f32.mrf.mxu0
        %v3364 = vadd.f32 %v3251, %v3363
        %3365 = vdwg.mxu0
        %3366 = vmatprep.subr.bf16.mxu0 %v2785
        %3367 = vmatpush1.bf16.msra.mxu0 %v2784
        %3368 = vmatprep.subr.bf16.mxu0 %v2781
        %3369 = vmatpush1.bf16.msra.mxu0 %v2780
        %3370 = vmatprep.subr.bf16.mxu0 %v2777
        %3371 = vmatpush1.bf16.msra.mxu0 %v2776
        %3372 = vmatprep.subr.bf16.mxu0 %v2773
        %3373 = vmatpush1.bf16.msra.mxu0 %v2772
        %3374 = vmatprep.subr.bf16.mxu0 %v2769
        %3375 = vmatpush1.bf16.msra.mxu0 %v2768
        %3376 = vmatprep.subr.bf16.mxu0 %v2765
        %3377 = vmatpush1.bf16.msra.mxu0 %v2764
        %3378 = vmatprep.subr.bf16.mxu0 %v2761
        %3379 = vmatpush1.bf16.msra.mxu0 %v2760
        %3380 = vmatprep.subr.bf16.mxu0 %v2757
        %3381 = vmatpush1.bf16.msra.mxu0 %v2756
        %3382 = vmatprep.subr.bf16.mxu0 %v2817
        %3383 = vmatpush2.bf16.msra.mxu0 %v2816
        %3384 = vmatprep.subr.bf16.mxu0 %v2813
        %3385 = vmatpush2.bf16.msra.mxu0 %v2812
        %3386 = vmatprep.subr.bf16.mxu0 %v2809
        %3387 = vmatpush2.bf16.msra.mxu0 %v2808
        %3388 = vmatprep.subr.bf16.mxu0 %v2805
        %3389 = vmatpush2.bf16.msra.mxu0 %v2804
        %3390 = vmatprep.subr.bf16.mxu0 %v2801
        %3391 = vmatpush2.bf16.msra.mxu0 %v2800
        %3392 = vmatprep.subr.bf16.mxu0 %v2797
        %3393 = vmatpush2.bf16.msra.mxu0 %v2796
        %3394 = vmatprep.subr.bf16.mxu0 %v2793
        %3395 = vmatpush2.bf16.msra.mxu0 %v2792
        %3396 = vmatprep.subr.bf16.mxu0 %v2789
        %3397 = vmatpush2.bf16.msra.mxu0 %v2788
        %3398 = vmatprep.mubr.bf16.mxu0 %v1523
        %3399 = vmatmul.mubr.bf16.gmra.mxu0 %v1522
        %v3400 = vpop.f32.mrf.mxu0
        %v3401 = vadd.f32 %v3288, %v3400
        %v3402 = vpop.f32.mrf.mxu0
        %v3403 = vadd.f32 %v3290, %v3402
        %v3404 = vpop.f32.mrf.mxu0
        %v3405 = vadd.f32 %v3292, %v3404
        %v3406 = vpop.f32.mrf.mxu0
        %v3407 = vadd.f32 %v3294, %v3406
        %3408 = vmatprep.mubr.bf16.mxu0 %v1531
        %3409 = vmatmul.mubr.bf16.gmra.mxu0 %v1530
        %v3410 = vpop.f32.mrf.mxu0
        %v3411 = vadd.f32 %v3298, %v3410
        %v3412 = vpop.f32.mrf.mxu0
        %v3413 = vadd.f32 %v3300, %v3412
        %v3414 = vpop.f32.mrf.mxu0
        %v3415 = vadd.f32 %v3302, %v3414
        %v3416 = vpop.f32.mrf.mxu0
        %v3417 = vadd.f32 %v3304, %v3416
        %3418 = vmatprep.mubr.bf16.mxu0 %v1539
        %3419 = vmatmul.mubr.bf16.gmra.mxu0 %v1538
        %v3420 = vpop.f32.mrf.mxu0
        %v3421 = vadd.f32 %v3308, %v3420
        %v3422 = vpop.f32.mrf.mxu0
        %v3423 = vadd.f32 %v3310, %v3422
        %v3424 = vpop.f32.mrf.mxu0
        %v3425 = vadd.f32 %v3312, %v3424
        %v3426 = vpop.f32.mrf.mxu0
        %v3427 = vadd.f32 %v3314, %v3426
        %3428 = vmatprep.mubr.bf16.mxu0 %v1547
        %3429 = vmatmul.mubr.bf16.gmra.mxu0 %v1546
        %v3430 = vpop.f32.mrf.mxu0
        %v3431 = vadd.f32 %v3318, %v3430
        %v3432 = vpop.f32.mrf.mxu0
        %v3433 = vadd.f32 %v3320, %v3432
        %v3434 = vpop.f32.mrf.mxu0
        %v3435 = vadd.f32 %v3322, %v3434
        %v3436 = vpop.f32.mrf.mxu0
        %v3437 = vadd.f32 %v3324, %v3436
        %3438 = vmatprep.mubr.bf16.mxu0 %v1555
        %3439 = vmatmul.mubr.bf16.gmra.mxu0 %v1554
        %v3440 = vpop.f32.mrf.mxu0
        %v3441 = vadd.f32 %v3328, %v3440
        %v3442 = vpop.f32.mrf.mxu0
        %v3443 = vadd.f32 %v3330, %v3442
        %v3444 = vpop.f32.mrf.mxu0
        %v3445 = vadd.f32 %v3332, %v3444
        %v3446 = vpop.f32.mrf.mxu0
        %v3447 = vadd.f32 %v3334, %v3446
        %3448 = vmatprep.mubr.bf16.mxu0 %v1563
        %3449 = vmatmul.mubr.bf16.gmra.mxu0 %v1562
        %v3450 = vpop.f32.mrf.mxu0
        %v3451 = vadd.f32 %v3338, %v3450
        %v3452 = vpop.f32.mrf.mxu0
        %v3453 = vadd.f32 %v3340, %v3452
        %v3454 = vpop.f32.mrf.mxu0
        %v3455 = vadd.f32 %v3342, %v3454
        %v3456 = vpop.f32.mrf.mxu0
        %v3457 = vadd.f32 %v3344, %v3456
        %3458 = vmatprep.mubr.bf16.mxu0 %v1571
        %3459 = vmatmul.mubr.bf16.gmra.mxu0 %v1570
        %v3460 = vpop.f32.mrf.mxu0
        %v3461 = vadd.f32 %v3348, %v3460
        %v3462 = vpop.f32.mrf.mxu0
        %v3463 = vadd.f32 %v3350, %v3462
        %v3464 = vpop.f32.mrf.mxu0
        %v3465 = vadd.f32 %v3352, %v3464
        %v3466 = vpop.f32.mrf.mxu0
        %v3467 = vadd.f32 %v3354, %v3466
        %3468 = vmatprep.mubr.bf16.mxu0 %v1579
        %3469 = vmatmul.mubr.bf16.gmra.mxu0 %v1578
        %v3470 = vpop.f32.mrf.mxu0
        %v3471 = vadd.f32 %v3358, %v3470
        %v3472 = vpop.f32.mrf.mxu0
        %v3473 = vadd.f32 %v3360, %v3472
        %v3474 = vpop.f32.mrf.mxu0
        %v3475 = vadd.f32 %v3362, %v3474
        %v3476 = vpop.f32.mrf.mxu0
        %v3477 = vadd.f32 %v3364, %v3476
        %3478 = vdwg.mxu0
        %3479 = vmatprep.subr.bf16.mxu0 %v2849
        %3480 = vmatpush1.bf16.msra.mxu0 %v2848
        %3481 = vmatprep.subr.bf16.mxu0 %v2845
        %3482 = vmatpush1.bf16.msra.mxu0 %v2844
        %3483 = vmatprep.subr.bf16.mxu0 %v2841
        %3484 = vmatpush1.bf16.msra.mxu0 %v2840
        %3485 = vmatprep.subr.bf16.mxu0 %v2837
        %3486 = vmatpush1.bf16.msra.mxu0 %v2836
        %3487 = vmatprep.subr.bf16.mxu0 %v2833
        %3488 = vmatpush1.bf16.msra.mxu0 %v2832
        %3489 = vmatprep.subr.bf16.mxu0 %v2829
        %3490 = vmatpush1.bf16.msra.mxu0 %v2828
        %3491 = vmatprep.subr.bf16.mxu0 %v2825
        %3492 = vmatpush1.bf16.msra.mxu0 %v2824
        %3493 = vmatprep.subr.bf16.mxu0 %v2821
        %3494 = vmatpush1.bf16.msra.mxu0 %v2820
        %3495 = vmatprep.subr.bf16.mxu0 %v2881
        %3496 = vmatpush2.bf16.msra.mxu0 %v2880
        %3497 = vmatprep.subr.bf16.mxu0 %v2877
        %3498 = vmatpush2.bf16.msra.mxu0 %v2876
        %3499 = vmatprep.subr.bf16.mxu0 %v2873
        %3500 = vmatpush2.bf16.msra.mxu0 %v2872
        %3501 = vmatprep.subr.bf16.mxu0 %v2869
        %3502 = vmatpush2.bf16.msra.mxu0 %v2868
        %3503 = vmatprep.subr.bf16.mxu0 %v2865
        %3504 = vmatpush2.bf16.msra.mxu0 %v2864
        %3505 = vmatprep.subr.bf16.mxu0 %v2861
        %3506 = vmatpush2.bf16.msra.mxu0 %v2860
        %3507 = vmatprep.subr.bf16.mxu0 %v2857
        %3508 = vmatpush2.bf16.msra.mxu0 %v2856
        %3509 = vmatprep.subr.bf16.mxu0 %v2853
        %3510 = vmatpush2.bf16.msra.mxu0 %v2852
        %3511 = vmatprep.mubr.bf16.mxu0 %v1525
        %3512 = vmatmul.mubr.bf16.gmra.mxu0 %v1524
        %v3513 = vpop.f32.mrf.mxu0
        %v3514 = vadd.f32 %v3401, %v3513
        %v3515 = vpop.f32.mrf.mxu0
        %v3516 = vadd.f32 %v3403, %v3515
        %v3517 = vpop.f32.mrf.mxu0
        %v3518 = vadd.f32 %v3405, %v3517
        %v3519 = vpop.f32.mrf.mxu0
        %v3520 = vadd.f32 %v3407, %v3519
        %3521 = vmatprep.mubr.bf16.mxu0 %v1533
        %3522 = vmatmul.mubr.bf16.gmra.mxu0 %v1532
        %v3523 = vpop.f32.mrf.mxu0
        %v3524 = vadd.f32 %v3411, %v3523
        %v3525 = vpop.f32.mrf.mxu0
        %v3526 = vadd.f32 %v3413, %v3525
        %v3527 = vpop.f32.mrf.mxu0
        %v3528 = vadd.f32 %v3415, %v3527
        %v3529 = vpop.f32.mrf.mxu0
        %v3530 = vadd.f32 %v3417, %v3529
        %3531 = vmatprep.mubr.bf16.mxu0 %v1541
        %3532 = vmatmul.mubr.bf16.gmra.mxu0 %v1540
        %v3533 = vpop.f32.mrf.mxu0
        %v3534 = vadd.f32 %v3421, %v3533
        %v3535 = vpop.f32.mrf.mxu0
        %v3536 = vadd.f32 %v3423, %v3535
        %v3537 = vpop.f32.mrf.mxu0
        %v3538 = vadd.f32 %v3425, %v3537
        %v3539 = vpop.f32.mrf.mxu0
        %v3540 = vadd.f32 %v3427, %v3539
        %3541 = vmatprep.mubr.bf16.mxu0 %v1549
        %3542 = vmatmul.mubr.bf16.gmra.mxu0 %v1548
        %v3543 = vpop.f32.mrf.mxu0
        %v3544 = vadd.f32 %v3431, %v3543
        %v3545 = vpop.f32.mrf.mxu0
        %v3546 = vadd.f32 %v3433, %v3545
        %v3547 = vpop.f32.mrf.mxu0
        %v3548 = vadd.f32 %v3435, %v3547
        %v3549 = vpop.f32.mrf.mxu0
        %v3550 = vadd.f32 %v3437, %v3549
        %3551 = vmatprep.mubr.bf16.mxu0 %v1557
        %3552 = vmatmul.mubr.bf16.gmra.mxu0 %v1556
        %v3553 = vpop.f32.mrf.mxu0
        %v3554 = vadd.f32 %v3441, %v3553
        %v3555 = vpop.f32.mrf.mxu0
        %v3556 = vadd.f32 %v3443, %v3555
        %v3557 = vpop.f32.mrf.mxu0
        %v3558 = vadd.f32 %v3445, %v3557
        %v3559 = vpop.f32.mrf.mxu0
        %v3560 = vadd.f32 %v3447, %v3559
        %3561 = vmatprep.mubr.bf16.mxu0 %v1565
        %3562 = vmatmul.mubr.bf16.gmra.mxu0 %v1564
        %v3563 = vpop.f32.mrf.mxu0
        %v3564 = vadd.f32 %v3451, %v3563
        %v3565 = vpop.f32.mrf.mxu0
        %v3566 = vadd.f32 %v3453, %v3565
        %v3567 = vpop.f32.mrf.mxu0
        %v3568 = vadd.f32 %v3455, %v3567
        %v3569 = vpop.f32.mrf.mxu0
        %v3570 = vadd.f32 %v3457, %v3569
        %3571 = vmatprep.mubr.bf16.mxu0 %v1573
        %3572 = vmatmul.mubr.bf16.gmra.mxu0 %v1572
        %v3573 = vpop.f32.mrf.mxu0
        %v3574 = vadd.f32 %v3461, %v3573
        %v3575 = vpop.f32.mrf.mxu0
        %v3576 = vadd.f32 %v3463, %v3575
        %v3577 = vpop.f32.mrf.mxu0
        %v3578 = vadd.f32 %v3465, %v3577
        %v3579 = vpop.f32.mrf.mxu0
        %v3580 = vadd.f32 %v3467, %v3579
        %3581 = vmatprep.mubr.bf16.mxu0 %v1581
        %3582 = vmatmul.mubr.bf16.gmra.mxu0 %v1580
        %v3583 = vpop.f32.mrf.mxu0
        %v3584 = vadd.f32 %v3471, %v3583
        %v3585 = vpop.f32.mrf.mxu0
        %v3586 = vadd.f32 %v3473, %v3585
        %v3587 = vpop.f32.mrf.mxu0
        %v3588 = vadd.f32 %v3475, %v3587
        %v3589 = vpop.f32.mrf.mxu0
        %v3590 = vadd.f32 %v3477, %v3589
        %3591 = vdwg.mxu0
        %3592 = vmatprep.subr.bf16.mxu0 %v2659
        %3593 = vmatpush1.bf16.msra.mxu0 %v2658
        %3594 = vmatprep.subr.bf16.mxu0 %v2655
        %3595 = vmatpush1.bf16.msra.mxu0 %v2654
        %3596 = vmatprep.subr.bf16.mxu0 %v2651
        %3597 = vmatpush1.bf16.msra.mxu0 %v2650
        %3598 = vmatprep.subr.bf16.mxu0 %v2647
        %3599 = vmatpush1.bf16.msra.mxu0 %v2646
        %3600 = vmatprep.subr.bf16.mxu0 %v2643
        %3601 = vmatpush1.bf16.msra.mxu0 %v2642
        %3602 = vmatprep.subr.bf16.mxu0 %v2639
        %3603 = vmatpush1.bf16.msra.mxu0 %v2638
        %3604 = vmatprep.subr.bf16.mxu0 %v2635
        %3605 = vmatpush1.bf16.msra.mxu0 %v2634
        %3606 = vmatprep.subr.bf16.mxu0 %v2631
        %3607 = vmatpush1.bf16.msra.mxu0 %v2630
        %3608 = vmatprep.subr.bf16.mxu0 %v2691
        %3609 = vmatpush2.bf16.msra.mxu0 %v2690
        %3610 = vmatprep.subr.bf16.mxu0 %v2687
        %3611 = vmatpush2.bf16.msra.mxu0 %v2686
        %3612 = vmatprep.subr.bf16.mxu0 %v2683
        %3613 = vmatpush2.bf16.msra.mxu0 %v2682
        %3614 = vmatprep.subr.bf16.mxu0 %v2679
        %3615 = vmatpush2.bf16.msra.mxu0 %v2678
        %3616 = vmatprep.subr.bf16.mxu0 %v2675
        %3617 = vmatpush2.bf16.msra.mxu0 %v2674
        %3618 = vmatprep.subr.bf16.mxu0 %v2671
        %3619 = vmatpush2.bf16.msra.mxu0 %v2670
        %3620 = vmatprep.subr.bf16.mxu0 %v2667
        %3621 = vmatpush2.bf16.msra.mxu0 %v2666
        %3622 = vmatprep.subr.bf16.mxu0 %v2663
        %3623 = vmatpush2.bf16.msra.mxu0 %v2662
        %3624 = vmatprep.mubr.bf16.mxu0 %v1519
        %3625 = vmatmul.mubr.bf16.gmra.mxu0 %v1518
        %v3626 = vpop.f32.mrf.mxu0
        %v3627 = vadd.f32 %v1851, %v3626
        %v3628 = vpop.f32.mrf.mxu0
        %v3629 = vadd.f32 %v1855, %v3628
        %v3630 = vpop.f32.mrf.mxu0
        %v3631 = vadd.f32 %v1851, %v3630
        %v3632 = vpop.f32.mrf.mxu0
        %v3633 = vadd.f32 %v1855, %v3632
        %3634 = vmatprep.mubr.bf16.mxu0 %v1527
        %3635 = vmatmul.mubr.bf16.gmra.mxu0 %v1526
        %v3636 = vpop.f32.mrf.mxu0
        %v3637 = vadd.f32 %v1851, %v3636
        %v3638 = vpop.f32.mrf.mxu0
        %v3639 = vadd.f32 %v1855, %v3638
        %v3640 = vpop.f32.mrf.mxu0
        %v3641 = vadd.f32 %v1851, %v3640
        %v3642 = vpop.f32.mrf.mxu0
        %v3643 = vadd.f32 %v1855, %v3642
        %3644 = vmatprep.mubr.bf16.mxu0 %v1535
        %3645 = vmatmul.mubr.bf16.gmra.mxu0 %v1534
        %v3646 = vpop.f32.mrf.mxu0
        %v3647 = vadd.f32 %v1851, %v3646
        %v3648 = vpop.f32.mrf.mxu0
        %v3649 = vadd.f32 %v1855, %v3648
        %v3650 = vpop.f32.mrf.mxu0
        %v3651 = vadd.f32 %v1851, %v3650
        %v3652 = vpop.f32.mrf.mxu0
        %v3653 = vadd.f32 %v1855, %v3652
        %3654 = vmatprep.mubr.bf16.mxu0 %v1543
        %3655 = vmatmul.mubr.bf16.gmra.mxu0 %v1542
        %v3656 = vpop.f32.mrf.mxu0
        %v3657 = vadd.f32 %v1851, %v3656
        %v3658 = vpop.f32.mrf.mxu0
        %v3659 = vadd.f32 %v1855, %v3658
        %v3660 = vpop.f32.mrf.mxu0
        %v3661 = vadd.f32 %v1851, %v3660
        %v3662 = vpop.f32.mrf.mxu0
        %v3663 = vadd.f32 %v1855, %v3662
        %3664 = vmatprep.mubr.bf16.mxu0 %v1551
        %3665 = vmatmul.mubr.bf16.gmra.mxu0 %v1550
        %v3666 = vpop.f32.mrf.mxu0
        %v3667 = vadd.f32 %v1851, %v3666
        %v3668 = vpop.f32.mrf.mxu0
        %v3669 = vadd.f32 %v1855, %v3668
        %v3670 = vpop.f32.mrf.mxu0
        %v3671 = vadd.f32 %v1851, %v3670
        %v3672 = vpop.f32.mrf.mxu0
        %v3673 = vadd.f32 %v1855, %v3672
        %3674 = vmatprep.mubr.bf16.mxu0 %v1559
        %3675 = vmatmul.mubr.bf16.gmra.mxu0 %v1558
        %v3676 = vpop.f32.mrf.mxu0
        %v3677 = vadd.f32 %v1851, %v3676
        %v3678 = vpop.f32.mrf.mxu0
        %v3679 = vadd.f32 %v1855, %v3678
        %v3680 = vpop.f32.mrf.mxu0
        %v3681 = vadd.f32 %v1851, %v3680
        %v3682 = vpop.f32.mrf.mxu0
        %v3683 = vadd.f32 %v1855, %v3682
        %3684 = vmatprep.mubr.bf16.mxu0 %v1567
        %3685 = vmatmul.mubr.bf16.gmra.mxu0 %v1566
        %v3686 = vpop.f32.mrf.mxu0
        %v3687 = vadd.f32 %v1851, %v3686
        %v3688 = vpop.f32.mrf.mxu0
        %v3689 = vadd.f32 %v1855, %v3688
        %v3690 = vpop.f32.mrf.mxu0
        %v3691 = vadd.f32 %v1851, %v3690
        %v3692 = vpop.f32.mrf.mxu0
        %v3693 = vadd.f32 %v1855, %v3692
        %3694 = vmatprep.mubr.bf16.mxu0 %v1575
        %3695 = vmatmul.mubr.bf16.gmra.mxu0 %v1574
        %v3696 = vpop.f32.mrf.mxu0
        %v3697 = vadd.f32 %v1851, %v3696
        %v3698 = vpop.f32.mrf.mxu0
        %v3699 = vadd.f32 %v1855, %v3698
        %v3700 = vpop.f32.mrf.mxu0
        %v3701 = vadd.f32 %v1851, %v3700
        %v3702 = vpop.f32.mrf.mxu0
        %v3703 = vadd.f32 %v1855, %v3702
        %3704 = vdwg.mxu0
        %3705 = vmatprep.subr.bf16.mxu0 %v2723
        %3706 = vmatpush1.bf16.msra.mxu0 %v2722
        %3707 = vmatprep.subr.bf16.mxu0 %v2719
        %3708 = vmatpush1.bf16.msra.mxu0 %v2718
        %3709 = vmatprep.subr.bf16.mxu0 %v2715
        %3710 = vmatpush1.bf16.msra.mxu0 %v2714
        %3711 = vmatprep.subr.bf16.mxu0 %v2711
        %3712 = vmatpush1.bf16.msra.mxu0 %v2710
        %3713 = vmatprep.subr.bf16.mxu0 %v2707
        %3714 = vmatpush1.bf16.msra.mxu0 %v2706
        %3715 = vmatprep.subr.bf16.mxu0 %v2703
        %3716 = vmatpush1.bf16.msra.mxu0 %v2702
        %3717 = vmatprep.subr.bf16.mxu0 %v2699
        %3718 = vmatpush1.bf16.msra.mxu0 %v2698
        %3719 = vmatprep.subr.bf16.mxu0 %v2695
        %3720 = vmatpush1.bf16.msra.mxu0 %v2694
        %3721 = vmatprep.subr.bf16.mxu0 %v2755
        %3722 = vmatpush2.bf16.msra.mxu0 %v2754
        %3723 = vmatprep.subr.bf16.mxu0 %v2751
        %3724 = vmatpush2.bf16.msra.mxu0 %v2750
        %3725 = vmatprep.subr.bf16.mxu0 %v2747
        %3726 = vmatpush2.bf16.msra.mxu0 %v2746
        %3727 = vmatprep.subr.bf16.mxu0 %v2743
        %3728 = vmatpush2.bf16.msra.mxu0 %v2742
        %3729 = vmatprep.subr.bf16.mxu0 %v2739
        %3730 = vmatpush2.bf16.msra.mxu0 %v2738
        %3731 = vmatprep.subr.bf16.mxu0 %v2735
        %3732 = vmatpush2.bf16.msra.mxu0 %v2734
        %3733 = vmatprep.subr.bf16.mxu0 %v2731
        %3734 = vmatpush2.bf16.msra.mxu0 %v2730
        %3735 = vmatprep.subr.bf16.mxu0 %v2727
        %3736 = vmatpush2.bf16.msra.mxu0 %v2726
        %3737 = vmatprep.mubr.bf16.mxu0 %v1521
        %3738 = vmatmul.mubr.bf16.gmra.mxu0 %v1520
        %v3739 = vpop.f32.mrf.mxu0
        %v3740 = vadd.f32 %v3627, %v3739
        %v3741 = vpop.f32.mrf.mxu0
        %v3742 = vadd.f32 %v3629, %v3741
        %v3743 = vpop.f32.mrf.mxu0
        %v3744 = vadd.f32 %v3631, %v3743
        %v3745 = vpop.f32.mrf.mxu0
        %v3746 = vadd.f32 %v3633, %v3745
        %3747 = vmatprep.mubr.bf16.mxu0 %v1529
        %3748 = vmatmul.mubr.bf16.gmra.mxu0 %v1528
        %v3749 = vpop.f32.mrf.mxu0
        %v3750 = vadd.f32 %v3637, %v3749
        %v3751 = vpop.f32.mrf.mxu0
        %v3752 = vadd.f32 %v3639, %v3751
        %v3753 = vpop.f32.mrf.mxu0
        %v3754 = vadd.f32 %v3641, %v3753
        %v3755 = vpop.f32.mrf.mxu0
        %v3756 = vadd.f32 %v3643, %v3755
        %3757 = vmatprep.mubr.bf16.mxu0 %v1537
        %3758 = vmatmul.mubr.bf16.gmra.mxu0 %v1536
        %v3759 = vpop.f32.mrf.mxu0
        %v3760 = vadd.f32 %v3647, %v3759
        %v3761 = vpop.f32.mrf.mxu0
        %v3762 = vadd.f32 %v3649, %v3761
        %v3763 = vpop.f32.mrf.mxu0
        %v3764 = vadd.f32 %v3651, %v3763
        %v3765 = vpop.f32.mrf.mxu0
        %v3766 = vadd.f32 %v3653, %v3765
        %3767 = vmatprep.mubr.bf16.mxu0 %v1545
        %3768 = vmatmul.mubr.bf16.gmra.mxu0 %v1544
        %v3769 = vpop.f32.mrf.mxu0
        %v3770 = vadd.f32 %v3657, %v3769
        %v3771 = vpop.f32.mrf.mxu0
        %v3772 = vadd.f32 %v3659, %v3771
        %v3773 = vpop.f32.mrf.mxu0
        %v3774 = vadd.f32 %v3661, %v3773
        %v3775 = vpop.f32.mrf.mxu0
        %v3776 = vadd.f32 %v3663, %v3775
        %3777 = vmatprep.mubr.bf16.mxu0 %v1553
        %3778 = vmatmul.mubr.bf16.gmra.mxu0 %v1552
        %v3779 = vpop.f32.mrf.mxu0
        %v3780 = vadd.f32 %v3667, %v3779
        %v3781 = vpop.f32.mrf.mxu0
        %v3782 = vadd.f32 %v3669, %v3781
        %v3783 = vpop.f32.mrf.mxu0
        %v3784 = vadd.f32 %v3671, %v3783
        %v3785 = vpop.f32.mrf.mxu0
        %v3786 = vadd.f32 %v3673, %v3785
        %3787 = vmatprep.mubr.bf16.mxu0 %v1561
        %3788 = vmatmul.mubr.bf16.gmra.mxu0 %v1560
        %v3789 = vpop.f32.mrf.mxu0
        %v3790 = vadd.f32 %v3677, %v3789
        %v3791 = vpop.f32.mrf.mxu0
        %v3792 = vadd.f32 %v3679, %v3791
        %v3793 = vpop.f32.mrf.mxu0
        %v3794 = vadd.f32 %v3681, %v3793
        %v3795 = vpop.f32.mrf.mxu0
        %v3796 = vadd.f32 %v3683, %v3795
        %3797 = vmatprep.mubr.bf16.mxu0 %v1569
        %3798 = vmatmul.mubr.bf16.gmra.mxu0 %v1568
        %v3799 = vpop.f32.mrf.mxu0
        %v3800 = vadd.f32 %v3687, %v3799
        %v3801 = vpop.f32.mrf.mxu0
        %v3802 = vadd.f32 %v3689, %v3801
        %v3803 = vpop.f32.mrf.mxu0
        %v3804 = vadd.f32 %v3691, %v3803
        %v3805 = vpop.f32.mrf.mxu0
        %v3806 = vadd.f32 %v3693, %v3805
        %3807 = vmatprep.mubr.bf16.mxu0 %v1577
        %3808 = vmatmul.mubr.bf16.gmra.mxu0 %v1576
        %v3809 = vpop.f32.mrf.mxu0
        %v3810 = vadd.f32 %v3697, %v3809
        %v3811 = vpop.f32.mrf.mxu0
        %v3812 = vadd.f32 %v3699, %v3811
        %v3813 = vpop.f32.mrf.mxu0
        %v3814 = vadd.f32 %v3701, %v3813
        %v3815 = vpop.f32.mrf.mxu0
        %v3816 = vadd.f32 %v3703, %v3815
        %3817 = vdwg.mxu0
        %3818 = vmatprep.subr.bf16.mxu0 %v2787
        %3819 = vmatpush1.bf16.msra.mxu0 %v2786
        %3820 = vmatprep.subr.bf16.mxu0 %v2783
        %3821 = vmatpush1.bf16.msra.mxu0 %v2782
        %3822 = vmatprep.subr.bf16.mxu0 %v2779
        %3823 = vmatpush1.bf16.msra.mxu0 %v2778
        %3824 = vmatprep.subr.bf16.mxu0 %v2775
        %3825 = vmatpush1.bf16.msra.mxu0 %v2774
        %3826 = vmatprep.subr.bf16.mxu0 %v2771
        %3827 = vmatpush1.bf16.msra.mxu0 %v2770
        %3828 = vmatprep.subr.bf16.mxu0 %v2767
        %3829 = vmatpush1.bf16.msra.mxu0 %v2766
        %3830 = vmatprep.subr.bf16.mxu0 %v2763
        %3831 = vmatpush1.bf16.msra.mxu0 %v2762
        %3832 = vmatprep.subr.bf16.mxu0 %v2759
        %3833 = vmatpush1.bf16.msra.mxu0 %v2758
        %3834 = vmatprep.subr.bf16.mxu0 %v2819
        %3835 = vmatpush2.bf16.msra.mxu0 %v2818
        %3836 = vmatprep.subr.bf16.mxu0 %v2815
        %3837 = vmatpush2.bf16.msra.mxu0 %v2814
        %3838 = vmatprep.subr.bf16.mxu0 %v2811
        %3839 = vmatpush2.bf16.msra.mxu0 %v2810
        %3840 = vmatprep.subr.bf16.mxu0 %v2807
        %3841 = vmatpush2.bf16.msra.mxu0 %v2806
        %3842 = vmatprep.subr.bf16.mxu0 %v2803
        %3843 = vmatpush2.bf16.msra.mxu0 %v2802
        %3844 = vmatprep.subr.bf16.mxu0 %v2799
        %3845 = vmatpush2.bf16.msra.mxu0 %v2798
        %3846 = vmatprep.subr.bf16.mxu0 %v2795
        %3847 = vmatpush2.bf16.msra.mxu0 %v2794
        %3848 = vmatprep.subr.bf16.mxu0 %v2791
        %3849 = vmatpush2.bf16.msra.mxu0 %v2790
        %3850 = vmatprep.mubr.bf16.mxu0 %v1523
        %3851 = vmatmul.mubr.bf16.gmra.mxu0 %v1522
        %v3852 = vpop.f32.mrf.mxu0
        %v3853 = vadd.f32 %v3740, %v3852
        %v3854 = vpop.f32.mrf.mxu0
        %v3855 = vadd.f32 %v3742, %v3854
        %v3856 = vpop.f32.mrf.mxu0
        %v3857 = vadd.f32 %v3744, %v3856
        %v3858 = vpop.f32.mrf.mxu0
        %v3859 = vadd.f32 %v3746, %v3858
        %3860 = vmatprep.mubr.bf16.mxu0 %v1531
        %3861 = vmatmul.mubr.bf16.gmra.mxu0 %v1530
        %v3862 = vpop.f32.mrf.mxu0
        %v3863 = vadd.f32 %v3750, %v3862
        %v3864 = vpop.f32.mrf.mxu0
        %v3865 = vadd.f32 %v3752, %v3864
        %v3866 = vpop.f32.mrf.mxu0
        %v3867 = vadd.f32 %v3754, %v3866
        %v3868 = vpop.f32.mrf.mxu0
        %v3869 = vadd.f32 %v3756, %v3868
        %3870 = vmatprep.mubr.bf16.mxu0 %v1539
        %3871 = vmatmul.mubr.bf16.gmra.mxu0 %v1538
        %v3872 = vpop.f32.mrf.mxu0
        %v3873 = vadd.f32 %v3760, %v3872
        %v3874 = vpop.f32.mrf.mxu0
        %v3875 = vadd.f32 %v3762, %v3874
        %v3876 = vpop.f32.mrf.mxu0
        %v3877 = vadd.f32 %v3764, %v3876
        %v3878 = vpop.f32.mrf.mxu0
        %v3879 = vadd.f32 %v3766, %v3878
        %3880 = vmatprep.mubr.bf16.mxu0 %v1547
        %3881 = vmatmul.mubr.bf16.gmra.mxu0 %v1546
        %v3882 = vpop.f32.mrf.mxu0
        %v3883 = vadd.f32 %v3770, %v3882
        %v3884 = vpop.f32.mrf.mxu0
        %v3885 = vadd.f32 %v3772, %v3884
        %v3886 = vpop.f32.mrf.mxu0
        %v3887 = vadd.f32 %v3774, %v3886
        %v3888 = vpop.f32.mrf.mxu0
        %v3889 = vadd.f32 %v3776, %v3888
        %3890 = vmatprep.mubr.bf16.mxu0 %v1555
        %3891 = vmatmul.mubr.bf16.gmra.mxu0 %v1554
        %v3892 = vpop.f32.mrf.mxu0
        %v3893 = vadd.f32 %v3780, %v3892
        %v3894 = vpop.f32.mrf.mxu0
        %v3895 = vadd.f32 %v3782, %v3894
        %v3896 = vpop.f32.mrf.mxu0
        %v3897 = vadd.f32 %v3784, %v3896
        %v3898 = vpop.f32.mrf.mxu0
        %v3899 = vadd.f32 %v3786, %v3898
        %3900 = vmatprep.mubr.bf16.mxu0 %v1563
        %3901 = vmatmul.mubr.bf16.gmra.mxu0 %v1562
        %v3902 = vpop.f32.mrf.mxu0
        %v3903 = vadd.f32 %v3790, %v3902
        %v3904 = vpop.f32.mrf.mxu0
        %v3905 = vadd.f32 %v3792, %v3904
        %v3906 = vpop.f32.mrf.mxu0
        %v3907 = vadd.f32 %v3794, %v3906
        %v3908 = vpop.f32.mrf.mxu0
        %v3909 = vadd.f32 %v3796, %v3908
        %3910 = vmatprep.mubr.bf16.mxu0 %v1571
        %3911 = vmatmul.mubr.bf16.gmra.mxu0 %v1570
        %v3912 = vpop.f32.mrf.mxu0
        %v3913 = vadd.f32 %v3800, %v3912
        %v3914 = vpop.f32.mrf.mxu0
        %v3915 = vadd.f32 %v3802, %v3914
        %v3916 = vpop.f32.mrf.mxu0
        %v3917 = vadd.f32 %v3804, %v3916
        %v3918 = vpop.f32.mrf.mxu0
        %v3919 = vadd.f32 %v3806, %v3918
        %3920 = vmatprep.mubr.bf16.mxu0 %v1579
        %3921 = vmatmul.mubr.bf16.gmra.mxu0 %v1578
        %v3922 = vpop.f32.mrf.mxu0
        %v3923 = vadd.f32 %v3810, %v3922
        %v3924 = vpop.f32.mrf.mxu0
        %v3925 = vadd.f32 %v3812, %v3924
        %v3926 = vpop.f32.mrf.mxu0
        %v3927 = vadd.f32 %v3814, %v3926
        %v3928 = vpop.f32.mrf.mxu0
        %v3929 = vadd.f32 %v3816, %v3928
        %3930 = vdwg.mxu0
        %3931 = vmatprep.subr.bf16.mxu0 %v2851
        %3932 = vmatpush1.bf16.msra.mxu0 %v2850
        %3933 = vmatprep.subr.bf16.mxu0 %v2847
        %3934 = vmatpush1.bf16.msra.mxu0 %v2846
        %3935 = vmatprep.subr.bf16.mxu0 %v2843
        %3936 = vmatpush1.bf16.msra.mxu0 %v2842
        %3937 = vmatprep.subr.bf16.mxu0 %v2839
        %3938 = vmatpush1.bf16.msra.mxu0 %v2838
        %3939 = vmatprep.subr.bf16.mxu0 %v2835
        %3940 = vmatpush1.bf16.msra.mxu0 %v2834
        %3941 = vmatprep.subr.bf16.mxu0 %v2831
        %3942 = vmatpush1.bf16.msra.mxu0 %v2830
        %3943 = vmatprep.subr.bf16.mxu0 %v2827
        %3944 = vmatpush1.bf16.msra.mxu0 %v2826
        %3945 = vmatprep.subr.bf16.mxu0 %v2823
        %3946 = vmatpush1.bf16.msra.mxu0 %v2822
        %3947 = vmatprep.subr.bf16.mxu0 %v2883
        %3948 = vmatpush2.bf16.msra.mxu0 %v2882
        %3949 = vmatprep.subr.bf16.mxu0 %v2879
        %3950 = vmatpush2.bf16.msra.mxu0 %v2878
        %3951 = vmatprep.subr.bf16.mxu0 %v2875
        %3952 = vmatpush2.bf16.msra.mxu0 %v2874
        %3953 = vmatprep.subr.bf16.mxu0 %v2871
        %3954 = vmatpush2.bf16.msra.mxu0 %v2870
        %3955 = vmatprep.subr.bf16.mxu0 %v2867
        %3956 = vmatpush2.bf16.msra.mxu0 %v2866
        %3957 = vmatprep.subr.bf16.mxu0 %v2863
        %3958 = vmatpush2.bf16.msra.mxu0 %v2862
        %3959 = vmatprep.subr.bf16.mxu0 %v2859
        %3960 = vmatpush2.bf16.msra.mxu0 %v2858
        %3961 = vmatprep.subr.bf16.mxu0 %v2855
        %3962 = vmatpush2.bf16.msra.mxu0 %v2854
        %3963 = vmatprep.mubr.bf16.mxu0 %v1525
        %3964 = vmatmul.mubr.bf16.gmra.mxu0 %v1524
        %v3965 = vpop.f32.mrf.mxu0
        %v3966 = vadd.f32 %v3853, %v3965
        %v3967 = vpop.f32.mrf.mxu0
        %v3968 = vadd.f32 %v3855, %v3967
        %v3969 = vpop.f32.mrf.mxu0
        %v3970 = vadd.f32 %v3857, %v3969
        %v3971 = vpop.f32.mrf.mxu0
        %v3972 = vadd.f32 %v3859, %v3971
        %3973 = vmatprep.mubr.bf16.mxu0 %v1533
        %3974 = vmatmul.mubr.bf16.gmra.mxu0 %v1532
        %v3975 = vpop.f32.mrf.mxu0
        %v3976 = vadd.f32 %v3863, %v3975
        %v3977 = vpop.f32.mrf.mxu0
        %v3978 = vadd.f32 %v3865, %v3977
        %v3979 = vpop.f32.mrf.mxu0
        %v3980 = vadd.f32 %v3867, %v3979
        %v3981 = vpop.f32.mrf.mxu0
        %v3982 = vadd.f32 %v3869, %v3981
        %3983 = vmatprep.mubr.bf16.mxu0 %v1541
        %3984 = vmatmul.mubr.bf16.gmra.mxu0 %v1540
        %v3985 = vpop.f32.mrf.mxu0
        %v3986 = vadd.f32 %v3873, %v3985
        %v3987 = vpop.f32.mrf.mxu0
        %v3988 = vadd.f32 %v3875, %v3987
        %v3989 = vpop.f32.mrf.mxu0
        %v3990 = vadd.f32 %v3877, %v3989
        %v3991 = vpop.f32.mrf.mxu0
        %v3992 = vadd.f32 %v3879, %v3991
        %3993 = vmatprep.mubr.bf16.mxu0 %v1549
        %3994 = vmatmul.mubr.bf16.gmra.mxu0 %v1548
        %v3995 = vpop.f32.mrf.mxu0
        %v3996 = vadd.f32 %v3883, %v3995
        %v3997 = vpop.f32.mrf.mxu0
        %v3998 = vadd.f32 %v3885, %v3997
        %v3999 = vpop.f32.mrf.mxu0
        %v4000 = vadd.f32 %v3887, %v3999
        %v4001 = vpop.f32.mrf.mxu0
        %v4002 = vadd.f32 %v3889, %v4001
        %4003 = vmatprep.mubr.bf16.mxu0 %v1557
        %4004 = vmatmul.mubr.bf16.gmra.mxu0 %v1556
        %v4005 = vpop.f32.mrf.mxu0
        %v4006 = vadd.f32 %v3893, %v4005
        %v4007 = vpop.f32.mrf.mxu0
        %v4008 = vadd.f32 %v3895, %v4007
        %v4009 = vpop.f32.mrf.mxu0
        %v4010 = vadd.f32 %v3897, %v4009
        %v4011 = vpop.f32.mrf.mxu0
        %v4012 = vadd.f32 %v3899, %v4011
        %4013 = vmatprep.mubr.bf16.mxu0 %v1565
        %4014 = vmatmul.mubr.bf16.gmra.mxu0 %v1564
        %v4015 = vpop.f32.mrf.mxu0
        %v4016 = vadd.f32 %v3903, %v4015
        %v4017 = vpop.f32.mrf.mxu0
        %v4018 = vadd.f32 %v3905, %v4017
        %v4019 = vpop.f32.mrf.mxu0
        %v4020 = vadd.f32 %v3907, %v4019
        %v4021 = vpop.f32.mrf.mxu0
        %v4022 = vadd.f32 %v3909, %v4021
        %4023 = vmatprep.mubr.bf16.mxu0 %v1573
        %4024 = vmatmul.mubr.bf16.gmra.mxu0 %v1572
        %v4025 = vpop.f32.mrf.mxu0
        %v4026 = vadd.f32 %v3913, %v4025
        %v4027 = vpop.f32.mrf.mxu0
        %v4028 = vadd.f32 %v3915, %v4027
        %v4029 = vpop.f32.mrf.mxu0
        %v4030 = vadd.f32 %v3917, %v4029
        %v4031 = vpop.f32.mrf.mxu0
        %v4032 = vadd.f32 %v3919, %v4031
        %4033 = vmatprep.mubr.bf16.mxu0 %v1581
        %4034 = vmatmul.mubr.bf16.gmra.mxu0 %v1580
        %v4035 = vpop.f32.mrf.mxu0
        %v4036 = vadd.f32 %v3923, %v4035
        %v4037 = vpop.f32.mrf.mxu0
        %v4038 = vadd.f32 %v3925, %v4037
        %v4039 = vpop.f32.mrf.mxu0
        %v4040 = vadd.f32 %v3927, %v4039
        %v4041 = vpop.f32.mrf.mxu0
        %v4042 = vadd.f32 %v3929, %v4041
        %4043 = vdwg.mxu0
        %vm4044 = vcmp.gt.f32.partialorder %v3514, 0.0
        %vm4045 = vcmp.gt.f32.partialorder %v3516, 0.0
        %vm4046 = vcmp.gt.f32.partialorder %v3966, 0.0
        %vm4047 = vcmp.gt.f32.partialorder %v3968, 0.0
        %vm4048 = vcmp.gt.f32.partialorder %v3518, 0.0
        %vm4049 = vcmp.gt.f32.partialorder %v3520, 0.0
        %vm4050 = vcmp.gt.f32.partialorder %v3970, 0.0
        %vm4051 = vcmp.gt.f32.partialorder %v3972, 0.0
        %vm4052 = vcmp.gt.f32.partialorder %v3524, 0.0
        %vm4053 = vcmp.gt.f32.partialorder %v3526, 0.0
        %vm4054 = vcmp.gt.f32.partialorder %v3976, 0.0
        %vm4055 = vcmp.gt.f32.partialorder %v3978, 0.0
        %vm4056 = vcmp.gt.f32.partialorder %v3528, 0.0
        %vm4057 = vcmp.gt.f32.partialorder %v3530, 0.0
        %vm4058 = vcmp.gt.f32.partialorder %v3980, 0.0
        %vm4059 = vcmp.gt.f32.partialorder %v3982, 0.0
        %vm4060 = vcmp.gt.f32.partialorder %v3534, 0.0
        %vm4061 = vcmp.gt.f32.partialorder %v3536, 0.0
        %vm4062 = vcmp.gt.f32.partialorder %v3986, 0.0
        %vm4063 = vcmp.gt.f32.partialorder %v3988, 0.0
        %vm4064 = vcmp.gt.f32.partialorder %v3538, 0.0
        %vm4065 = vcmp.gt.f32.partialorder %v3540, 0.0
        %vm4066 = vcmp.gt.f32.partialorder %v3990, 0.0
        %vm4067 = vcmp.gt.f32.partialorder %v3992, 0.0
        %vm4068 = vcmp.gt.f32.partialorder %v3544, 0.0
        %vm4069 = vcmp.gt.f32.partialorder %v3546, 0.0
        %vm4070 = vcmp.gt.f32.partialorder %v3996, 0.0
        %vm4071 = vcmp.gt.f32.partialorder %v3998, 0.0
        %vm4072 = vcmp.gt.f32.partialorder %v3548, 0.0
        %vm4073 = vcmp.gt.f32.partialorder %v3550, 0.0
        %vm4074 = vcmp.gt.f32.partialorder %v4000, 0.0
        %vm4075 = vcmp.gt.f32.partialorder %v4002, 0.0
        %vm4076 = vcmp.gt.f32.partialorder %v3554, 0.0
        %vm4077 = vcmp.gt.f32.partialorder %v3556, 0.0
        %vm4078 = vcmp.gt.f32.partialorder %v4006, 0.0
        %vm4079 = vcmp.gt.f32.partialorder %v4008, 0.0
        %vm4080 = vcmp.gt.f32.partialorder %v3558, 0.0
        %vm4081 = vcmp.gt.f32.partialorder %v3560, 0.0
        %vm4082 = vcmp.gt.f32.partialorder %v4010, 0.0
        %vm4083 = vcmp.gt.f32.partialorder %v4012, 0.0
        %vm4084 = vcmp.gt.f32.partialorder %v3564, 0.0
        %vm4085 = vcmp.gt.f32.partialorder %v3566, 0.0
        %vm4086 = vcmp.gt.f32.partialorder %v4016, 0.0
        %vm4087 = vcmp.gt.f32.partialorder %v4018, 0.0
        %vm4088 = vcmp.gt.f32.partialorder %v3568, 0.0
        %vm4089 = vcmp.gt.f32.partialorder %v3570, 0.0
        %vm4090 = vcmp.gt.f32.partialorder %v4020, 0.0
        %vm4091 = vcmp.gt.f32.partialorder %v4022, 0.0
        %vm4092 = vcmp.gt.f32.partialorder %v3574, 0.0
        %vm4093 = vcmp.gt.f32.partialorder %v3576, 0.0
        %vm4094 = vcmp.gt.f32.partialorder %v4026, 0.0
        %vm4095 = vcmp.gt.f32.partialorder %v4028, 0.0
        %vm4096 = vcmp.gt.f32.partialorder %v3578, 0.0
        %vm4097 = vcmp.gt.f32.partialorder %v3580, 0.0
        %vm4098 = vcmp.gt.f32.partialorder %v4030, 0.0
        %vm4099 = vcmp.gt.f32.partialorder %v4032, 0.0
        %vm4100 = vcmp.gt.f32.partialorder %v3584, 0.0
        %vm4101 = vcmp.gt.f32.partialorder %v3586, 0.0
        %vm4102 = vcmp.gt.f32.partialorder %v4036, 0.0
        %vm4103 = vcmp.gt.f32.partialorder %v4038, 0.0
        %vm4104 = vcmp.gt.f32.partialorder %v3588, 0.0
        %vm4105 = vcmp.gt.f32.partialorder %v3590, 0.0
        %vm4106 = vcmp.gt.f32.partialorder %v4040, 0.0
        %vm4107 = vcmp.gt.f32.partialorder %v4042, 0.0
        %v4108 = vmul.f32 %v3514, 0.2
        %v4109 = vmul.f32 %v3516, 0.2
        %v4110 = vmul.f32 %v3966, 0.2
        %v4111 = vmul.f32 %v3968, 0.2
        %v4112 = vmul.f32 %v3518, 0.2
        %v4113 = vmul.f32 %v3520, 0.2
        %v4114 = vmul.f32 %v3970, 0.2
        %v4115 = vmul.f32 %v3972, 0.2
        %v4116 = vmul.f32 %v3524, 0.2
        %v4117 = vmul.f32 %v3526, 0.2
        %v4118 = vmul.f32 %v3976, 0.2
        %v4119 = vmul.f32 %v3978, 0.2
        %v4120 = vmul.f32 %v3528, 0.2
        %v4121 = vmul.f32 %v3530, 0.2
        %v4122 = vmul.f32 %v3980, 0.2
        %v4123 = vmul.f32 %v3982, 0.2
        %v4124 = vmul.f32 %v3534, 0.2
        %v4125 = vmul.f32 %v3536, 0.2
        %v4126 = vmul.f32 %v3986, 0.2
        %v4127 = vmul.f32 %v3988, 0.2
        %v4128 = vmul.f32 %v3538, 0.2
        %v4129 = vmul.f32 %v3540, 0.2
        %v4130 = vmul.f32 %v3990, 0.2
        %v4131 = vmul.f32 %v3992, 0.2
        %v4132 = vmul.f32 %v3544, 0.2
        %v4133 = vmul.f32 %v3546, 0.2
        %v4134 = vmul.f32 %v3996, 0.2
        %v4135 = vmul.f32 %v3998, 0.2
        %v4136 = vmul.f32 %v3548, 0.2
        %v4137 = vmul.f32 %v3550, 0.2
        %v4138 = vmul.f32 %v4000, 0.2
        %v4139 = vmul.f32 %v4002, 0.2
        %v4140 = vmul.f32 %v3554, 0.2
        %v4141 = vmul.f32 %v3556, 0.2
        %v4142 = vmul.f32 %v4006, 0.2
        %v4143 = vmul.f32 %v4008, 0.2
        %v4144 = vmul.f32 %v3558, 0.2
        %v4145 = vmul.f32 %v3560, 0.2
        %v4146 = vmul.f32 %v4010, 0.2
        %v4147 = vmul.f32 %v4012, 0.2
        %v4148 = vmul.f32 %v3564, 0.2
        %v4149 = vmul.f32 %v3566, 0.2
        %v4150 = vmul.f32 %v4016, 0.2
        %v4151 = vmul.f32 %v4018, 0.2
        %v4152 = vmul.f32 %v3568, 0.2
        %v4153 = vmul.f32 %v3570, 0.2
        %v4154 = vmul.f32 %v4020, 0.2
        %v4155 = vmul.f32 %v4022, 0.2
        %v4156 = vmul.f32 %v3574, 0.2
        %v4157 = vmul.f32 %v3576, 0.2
        %v4158 = vmul.f32 %v4026, 0.2
        %v4159 = vmul.f32 %v4028, 0.2
        %v4160 = vmul.f32 %v3578, 0.2
        %v4161 = vmul.f32 %v3580, 0.2
        %v4162 = vmul.f32 %v4030, 0.2
        %v4163 = vmul.f32 %v4032, 0.2
        %v4164 = vmul.f32 %v3584, 0.2
        %v4165 = vmul.f32 %v3586, 0.2
        %v4166 = vmul.f32 %v4036, 0.2
        %v4167 = vmul.f32 %v4038, 0.2
        %v4168 = vmul.f32 %v3588, 0.2
        %v4169 = vmul.f32 %v3590, 0.2
        %v4170 = vmul.f32 %v4040, 0.2
        %v4171 = vmul.f32 %v4042, 0.2
        %v4172 = vsel %vm4044, %v3514, %v4108
        %v4173 = vsel %vm4045, %v3516, %v4109
        %v4174 = vsel %vm4046, %v3966, %v4110
        %v4175 = vsel %vm4047, %v3968, %v4111
        %v4176 = vsel %vm4048, %v3518, %v4112
        %v4177 = vsel %vm4049, %v3520, %v4113
        %v4178 = vsel %vm4050, %v3970, %v4114
        %v4179 = vsel %vm4051, %v3972, %v4115
        %v4180 = vsel %vm4052, %v3524, %v4116
        %v4181 = vsel %vm4053, %v3526, %v4117
        %v4182 = vsel %vm4054, %v3976, %v4118
        %v4183 = vsel %vm4055, %v3978, %v4119
        %v4184 = vsel %vm4056, %v3528, %v4120
        %v4185 = vsel %vm4057, %v3530, %v4121
        %v4186 = vsel %vm4058, %v3980, %v4122
        %v4187 = vsel %vm4059, %v3982, %v4123
        %v4188 = vsel %vm4060, %v3534, %v4124
        %v4189 = vsel %vm4061, %v3536, %v4125
        %v4190 = vsel %vm4062, %v3986, %v4126
        %v4191 = vsel %vm4063, %v3988, %v4127
        %v4192 = vsel %vm4064, %v3538, %v4128
        %v4193 = vsel %vm4065, %v3540, %v4129
        %v4194 = vsel %vm4066, %v3990, %v4130
        %v4195 = vsel %vm4067, %v3992, %v4131
        %v4196 = vsel %vm4068, %v3544, %v4132
        %v4197 = vsel %vm4069, %v3546, %v4133
        %v4198 = vsel %vm4070, %v3996, %v4134
        %v4199 = vsel %vm4071, %v3998, %v4135
        %v4200 = vsel %vm4072, %v3548, %v4136
        %v4201 = vsel %vm4073, %v3550, %v4137
        %v4202 = vsel %vm4074, %v4000, %v4138
        %v4203 = vsel %vm4075, %v4002, %v4139
        %v4204 = vsel %vm4076, %v3554, %v4140
        %v4205 = vsel %vm4077, %v3556, %v4141
        %v4206 = vsel %vm4078, %v4006, %v4142
        %v4207 = vsel %vm4079, %v4008, %v4143
        %v4208 = vsel %vm4080, %v3558, %v4144
        %v4209 = vsel %vm4081, %v3560, %v4145
        %v4210 = vsel %vm4082, %v4010, %v4146
        %v4211 = vsel %vm4083, %v4012, %v4147
        %v4212 = vsel %vm4084, %v3564, %v4148
        %v4213 = vsel %vm4085, %v3566, %v4149
        %v4214 = vsel %vm4086, %v4016, %v4150
        %v4215 = vsel %vm4087, %v4018, %v4151
        %v4216 = vsel %vm4088, %v3568, %v4152
        %v4217 = vsel %vm4089, %v3570, %v4153
        %v4218 = vsel %vm4090, %v4020, %v4154
        %v4219 = vsel %vm4091, %v4022, %v4155
        %v4220 = vsel %vm4092, %v3574, %v4156
        %v4221 = vsel %vm4093, %v3576, %v4157
        %v4222 = vsel %vm4094, %v4026, %v4158
        %v4223 = vsel %vm4095, %v4028, %v4159
        %v4224 = vsel %vm4096, %v3578, %v4160
        %v4225 = vsel %vm4097, %v3580, %v4161
        %v4226 = vsel %vm4098, %v4030, %v4162
        %v4227 = vsel %vm4099, %v4032, %v4163
        %v4228 = vsel %vm4100, %v3584, %v4164
        %v4229 = vsel %vm4101, %v3586, %v4165
        %v4230 = vsel %vm4102, %v4036, %v4166
        %v4231 = vsel %vm4103, %v4038, %v4167
        %v4232 = vsel %vm4104, %v3588, %v4168
        %v4233 = vsel %vm4105, %v3590, %v4169
        %v4234 = vsel %vm4106, %v4040, %v4170
        %v4235 = vsel %vm4107, %v4042, %v4171
        %v4236 = vpack.c.bf16 %v4176, %v4172
        %v4237 = vpack.c.bf16 %v4177, %v4173
        %v4238 = vpack.c.bf16 %v4178, %v4174
        %v4239 = vpack.c.bf16 %v4179, %v4175
        %v4240 = vpack.c.bf16 %v4184, %v4180
        %v4241 = vpack.c.bf16 %v4185, %v4181
        %v4242 = vpack.c.bf16 %v4186, %v4182
        %v4243 = vpack.c.bf16 %v4187, %v4183
        %v4244 = vpack.c.bf16 %v4192, %v4188
        %v4245 = vpack.c.bf16 %v4193, %v4189
        %v4246 = vpack.c.bf16 %v4194, %v4190
        %v4247 = vpack.c.bf16 %v4195, %v4191
        %v4248 = vpack.c.bf16 %v4200, %v4196
        %v4249 = vpack.c.bf16 %v4201, %v4197
        %v4250 = vpack.c.bf16 %v4202, %v4198
        %v4251 = vpack.c.bf16 %v4203, %v4199
        %v4252 = vpack.c.bf16 %v4208, %v4204
        %v4253 = vpack.c.bf16 %v4209, %v4205
        %v4254 = vpack.c.bf16 %v4210, %v4206
        %v4255 = vpack.c.bf16 %v4211, %v4207
        %v4256 = vpack.c.bf16 %v4216, %v4212
        %v4257 = vpack.c.bf16 %v4217, %v4213
        %v4258 = vpack.c.bf16 %v4218, %v4214
        %v4259 = vpack.c.bf16 %v4219, %v4215
        %v4260 = vpack.c.bf16 %v4224, %v4220
        %v4261 = vpack.c.bf16 %v4225, %v4221
        %v4262 = vpack.c.bf16 %v4226, %v4222
        %v4263 = vpack.c.bf16 %v4227, %v4223
        %v4264 = vpack.c.bf16 %v4232, %v4228
        %v4265 = vpack.c.bf16 %v4233, %v4229
        %v4266 = vpack.c.bf16 %v4234, %v4230
        %v4267 = vpack.c.bf16 %v4235, %v4231
        %v4268 = vld [vmem:[#allocation4] sm:$0xff]
        %v4269 = vld [vmem:[#allocation4 + $0x8] sm:$0xff]
        %v4270 = vld [vmem:[#allocation4 + $0x10] sm:$0xff]
        %v4271 = vld [vmem:[#allocation4 + $0x18] sm:$0xff]
        %v4272 = vld [vmem:[#allocation4 + $0x20] sm:$0xff]
        %v4273 = vld [vmem:[#allocation4 + $0x28] sm:$0xff]
        %v4274 = vld [vmem:[#allocation4 + $0x30] sm:$0xff]
        %v4275 = vld [vmem:[#allocation4 + $0x38] sm:$0xff]
        %v4276 = vld [vmem:[#allocation4 + $0x40] sm:$0xff]
        %v4277 = vld [vmem:[#allocation4 + $0x48] sm:$0xff]
        %v4278 = vld [vmem:[#allocation4 + $0x50] sm:$0xff]
        %v4279 = vld [vmem:[#allocation4 + $0x58] sm:$0xff]
        %v4280 = vld [vmem:[#allocation4 + $0x60] sm:$0xff]
        %v4281 = vld [vmem:[#allocation4 + $0x68] sm:$0xff]
        %v4282 = vld [vmem:[#allocation4 + $0x70] sm:$0xff]
        %v4283 = vld [vmem:[#allocation4 + $0x78] sm:$0xff]
        %v4284 = vld [vmem:[#allocation4 + $0x80] sm:$0xff]
        %v4285 = vld [vmem:[#allocation4 + $0x88] sm:$0xff]
        %v4286 = vld [vmem:[#allocation4 + $0x90] sm:$0xff]
        %v4287 = vld [vmem:[#allocation4 + $0x98] sm:$0xff]
        %v4288 = vld [vmem:[#allocation4 + $0xa0] sm:$0xff]
        %v4289 = vld [vmem:[#allocation4 + $0xa8] sm:$0xff]
        %v4290 = vld [vmem:[#allocation4 + $0xb0] sm:$0xff]
        %v4291 = vld [vmem:[#allocation4 + $0xb8] sm:$0xff]
        %v4292 = vld [vmem:[#allocation4 + $0xc0] sm:$0xff]
        %v4293 = vld [vmem:[#allocation4 + $0xc8] sm:$0xff]
        %v4294 = vld [vmem:[#allocation4 + $0xd0] sm:$0xff]
        %v4295 = vld [vmem:[#allocation4 + $0xd8] sm:$0xff]
        %v4296 = vld [vmem:[#allocation4 + $0xe0] sm:$0xff]
        %v4297 = vld [vmem:[#allocation4 + $0xe8] sm:$0xff]
        %v4298 = vld [vmem:[#allocation4 + $0xf0] sm:$0xff]
        %v4299 = vld [vmem:[#allocation4 + $0xf8] sm:$0xff]
        %v4300 = vld [vmem:[#allocation4 + $0x100] sm:$0xff]
        %v4301 = vld [vmem:[#allocation4 + $0x108] sm:$0xff]
        %v4302 = vld [vmem:[#allocation4 + $0x110] sm:$0xff]
        %v4303 = vld [vmem:[#allocation4 + $0x118] sm:$0xff]
        %v4304 = vld [vmem:[#allocation4 + $0x120] sm:$0xff]
        %v4305 = vld [vmem:[#allocation4 + $0x128] sm:$0xff]
        %v4306 = vld [vmem:[#allocation4 + $0x130] sm:$0xff]
        %v4307 = vld [vmem:[#allocation4 + $0x138] sm:$0xff]
        %v4308 = vld [vmem:[#allocation4 + $0x140] sm:$0xff]
        %v4309 = vld [vmem:[#allocation4 + $0x148] sm:$0xff]
        %v4310 = vld [vmem:[#allocation4 + $0x150] sm:$0xff]
        %v4311 = vld [vmem:[#allocation4 + $0x158] sm:$0xff]
        %v4312 = vld [vmem:[#allocation4 + $0x160] sm:$0xff]
        %v4313 = vld [vmem:[#allocation4 + $0x168] sm:$0xff]
        %v4314 = vld [vmem:[#allocation4 + $0x170] sm:$0xff]
        %v4315 = vld [vmem:[#allocation4 + $0x178] sm:$0xff]
        %v4316 = vld [vmem:[#allocation4 + $0x180] sm:$0xff]
        %v4317 = vld [vmem:[#allocation4 + $0x188] sm:$0xff]
        %v4318 = vld [vmem:[#allocation4 + $0x190] sm:$0xff]
        %v4319 = vld [vmem:[#allocation4 + $0x198] sm:$0xff]
        %v4320 = vld [vmem:[#allocation4 + $0x1a0] sm:$0xff]
        %v4321 = vld [vmem:[#allocation4 + $0x1a8] sm:$0xff]
        %v4322 = vld [vmem:[#allocation4 + $0x1b0] sm:$0xff]
        %v4323 = vld [vmem:[#allocation4 + $0x1b8] sm:$0xff]
        %v4324 = vld [vmem:[#allocation4 + $0x1c0] sm:$0xff]
        %v4325 = vld [vmem:[#allocation4 + $0x1c8] sm:$0xff]
        %v4326 = vld [vmem:[#allocation4 + $0x1d0] sm:$0xff]
        %v4327 = vld [vmem:[#allocation4 + $0x1d8] sm:$0xff]
        %v4328 = vld [vmem:[#allocation4 + $0x1e0] sm:$0xff]
        %v4329 = vld [vmem:[#allocation4 + $0x1e8] sm:$0xff]
        %v4330 = vld [vmem:[#allocation4 + $0x1f0] sm:$0xff]
        %v4331 = vld [vmem:[#allocation4 + $0x1f8] sm:$0xff]
        %v4332 = vld [vmem:[%s6] sm:$0x3]
        %v4334 = vlaneseq
        %v4335 = vshrl.u32 %v4334, 7
        %v4336 = vsub.s32 0, %v4335
        %v4337 = vrot.slane %v4332, %v4336
        %v4338 = vlaneseq
        %v4339 = vshrl.u32 %v4338, 7
        %v4340 = vsub.s32 1, %v4339
        %v4341 = vrot.slane %v4332, %v4340
        %v4408 = vunpack.c.l.b16 %v4268
        %v4409 = vunpack.c.h.b16 %v4268
        %v4410 = vunpack.c.l.b16 %v4269
        %v4411 = vunpack.c.h.b16 %v4269
        %v4412 = vunpack.c.l.b16 %v4270
        %v4413 = vunpack.c.h.b16 %v4270
        %v4414 = vunpack.c.l.b16 %v4271
        %v4415 = vunpack.c.h.b16 %v4271
        %v4416 = vunpack.c.l.b16 %v4272
        %v4417 = vunpack.c.h.b16 %v4272
        %v4418 = vunpack.c.l.b16 %v4273
        %v4419 = vunpack.c.h.b16 %v4273
        %v4420 = vunpack.c.l.b16 %v4274
        %v4421 = vunpack.c.h.b16 %v4274
        %v4422 = vunpack.c.l.b16 %v4275
        %v4423 = vunpack.c.h.b16 %v4275
        %v4424 = vunpack.c.l.b16 %v4276
        %v4425 = vunpack.c.h.b16 %v4276
        %v4426 = vunpack.c.l.b16 %v4277
        %v4427 = vunpack.c.h.b16 %v4277
        %v4428 = vunpack.c.l.b16 %v4278
        %v4429 = vunpack.c.h.b16 %v4278
        %v4430 = vunpack.c.l.b16 %v4279
        %v4431 = vunpack.c.h.b16 %v4279
        %v4432 = vunpack.c.l.b16 %v4280
        %v4433 = vunpack.c.h.b16 %v4280
        %v4434 = vunpack.c.l.b16 %v4281
        %v4435 = vunpack.c.h.b16 %v4281
        %v4436 = vunpack.c.l.b16 %v4282
        %v4437 = vunpack.c.h.b16 %v4282
        %v4438 = vunpack.c.l.b16 %v4283
        %v4439 = vunpack.c.h.b16 %v4283
        %v4440 = vunpack.c.l.b16 %v4284
        %v4441 = vunpack.c.h.b16 %v4284
        %v4442 = vunpack.c.l.b16 %v4285
        %v4443 = vunpack.c.h.b16 %v4285
        %v4444 = vunpack.c.l.b16 %v4286
        %v4445 = vunpack.c.h.b16 %v4286
        %v4446 = vunpack.c.l.b16 %v4287
        %v4447 = vunpack.c.h.b16 %v4287
        %v4448 = vunpack.c.l.b16 %v4288
        %v4449 = vunpack.c.h.b16 %v4288
        %v4450 = vunpack.c.l.b16 %v4289
        %v4451 = vunpack.c.h.b16 %v4289
        %v4452 = vunpack.c.l.b16 %v4290
        %v4453 = vunpack.c.h.b16 %v4290
        %v4454 = vunpack.c.l.b16 %v4291
        %v4455 = vunpack.c.h.b16 %v4291
        %v4456 = vunpack.c.l.b16 %v4292
        %v4457 = vunpack.c.h.b16 %v4292
        %v4458 = vunpack.c.l.b16 %v4293
        %v4459 = vunpack.c.h.b16 %v4293
        %v4460 = vunpack.c.l.b16 %v4294
        %v4461 = vunpack.c.h.b16 %v4294
        %v4462 = vunpack.c.l.b16 %v4295
        %v4463 = vunpack.c.h.b16 %v4295
        %v4464 = vunpack.c.l.b16 %v4296
        %v4465 = vunpack.c.h.b16 %v4296
        %v4466 = vunpack.c.l.b16 %v4297
        %v4467 = vunpack.c.h.b16 %v4297
        %v4468 = vunpack.c.l.b16 %v4298
        %v4469 = vunpack.c.h.b16 %v4298
        %v4470 = vunpack.c.l.b16 %v4299
        %v4471 = vunpack.c.h.b16 %v4299
        %v4472 = vunpack.c.l.b16 %v4300
        %v4473 = vunpack.c.h.b16 %v4300
        %v4474 = vunpack.c.l.b16 %v4301
        %v4475 = vunpack.c.h.b16 %v4301
        %v4476 = vunpack.c.l.b16 %v4302
        %v4477 = vunpack.c.h.b16 %v4302
        %v4478 = vunpack.c.l.b16 %v4303
        %v4479 = vunpack.c.h.b16 %v4303
        %v4480 = vunpack.c.l.b16 %v4304
        %v4481 = vunpack.c.h.b16 %v4304
        %v4482 = vunpack.c.l.b16 %v4305
        %v4483 = vunpack.c.h.b16 %v4305
        %v4484 = vunpack.c.l.b16 %v4306
        %v4485 = vunpack.c.h.b16 %v4306
        %v4486 = vunpack.c.l.b16 %v4307
        %v4487 = vunpack.c.h.b16 %v4307
        %v4488 = vunpack.c.l.b16 %v4308
        %v4489 = vunpack.c.h.b16 %v4308
        %v4490 = vunpack.c.l.b16 %v4309
        %v4491 = vunpack.c.h.b16 %v4309
        %v4492 = vunpack.c.l.b16 %v4310
        %v4493 = vunpack.c.h.b16 %v4310
        %v4494 = vunpack.c.l.b16 %v4311
        %v4495 = vunpack.c.h.b16 %v4311
        %v4496 = vunpack.c.l.b16 %v4312
        %v4497 = vunpack.c.h.b16 %v4312
        %v4498 = vunpack.c.l.b16 %v4313
        %v4499 = vunpack.c.h.b16 %v4313
        %v4500 = vunpack.c.l.b16 %v4314
        %v4501 = vunpack.c.h.b16 %v4314
        %v4502 = vunpack.c.l.b16 %v4315
        %v4503 = vunpack.c.h.b16 %v4315
        %v4504 = vunpack.c.l.b16 %v4316
        %v4505 = vunpack.c.h.b16 %v4316
        %v4506 = vunpack.c.l.b16 %v4317
        %v4507 = vunpack.c.h.b16 %v4317
        %v4508 = vunpack.c.l.b16 %v4318
        %v4509 = vunpack.c.h.b16 %v4318
        %v4510 = vunpack.c.l.b16 %v4319
        %v4511 = vunpack.c.h.b16 %v4319
        %v4512 = vunpack.c.l.b16 %v4320
        %v4513 = vunpack.c.h.b16 %v4320
        %v4514 = vunpack.c.l.b16 %v4321
        %v4515 = vunpack.c.h.b16 %v4321
        %v4516 = vunpack.c.l.b16 %v4322
        %v4517 = vunpack.c.h.b16 %v4322
        %v4518 = vunpack.c.l.b16 %v4323
        %v4519 = vunpack.c.h.b16 %v4323
        %v4520 = vunpack.c.l.b16 %v4324
        %v4521 = vunpack.c.h.b16 %v4324
        %v4522 = vunpack.c.l.b16 %v4325
        %v4523 = vunpack.c.h.b16 %v4325
        %v4524 = vunpack.c.l.b16 %v4326
        %v4525 = vunpack.c.h.b16 %v4326
        %v4526 = vunpack.c.l.b16 %v4327
        %v4527 = vunpack.c.h.b16 %v4327
        %v4528 = vunpack.c.l.b16 %v4328
        %v4529 = vunpack.c.h.b16 %v4328
        %v4530 = vunpack.c.l.b16 %v4329
        %v4531 = vunpack.c.h.b16 %v4329
        %v4532 = vunpack.c.l.b16 %v4330
        %v4533 = vunpack.c.h.b16 %v4330
        %v4534 = vunpack.c.l.b16 %v4331
        %v4535 = vunpack.c.h.b16 %v4331
        %v4536 = vpack.c.b16 %v4410, %v4408
        %v4537 = vpack.c.b16 %v4411, %v4409
        %v4538 = vpack.c.b16 %v4414, %v4412
        %v4539 = vpack.c.b16 %v4415, %v4413
        %v4540 = vpack.c.b16 %v4418, %v4416
        %v4541 = vpack.c.b16 %v4419, %v4417
        %v4542 = vpack.c.b16 %v4422, %v4420
        %v4543 = vpack.c.b16 %v4423, %v4421
        %v4544 = vpack.c.b16 %v4426, %v4424
        %v4545 = vpack.c.b16 %v4427, %v4425
        %v4546 = vpack.c.b16 %v4430, %v4428
        %v4547 = vpack.c.b16 %v4431, %v4429
        %v4548 = vpack.c.b16 %v4434, %v4432
        %v4549 = vpack.c.b16 %v4435, %v4433
        %v4550 = vpack.c.b16 %v4438, %v4436
        %v4551 = vpack.c.b16 %v4439, %v4437
        %v4552 = vpack.c.b16 %v4442, %v4440
        %v4553 = vpack.c.b16 %v4443, %v4441
        %v4554 = vpack.c.b16 %v4446, %v4444
        %v4555 = vpack.c.b16 %v4447, %v4445
        %v4556 = vpack.c.b16 %v4450, %v4448
        %v4557 = vpack.c.b16 %v4451, %v4449
        %v4558 = vpack.c.b16 %v4454, %v4452
        %v4559 = vpack.c.b16 %v4455, %v4453
        %v4560 = vpack.c.b16 %v4458, %v4456
        %v4561 = vpack.c.b16 %v4459, %v4457
        %v4562 = vpack.c.b16 %v4462, %v4460
        %v4563 = vpack.c.b16 %v4463, %v4461
        %v4564 = vpack.c.b16 %v4466, %v4464
        %v4565 = vpack.c.b16 %v4467, %v4465
        %v4566 = vpack.c.b16 %v4470, %v4468
        %v4567 = vpack.c.b16 %v4471, %v4469
        %v4568 = vpack.c.b16 %v4474, %v4472
        %v4569 = vpack.c.b16 %v4475, %v4473
        %v4570 = vpack.c.b16 %v4478, %v4476
        %v4571 = vpack.c.b16 %v4479, %v4477
        %v4572 = vpack.c.b16 %v4482, %v4480
        %v4573 = vpack.c.b16 %v4483, %v4481
        %v4574 = vpack.c.b16 %v4486, %v4484
        %v4575 = vpack.c.b16 %v4487, %v4485
        %v4576 = vpack.c.b16 %v4490, %v4488
        %v4577 = vpack.c.b16 %v4491, %v4489
        %v4578 = vpack.c.b16 %v4494, %v4492
        %v4579 = vpack.c.b16 %v4495, %v4493
        %v4580 = vpack.c.b16 %v4498, %v4496
        %v4581 = vpack.c.b16 %v4499, %v4497
        %v4582 = vpack.c.b16 %v4502, %v4500
        %v4583 = vpack.c.b16 %v4503, %v4501
        %v4584 = vpack.c.b16 %v4506, %v4504
        %v4585 = vpack.c.b16 %v4507, %v4505
        %v4586 = vpack.c.b16 %v4510, %v4508
        %v4587 = vpack.c.b16 %v4511, %v4509
        %v4588 = vpack.c.b16 %v4514, %v4512
        %v4589 = vpack.c.b16 %v4515, %v4513
        %v4590 = vpack.c.b16 %v4518, %v4516
        %v4591 = vpack.c.b16 %v4519, %v4517
        %v4592 = vpack.c.b16 %v4522, %v4520
        %v4593 = vpack.c.b16 %v4523, %v4521
        %v4594 = vpack.c.b16 %v4526, %v4524
        %v4595 = vpack.c.b16 %v4527, %v4525
        %v4596 = vpack.c.b16 %v4530, %v4528
        %v4597 = vpack.c.b16 %v4531, %v4529
        %v4598 = vpack.c.b16 %v4534, %v4532
        %v4599 = vpack.c.b16 %v4535, %v4533
        %4664 = vmatprep.subr.bf16.mxu0 %v4551
        %4665 = vmatpush1.bf16.msra.mxu0 %v4550
        %4666 = vmatprep.subr.bf16.mxu0 %v4549
        %4667 = vmatpush1.bf16.msra.mxu0 %v4548
        %4668 = vmatprep.subr.bf16.mxu0 %v4547
        %4669 = vmatpush1.bf16.msra.mxu0 %v4546
        %4670 = vmatprep.subr.bf16.mxu0 %v4545
        %4671 = vmatpush1.bf16.msra.mxu0 %v4544
        %4672 = vmatprep.subr.bf16.mxu0 %v4543
        %4673 = vmatpush1.bf16.msra.mxu0 %v4542
        %4674 = vmatprep.subr.bf16.mxu0 %v4541
        %4675 = vmatpush1.bf16.msra.mxu0 %v4540
        %4676 = vmatprep.subr.bf16.mxu0 %v4539
        %4677 = vmatpush1.bf16.msra.mxu0 %v4538
        %4678 = vmatprep.subr.bf16.mxu0 %v4537
        %4679 = vmatpush1.bf16.msra.mxu0 %v4536
        %4680 = vmatprep.subr.bf16.mxu0 %v4567
        %4681 = vmatpush2.bf16.msra.mxu0 %v4566
        %4682 = vmatprep.subr.bf16.mxu0 %v4565
        %4683 = vmatpush2.bf16.msra.mxu0 %v4564
        %4684 = vmatprep.subr.bf16.mxu0 %v4563
        %4685 = vmatpush2.bf16.msra.mxu0 %v4562
        %4686 = vmatprep.subr.bf16.mxu0 %v4561
        %4687 = vmatpush2.bf16.msra.mxu0 %v4560
        %4688 = vmatprep.subr.bf16.mxu0 %v4559
        %4689 = vmatpush2.bf16.msra.mxu0 %v4558
        %4690 = vmatprep.subr.bf16.mxu0 %v4557
        %4691 = vmatpush2.bf16.msra.mxu0 %v4556
        %4692 = vmatprep.subr.bf16.mxu0 %v4555
        %4693 = vmatpush2.bf16.msra.mxu0 %v4554
        %4694 = vmatprep.subr.bf16.mxu0 %v4553
        %4695 = vmatpush2.bf16.msra.mxu0 %v4552
        %4696 = vmatprep.mubr.bf16.mxu0 %v4237
        %4697 = vmatmul.mubr.bf16.gmra.mxu0 %v4236
        %v4698 = vpop.f32.mrf.mxu0
        %v4699 = vadd.f32 %v4337, %v4698
        %v4700 = vpop.f32.mrf.mxu0
        %v4701 = vadd.f32 %v4341, %v4700
        %v4702 = vpop.f32.mrf.mxu0
        %v4703 = vadd.f32 %v4337, %v4702
        %v4704 = vpop.f32.mrf.mxu0
        %v4705 = vadd.f32 %v4341, %v4704
        %4706 = vmatprep.mubr.bf16.mxu0 %v4241
        %4707 = vmatmul.mubr.bf16.gmra.mxu0 %v4240
        %v4708 = vpop.f32.mrf.mxu0
        %v4709 = vadd.f32 %v4337, %v4708
        %v4710 = vpop.f32.mrf.mxu0
        %v4711 = vadd.f32 %v4341, %v4710
        %v4712 = vpop.f32.mrf.mxu0
        %v4713 = vadd.f32 %v4337, %v4712
        %v4714 = vpop.f32.mrf.mxu0
        %v4715 = vadd.f32 %v4341, %v4714
        %4716 = vmatprep.mubr.bf16.mxu0 %v4245
        %4717 = vmatmul.mubr.bf16.gmra.mxu0 %v4244
        %v4718 = vpop.f32.mrf.mxu0
        %v4719 = vadd.f32 %v4337, %v4718
        %v4720 = vpop.f32.mrf.mxu0
        %v4721 = vadd.f32 %v4341, %v4720
        %v4722 = vpop.f32.mrf.mxu0
        %v4723 = vadd.f32 %v4337, %v4722
        %v4724 = vpop.f32.mrf.mxu0
        %v4725 = vadd.f32 %v4341, %v4724
        %4726 = vmatprep.mubr.bf16.mxu0 %v4249
        %4727 = vmatmul.mubr.bf16.gmra.mxu0 %v4248
        %v4728 = vpop.f32.mrf.mxu0
        %v4729 = vadd.f32 %v4337, %v4728
        %v4730 = vpop.f32.mrf.mxu0
        %v4731 = vadd.f32 %v4341, %v4730
        %v4732 = vpop.f32.mrf.mxu0
        %v4733 = vadd.f32 %v4337, %v4732
        %v4734 = vpop.f32.mrf.mxu0
        %v4735 = vadd.f32 %v4341, %v4734
        %4736 = vmatprep.mubr.bf16.mxu0 %v4253
        %4737 = vmatmul.mubr.bf16.gmra.mxu0 %v4252
        %v4738 = vpop.f32.mrf.mxu0
        %v4739 = vadd.f32 %v4337, %v4738
        %v4740 = vpop.f32.mrf.mxu0
        %v4741 = vadd.f32 %v4341, %v4740
        %v4742 = vpop.f32.mrf.mxu0
        %v4743 = vadd.f32 %v4337, %v4742
        %v4744 = vpop.f32.mrf.mxu0
        %v4745 = vadd.f32 %v4341, %v4744
        %4746 = vmatprep.mubr.bf16.mxu0 %v4257
        %4747 = vmatmul.mubr.bf16.gmra.mxu0 %v4256
        %v4748 = vpop.f32.mrf.mxu0
        %v4749 = vadd.f32 %v4337, %v4748
        %v4750 = vpop.f32.mrf.mxu0
        %v4751 = vadd.f32 %v4341, %v4750
        %v4752 = vpop.f32.mrf.mxu0
        %v4753 = vadd.f32 %v4337, %v4752
        %v4754 = vpop.f32.mrf.mxu0
        %v4755 = vadd.f32 %v4341, %v4754
        %4756 = vmatprep.mubr.bf16.mxu0 %v4261
        %4757 = vmatmul.mubr.bf16.gmra.mxu0 %v4260
        %v4758 = vpop.f32.mrf.mxu0
        %v4759 = vadd.f32 %v4337, %v4758
        %v4760 = vpop.f32.mrf.mxu0
        %v4761 = vadd.f32 %v4341, %v4760
        %v4762 = vpop.f32.mrf.mxu0
        %v4763 = vadd.f32 %v4337, %v4762
        %v4764 = vpop.f32.mrf.mxu0
        %v4765 = vadd.f32 %v4341, %v4764
        %4766 = vmatprep.mubr.bf16.mxu0 %v4265
        %4767 = vmatmul.mubr.bf16.gmra.mxu0 %v4264
        %v4768 = vpop.f32.mrf.mxu0
        %v4769 = vadd.f32 %v4337, %v4768
        %v4770 = vpop.f32.mrf.mxu0
        %v4771 = vadd.f32 %v4341, %v4770
        %v4772 = vpop.f32.mrf.mxu0
        %v4773 = vadd.f32 %v4337, %v4772
        %v4774 = vpop.f32.mrf.mxu0
        %v4775 = vadd.f32 %v4341, %v4774
        %4776 = vdwg.mxu0
        %4777 = vmatprep.subr.bf16.mxu0 %v4583
        %4778 = vmatpush1.bf16.msra.mxu0 %v4582
        %4779 = vmatprep.subr.bf16.mxu0 %v4581
        %4780 = vmatpush1.bf16.msra.mxu0 %v4580
        %4781 = vmatprep.subr.bf16.mxu0 %v4579
        %4782 = vmatpush1.bf16.msra.mxu0 %v4578
        %4783 = vmatprep.subr.bf16.mxu0 %v4577
        %4784 = vmatpush1.bf16.msra.mxu0 %v4576
        %4785 = vmatprep.subr.bf16.mxu0 %v4575
        %4786 = vmatpush1.bf16.msra.mxu0 %v4574
        %4787 = vmatprep.subr.bf16.mxu0 %v4573
        %4788 = vmatpush1.bf16.msra.mxu0 %v4572
        %4789 = vmatprep.subr.bf16.mxu0 %v4571
        %4790 = vmatpush1.bf16.msra.mxu0 %v4570
        %4791 = vmatprep.subr.bf16.mxu0 %v4569
        %4792 = vmatpush1.bf16.msra.mxu0 %v4568
        %4793 = vmatprep.subr.bf16.mxu0 %v4599
        %4794 = vmatpush2.bf16.msra.mxu0 %v4598
        %4795 = vmatprep.subr.bf16.mxu0 %v4597
        %4796 = vmatpush2.bf16.msra.mxu0 %v4596
        %4797 = vmatprep.subr.bf16.mxu0 %v4595
        %4798 = vmatpush2.bf16.msra.mxu0 %v4594
        %4799 = vmatprep.subr.bf16.mxu0 %v4593
        %4800 = vmatpush2.bf16.msra.mxu0 %v4592
        %4801 = vmatprep.subr.bf16.mxu0 %v4591
        %4802 = vmatpush2.bf16.msra.mxu0 %v4590
        %4803 = vmatprep.subr.bf16.mxu0 %v4589
        %4804 = vmatpush2.bf16.msra.mxu0 %v4588
        %4805 = vmatprep.subr.bf16.mxu0 %v4587
        %4806 = vmatpush2.bf16.msra.mxu0 %v4586
        %4807 = vmatprep.subr.bf16.mxu0 %v4585
        %4808 = vmatpush2.bf16.msra.mxu0 %v4584
        %4809 = vmatprep.mubr.bf16.mxu0 %v4239
        %4810 = vmatmul.mubr.bf16.gmra.mxu0 %v4238
        %v4811 = vpop.f32.mrf.mxu0
        %v4812 = vadd.f32 %v4699, %v4811
        %v4813 = vpop.f32.mrf.mxu0
        %v4814 = vadd.f32 %v4701, %v4813
        %v4815 = vpop.f32.mrf.mxu0
        %v4816 = vadd.f32 %v4703, %v4815
        %v4817 = vpop.f32.mrf.mxu0
        %v4818 = vadd.f32 %v4705, %v4817
        %4819 = vmatprep.mubr.bf16.mxu0 %v4243
        %4820 = vmatmul.mubr.bf16.gmra.mxu0 %v4242
        %v4821 = vpop.f32.mrf.mxu0
        %v4822 = vadd.f32 %v4709, %v4821
        %v4823 = vpop.f32.mrf.mxu0
        %v4824 = vadd.f32 %v4711, %v4823
        %v4825 = vpop.f32.mrf.mxu0
        %v4826 = vadd.f32 %v4713, %v4825
        %v4827 = vpop.f32.mrf.mxu0
        %v4828 = vadd.f32 %v4715, %v4827
        %4829 = vmatprep.mubr.bf16.mxu0 %v4247
        %4830 = vmatmul.mubr.bf16.gmra.mxu0 %v4246
        %v4831 = vpop.f32.mrf.mxu0
        %v4832 = vadd.f32 %v4719, %v4831
        %v4833 = vpop.f32.mrf.mxu0
        %v4834 = vadd.f32 %v4721, %v4833
        %v4835 = vpop.f32.mrf.mxu0
        %v4836 = vadd.f32 %v4723, %v4835
        %v4837 = vpop.f32.mrf.mxu0
        %v4838 = vadd.f32 %v4725, %v4837
        %4839 = vmatprep.mubr.bf16.mxu0 %v4251
        %4840 = vmatmul.mubr.bf16.gmra.mxu0 %v4250
        %v4841 = vpop.f32.mrf.mxu0
        %v4842 = vadd.f32 %v4729, %v4841
        %v4843 = vpop.f32.mrf.mxu0
        %v4844 = vadd.f32 %v4731, %v4843
        %v4845 = vpop.f32.mrf.mxu0
        %v4846 = vadd.f32 %v4733, %v4845
        %v4847 = vpop.f32.mrf.mxu0
        %v4848 = vadd.f32 %v4735, %v4847
        %4849 = vmatprep.mubr.bf16.mxu0 %v4255
        %4850 = vmatmul.mubr.bf16.gmra.mxu0 %v4254
        %v4851 = vpop.f32.mrf.mxu0
        %v4852 = vadd.f32 %v4739, %v4851
        %v4853 = vpop.f32.mrf.mxu0
        %v4854 = vadd.f32 %v4741, %v4853
        %v4855 = vpop.f32.mrf.mxu0
        %v4856 = vadd.f32 %v4743, %v4855
        %v4857 = vpop.f32.mrf.mxu0
        %v4858 = vadd.f32 %v4745, %v4857
        %4859 = vmatprep.mubr.bf16.mxu0 %v4259
        %4860 = vmatmul.mubr.bf16.gmra.mxu0 %v4258
        %v4861 = vpop.f32.mrf.mxu0
        %v4862 = vadd.f32 %v4749, %v4861
        %v4863 = vpop.f32.mrf.mxu0
        %v4864 = vadd.f32 %v4751, %v4863
        %v4865 = vpop.f32.mrf.mxu0
        %v4866 = vadd.f32 %v4753, %v4865
        %v4867 = vpop.f32.mrf.mxu0
        %v4868 = vadd.f32 %v4755, %v4867
        %4869 = vmatprep.mubr.bf16.mxu0 %v4263
        %4870 = vmatmul.mubr.bf16.gmra.mxu0 %v4262
        %v4871 = vpop.f32.mrf.mxu0
        %v4872 = vadd.f32 %v4759, %v4871
        %v4873 = vpop.f32.mrf.mxu0
        %v4874 = vadd.f32 %v4761, %v4873
        %v4875 = vpop.f32.mrf.mxu0
        %v4876 = vadd.f32 %v4763, %v4875
        %v4877 = vpop.f32.mrf.mxu0
        %v4878 = vadd.f32 %v4765, %v4877
        %4879 = vmatprep.mubr.bf16.mxu0 %v4267
        %4880 = vmatmul.mubr.bf16.gmra.mxu0 %v4266
        %v4881 = vpop.f32.mrf.mxu0
        %v4882 = vadd.f32 %v4769, %v4881
        %v4883 = vpop.f32.mrf.mxu0
        %v4884 = vadd.f32 %v4771, %v4883
        %v4885 = vpop.f32.mrf.mxu0
        %v4886 = vadd.f32 %v4773, %v4885
        %v4887 = vpop.f32.mrf.mxu0
        %v4888 = vadd.f32 %v4775, %v4887
        %4889 = vdwg.mxu0
        %vm4890 = vcmp.gt.f32.partialorder %v4812, 0.0
        %vm4891 = vcmp.gt.f32.partialorder %v4814, 0.0
        %vm4892 = vcmp.gt.f32.partialorder %v4816, 0.0
        %vm4893 = vcmp.gt.f32.partialorder %v4818, 0.0
        %vm4894 = vcmp.gt.f32.partialorder %v4822, 0.0
        %vm4895 = vcmp.gt.f32.partialorder %v4824, 0.0
        %vm4896 = vcmp.gt.f32.partialorder %v4826, 0.0
        %vm4897 = vcmp.gt.f32.partialorder %v4828, 0.0
        %vm4898 = vcmp.gt.f32.partialorder %v4832, 0.0
        %vm4899 = vcmp.gt.f32.partialorder %v4834, 0.0
        %vm4900 = vcmp.gt.f32.partialorder %v4836, 0.0
        %vm4901 = vcmp.gt.f32.partialorder %v4838, 0.0
        %vm4902 = vcmp.gt.f32.partialorder %v4842, 0.0
        %vm4903 = vcmp.gt.f32.partialorder %v4844, 0.0
        %vm4904 = vcmp.gt.f32.partialorder %v4846, 0.0
        %vm4905 = vcmp.gt.f32.partialorder %v4848, 0.0
        %vm4906 = vcmp.gt.f32.partialorder %v4852, 0.0
        %vm4907 = vcmp.gt.f32.partialorder %v4854, 0.0
        %vm4908 = vcmp.gt.f32.partialorder %v4856, 0.0
        %vm4909 = vcmp.gt.f32.partialorder %v4858, 0.0
        %vm4910 = vcmp.gt.f32.partialorder %v4862, 0.0
        %vm4911 = vcmp.gt.f32.partialorder %v4864, 0.0
        %vm4912 = vcmp.gt.f32.partialorder %v4866, 0.0
        %vm4913 = vcmp.gt.f32.partialorder %v4868, 0.0
        %vm4914 = vcmp.gt.f32.partialorder %v4872, 0.0
        %vm4915 = vcmp.gt.f32.partialorder %v4874, 0.0
        %vm4916 = vcmp.gt.f32.partialorder %v4876, 0.0
        %vm4917 = vcmp.gt.f32.partialorder %v4878, 0.0
        %vm4918 = vcmp.gt.f32.partialorder %v4882, 0.0
        %vm4919 = vcmp.gt.f32.partialorder %v4884, 0.0
        %vm4920 = vcmp.gt.f32.partialorder %v4886, 0.0
        %vm4921 = vcmp.gt.f32.partialorder %v4888, 0.0
        %v4922 = vmul.f32 %v4812, 0.2
        %v4923 = vmul.f32 %v4814, 0.2
        %v4924 = vmul.f32 %v4816, 0.2
        %v4925 = vmul.f32 %v4818, 0.2
        %v4926 = vmul.f32 %v4822, 0.2
        %v4927 = vmul.f32 %v4824, 0.2
        %v4928 = vmul.f32 %v4826, 0.2
        %v4929 = vmul.f32 %v4828, 0.2
        %v4930 = vmul.f32 %v4832, 0.2
        %v4931 = vmul.f32 %v4834, 0.2
        %v4932 = vmul.f32 %v4836, 0.2
        %v4933 = vmul.f32 %v4838, 0.2
        %v4934 = vmul.f32 %v4842, 0.2
        %v4935 = vmul.f32 %v4844, 0.2
        %v4936 = vmul.f32 %v4846, 0.2
        %v4937 = vmul.f32 %v4848, 0.2
        %v4938 = vmul.f32 %v4852, 0.2
        %v4939 = vmul.f32 %v4854, 0.2
        %v4940 = vmul.f32 %v4856, 0.2
        %v4941 = vmul.f32 %v4858, 0.2
        %v4942 = vmul.f32 %v4862, 0.2
        %v4943 = vmul.f32 %v4864, 0.2
        %v4944 = vmul.f32 %v4866, 0.2
        %v4945 = vmul.f32 %v4868, 0.2
        %v4946 = vmul.f32 %v4872, 0.2
        %v4947 = vmul.f32 %v4874, 0.2
        %v4948 = vmul.f32 %v4876, 0.2
        %v4949 = vmul.f32 %v4878, 0.2
        %v4950 = vmul.f32 %v4882, 0.2
        %v4951 = vmul.f32 %v4884, 0.2
        %v4952 = vmul.f32 %v4886, 0.2
        %v4953 = vmul.f32 %v4888, 0.2
        %v4954 = vsel %vm4890, %v4812, %v4922
        %v4955 = vsel %vm4891, %v4814, %v4923
        %v4956 = vsel %vm4892, %v4816, %v4924
        %v4957 = vsel %vm4893, %v4818, %v4925
        %v4958 = vsel %vm4894, %v4822, %v4926
        %v4959 = vsel %vm4895, %v4824, %v4927
        %v4960 = vsel %vm4896, %v4826, %v4928
        %v4961 = vsel %vm4897, %v4828, %v4929
        %v4962 = vsel %vm4898, %v4832, %v4930
        %v4963 = vsel %vm4899, %v4834, %v4931
        %v4964 = vsel %vm4900, %v4836, %v4932
        %v4965 = vsel %vm4901, %v4838, %v4933
        %v4966 = vsel %vm4902, %v4842, %v4934
        %v4967 = vsel %vm4903, %v4844, %v4935
        %v4968 = vsel %vm4904, %v4846, %v4936
        %v4969 = vsel %vm4905, %v4848, %v4937
        %v4970 = vsel %vm4906, %v4852, %v4938
        %v4971 = vsel %vm4907, %v4854, %v4939
        %v4972 = vsel %vm4908, %v4856, %v4940
        %v4973 = vsel %vm4909, %v4858, %v4941
        %v4974 = vsel %vm4910, %v4862, %v4942
        %v4975 = vsel %vm4911, %v4864, %v4943
        %v4976 = vsel %vm4912, %v4866, %v4944
        %v4977 = vsel %vm4913, %v4868, %v4945
        %v4978 = vsel %vm4914, %v4872, %v4946
        %v4979 = vsel %vm4915, %v4874, %v4947
        %v4980 = vsel %vm4916, %v4876, %v4948
        %v4981 = vsel %vm4917, %v4878, %v4949
        %v4982 = vsel %vm4918, %v4882, %v4950
        %v4983 = vsel %vm4919, %v4884, %v4951
        %v4984 = vsel %vm4920, %v4886, %v4952
        %v4985 = vsel %vm4921, %v4888, %v4953
        %v4986 = vpack.c.bf16 %v4956, %v4954
        %v4987 = vpack.c.bf16 %v4957, %v4955
        %v4988 = vpack.c.bf16 %v4960, %v4958
        %v4989 = vpack.c.bf16 %v4961, %v4959
        %v4990 = vpack.c.bf16 %v4964, %v4962
        %v4991 = vpack.c.bf16 %v4965, %v4963
        %v4992 = vpack.c.bf16 %v4968, %v4966
        %v4993 = vpack.c.bf16 %v4969, %v4967
        %v4994 = vpack.c.bf16 %v4972, %v4970
        %v4995 = vpack.c.bf16 %v4973, %v4971
        %v4996 = vpack.c.bf16 %v4976, %v4974
        %v4997 = vpack.c.bf16 %v4977, %v4975
        %v4998 = vpack.c.bf16 %v4980, %v4978
        %v4999 = vpack.c.bf16 %v4981, %v4979
        %v5000 = vpack.c.bf16 %v4984, %v4982
        %v5001 = vpack.c.bf16 %v4985, %v4983
        %v5002 = vld [vmem:[%s7] sm:$0xf]
        %v5003 = vld [vmem:[%s7 + $0x4] sm:$0xf]
        %v5004 = vld [vmem:[%s7 + $0x8] sm:$0xf]
        %v5005 = vld [vmem:[%s7 + $0xc] sm:$0xf]
        %v5006 = vld [vmem:[%s7 + $0x10] sm:$0xf]
        %v5007 = vld [vmem:[%s7 + $0x14] sm:$0xf]
        %v5008 = vld [vmem:[%s7 + $0x18] sm:$0xf]
        %v5009 = vld [vmem:[%s7 + $0x1c] sm:$0xf]
        %v5010 = vld [vmem:[%s7 + $0x20] sm:$0xf]
        %v5011 = vld [vmem:[%s7 + $0x24] sm:$0xf]
        %v5012 = vld [vmem:[%s7 + $0x28] sm:$0xf]
        %v5013 = vld [vmem:[%s7 + $0x2c] sm:$0xf]
        %v5014 = vld [vmem:[%s7 + $0x30] sm:$0xf]
        %v5015 = vld [vmem:[%s7 + $0x34] sm:$0xf]
        %v5016 = vld [vmem:[%s7 + $0x38] sm:$0xf]
        %v5017 = vld [vmem:[%s7 + $0x3c] sm:$0xf]
        %v5018 = vld [vmem:[%s7 + $0x40] sm:$0xf]
        %v5019 = vld [vmem:[%s7 + $0x44] sm:$0xf]
        %v5020 = vld [vmem:[%s7 + $0x48] sm:$0xf]
        %v5021 = vld [vmem:[%s7 + $0x4c] sm:$0xf]
        %v5022 = vld [vmem:[%s7 + $0x50] sm:$0xf]
        %v5023 = vld [vmem:[%s7 + $0x54] sm:$0xf]
        %v5024 = vld [vmem:[%s7 + $0x58] sm:$0xf]
        %v5025 = vld [vmem:[%s7 + $0x5c] sm:$0xf]
        %v5026 = vld [vmem:[%s7 + $0x60] sm:$0xf]
        %v5027 = vld [vmem:[%s7 + $0x64] sm:$0xf]
        %v5028 = vld [vmem:[%s7 + $0x68] sm:$0xf]
        %v5029 = vld [vmem:[%s7 + $0x6c] sm:$0xf]
        %v5030 = vld [vmem:[%s7 + $0x70] sm:$0xf]
        %v5031 = vld [vmem:[%s7 + $0x74] sm:$0xf]
        %v5032 = vld [vmem:[%s7 + $0x78] sm:$0xf]
        %v5033 = vld [vmem:[%s7 + $0x7c] sm:$0xf]
        %v5034 = vld [vmem:[%s8] sm:$0x1]
        %v5036 = vlaneseq
        %v5037 = vshrl.u32 %v5036, 7
        %v5038 = vsub.s32 0, %v5037
        %v5039 = vrot.slane %v5034, %v5038
        %v5073 = vunpack.c.l.b16 %v5002
        %v5074 = vunpack.c.l.b16 %v5003
        %v5075 = vunpack.c.l.b16 %v5004
        %v5076 = vunpack.c.l.b16 %v5005
        %v5077 = vunpack.c.l.b16 %v5006
        %v5078 = vunpack.c.l.b16 %v5007
        %v5079 = vunpack.c.l.b16 %v5008
        %v5080 = vunpack.c.l.b16 %v5009
        %v5081 = vunpack.c.l.b16 %v5010
        %v5082 = vunpack.c.l.b16 %v5011
        %v5083 = vunpack.c.l.b16 %v5012
        %v5084 = vunpack.c.l.b16 %v5013
        %v5085 = vunpack.c.l.b16 %v5014
        %v5086 = vunpack.c.l.b16 %v5015
        %v5087 = vunpack.c.l.b16 %v5016
        %v5088 = vunpack.c.l.b16 %v5017
        %v5089 = vunpack.c.l.b16 %v5018
        %v5090 = vunpack.c.l.b16 %v5019
        %v5091 = vunpack.c.l.b16 %v5020
        %v5092 = vunpack.c.l.b16 %v5021
        %v5093 = vunpack.c.l.b16 %v5022
        %v5094 = vunpack.c.l.b16 %v5023
        %v5095 = vunpack.c.l.b16 %v5024
        %v5096 = vunpack.c.l.b16 %v5025
        %v5097 = vunpack.c.l.b16 %v5026
        %v5098 = vunpack.c.l.b16 %v5027
        %v5099 = vunpack.c.l.b16 %v5028
        %v5100 = vunpack.c.l.b16 %v5029
        %v5101 = vunpack.c.l.b16 %v5030
        %v5102 = vunpack.c.l.b16 %v5031
        %v5103 = vunpack.c.l.b16 %v5032
        %v5104 = vunpack.c.l.b16 %v5033
        %v5105 = vpack.c.b16 %v5074, %v5073
        %v5106 = vpack.c.b16 %v5076, %v5075
        %v5107 = vpack.c.b16 %v5078, %v5077
        %v5108 = vpack.c.b16 %v5080, %v5079
        %v5109 = vpack.c.b16 %v5082, %v5081
        %v5110 = vpack.c.b16 %v5084, %v5083
        %v5111 = vpack.c.b16 %v5086, %v5085
        %v5112 = vpack.c.b16 %v5088, %v5087
        %v5113 = vpack.c.b16 %v5090, %v5089
        %v5114 = vpack.c.b16 %v5092, %v5091
        %v5115 = vpack.c.b16 %v5094, %v5093
        %v5116 = vpack.c.b16 %v5096, %v5095
        %v5117 = vpack.c.b16 %v5098, %v5097
        %v5118 = vpack.c.b16 %v5100, %v5099
        %v5119 = vpack.c.b16 %v5102, %v5101
        %v5120 = vpack.c.b16 %v5104, %v5103
        %5137 = vmatprep.subr.bf16.mxu0 0
        %5138 = vmatpush1.bf16.msra.mxu0 %v5112
        %5139 = vmatprep.subr.bf16.mxu0 0
        %5140 = vmatpush1.bf16.msra.mxu0 %v5111
        %5141 = vmatprep.subr.bf16.mxu0 0
        %5142 = vmatpush1.bf16.msra.mxu0 %v5110
        %5143 = vmatprep.subr.bf16.mxu0 0
        %5144 = vmatpush1.bf16.msra.mxu0 %v5109
        %5145 = vmatprep.subr.bf16.mxu0 0
        %5146 = vmatpush1.bf16.msra.mxu0 %v5108
        %5147 = vmatprep.subr.bf16.mxu0 0
        %5148 = vmatpush1.bf16.msra.mxu0 %v5107
        %5149 = vmatprep.subr.bf16.mxu0 0
        %5150 = vmatpush1.bf16.msra.mxu0 %v5106
        %5151 = vmatprep.subr.bf16.mxu0 0
        %5152 = vmatpush1.bf16.msra.mxu0 %v5105
        %5153 = vmatprep.subr.bf16.mxu0 0
        %5154 = vmatpush2.bf16.msra.mxu0 %v5120
        %5155 = vmatprep.subr.bf16.mxu0 0
        %5156 = vmatpush2.bf16.msra.mxu0 %v5119
        %5157 = vmatprep.subr.bf16.mxu0 0
        %5158 = vmatpush2.bf16.msra.mxu0 %v5118
        %5159 = vmatprep.subr.bf16.mxu0 0
        %5160 = vmatpush2.bf16.msra.mxu0 %v5117
        %5161 = vmatprep.subr.bf16.mxu0 0
        %5162 = vmatpush2.bf16.msra.mxu0 %v5116
        %5163 = vmatprep.subr.bf16.mxu0 0
        %5164 = vmatpush2.bf16.msra.mxu0 %v5115
        %5165 = vmatprep.subr.bf16.mxu0 0
        %5166 = vmatpush2.bf16.msra.mxu0 %v5114
        %5167 = vmatprep.subr.bf16.mxu0 0
        %5168 = vmatpush2.bf16.msra.mxu0 %v5113
        %5169 = vmatprep.mubr.bf16.mxu0 %v4987
        %5170 = vmatmul.mubr.bf16.gmra.mxu0 %v4986
        %v5171 = vpop.f32.mrf.mxu0
        %v5172 = vadd.f32 %v5039, %v5171
        %v5173 = vpop.f32.mrf.mxu0
        %v5174 = vpop.f32.mrf.mxu0
        %v5175 = vadd.f32 %v5039, %v5174
        %v5176 = vpop.f32.mrf.mxu0
        %5177 = vmatprep.mubr.bf16.mxu0 %v4989
        %5178 = vmatmul.mubr.bf16.gmra.mxu0 %v4988
        %v5179 = vpop.f32.mrf.mxu0
        %v5180 = vadd.f32 %v5039, %v5179
        %v5181 = vpop.f32.mrf.mxu0
        %v5182 = vpop.f32.mrf.mxu0
        %v5183 = vadd.f32 %v5039, %v5182
        %v5184 = vpop.f32.mrf.mxu0
        %5185 = vmatprep.mubr.bf16.mxu0 %v4991
        %5186 = vmatmul.mubr.bf16.gmra.mxu0 %v4990
        %v5187 = vpop.f32.mrf.mxu0
        %v5188 = vadd.f32 %v5039, %v5187
        %v5189 = vpop.f32.mrf.mxu0
        %v5190 = vpop.f32.mrf.mxu0
        %v5191 = vadd.f32 %v5039, %v5190
        %v5192 = vpop.f32.mrf.mxu0
        %5193 = vmatprep.mubr.bf16.mxu0 %v4993
        %5194 = vmatmul.mubr.bf16.gmra.mxu0 %v4992
        %v5195 = vpop.f32.mrf.mxu0
        %v5196 = vadd.f32 %v5039, %v5195
        %v5197 = vpop.f32.mrf.mxu0
        %v5198 = vpop.f32.mrf.mxu0
        %v5199 = vadd.f32 %v5039, %v5198
        %v5200 = vpop.f32.mrf.mxu0
        %5201 = vmatprep.mubr.bf16.mxu0 %v4995
        %5202 = vmatmul.mubr.bf16.gmra.mxu0 %v4994
        %v5203 = vpop.f32.mrf.mxu0
        %v5204 = vadd.f32 %v5039, %v5203
        %v5205 = vpop.f32.mrf.mxu0
        %v5206 = vpop.f32.mrf.mxu0
        %v5207 = vadd.f32 %v5039, %v5206
        %v5208 = vpop.f32.mrf.mxu0
        %5209 = vmatprep.mubr.bf16.mxu0 %v4997
        %5210 = vmatmul.mubr.bf16.gmra.mxu0 %v4996
        %v5211 = vpop.f32.mrf.mxu0
        %v5212 = vadd.f32 %v5039, %v5211
        %v5213 = vpop.f32.mrf.mxu0
        %v5214 = vpop.f32.mrf.mxu0
        %v5215 = vadd.f32 %v5039, %v5214
        %v5216 = vpop.f32.mrf.mxu0
        %5217 = vmatprep.mubr.bf16.mxu0 %v4999
        %5218 = vmatmul.mubr.bf16.gmra.mxu0 %v4998
        %v5219 = vpop.f32.mrf.mxu0
        %v5220 = vadd.f32 %v5039, %v5219
        %v5221 = vpop.f32.mrf.mxu0
        %v5222 = vpop.f32.mrf.mxu0
        %v5223 = vadd.f32 %v5039, %v5222
        %v5224 = vpop.f32.mrf.mxu0
        %5225 = vmatprep.mubr.bf16.mxu0 %v5001
        %5226 = vmatmul.mubr.bf16.gmra.mxu0 %v5000
        %v5227 = vpop.f32.mrf.mxu0
        %v5228 = vadd.f32 %v5039, %v5227
        %v5229 = vpop.f32.mrf.mxu0
        %v5230 = vpop.f32.mrf.mxu0
        %v5231 = vadd.f32 %v5039, %v5230
        %v5232 = vpop.f32.mrf.mxu0
        %5233 = vdwg.mxu0
        %vm5234 = vcmask 64512
        %5235 = vst.msk [vmem:[%s364] sm:$0xff] %vm5234, %v5172
        %5236 = vst.msk [vmem:[%s364 + $0x8] sm:$0xff] %vm5234, %v5175
        %5237 = vst.msk [vmem:[%s364 + $0x10] sm:$0xff] %vm5234, %v5180
        %5238 = vst.msk [vmem:[%s364 + $0x18] sm:$0xff] %vm5234, %v5183
        %5239 = vst.msk [vmem:[%s364 + $0x20] sm:$0xff] %vm5234, %v5188
        %5240 = vst.msk [vmem:[%s364 + $0x28] sm:$0xff] %vm5234, %v5191
        %5241 = vst.msk [vmem:[%s364 + $0x30] sm:$0xff] %vm5234, %v5196
        %5242 = vst.msk [vmem:[%s364 + $0x38] sm:$0xff] %vm5234, %v5199
        %5243 = vst.msk [vmem:[%s364 + $0x40] sm:$0xff] %vm5234, %v5204
        %5244 = vst.msk [vmem:[%s364 + $0x48] sm:$0xff] %vm5234, %v5207
        %5245 = vst.msk [vmem:[%s364 + $0x50] sm:$0xff] %vm5234, %v5212
        %5246 = vst.msk [vmem:[%s364 + $0x58] sm:$0xff] %vm5234, %v5215
        %5247 = vst.msk [vmem:[%s364 + $0x60] sm:$0xff] %vm5234, %v5220
        %5248 = vst.msk [vmem:[%s364 + $0x68] sm:$0xff] %vm5234, %v5223
        %5249 = vst.msk [vmem:[%s364 + $0x70] sm:$0xff] %vm5234, %v5228
        %5250 = vst.msk [vmem:[%s364 + $0x78] sm:$0xff] %vm5234, %v5231
        %s5251 = smul.u32 16, %s22
        %p5252 = scmp.lt.s32.totalorder %s5251, 31
        %s5253 = scalar_select %p5252, %s5251, 31
        %s5254 = smul.addr %s5253, 8
        %s5255 = scalar_lea.vmem %s9, %s5254
        // Predicated region
        $region65: #{tpu_custom_call.1} parent=55 // pred_check
          %p5256 = pneg %p234
        $region66: #{tpu_custom_call.1} parent=55 // pred_check_branch
          %5258 = sbr.rel (%p5256) target = $region68
        $region67: #{tpu_custom_call.1} parent=55 // pred_region
          %s5259 = smul.u32 16, %s22
        $region68: #{tpu_custom_call.1} parent=55 // pred_fallthru
          _
      $region56: #{tpu_custom_call.1} parent=5 // pred_fallthru
        _
      %p5260 = scmp.le.s32.totalorder 2, %s17
      // Predicated region
      $region69: #{tpu_custom_call.1} parent=5 // pred_check
        %p5261 = pneg %p5260
      $region70: #{tpu_custom_call.1} parent=5 // pred_check_branch
        %5263 = sbr.rel (%p5261) target = $region72
      $region71: #{tpu_custom_call.1} parent=5 // pred_region
        %s5264 = ssub.s32 %s17, 2
        // Predicated region
        $region73: #{tpu_custom_call.1} parent=71 // pred_check
          %p5265 = pneg %p240
        $region74: #{tpu_custom_call.1} parent=71 // pred_check_branch
          %5267 = sbr.rel (%p5265) target = $region76
        $region75: #{tpu_custom_call.1} parent=71 // pred_region
          %s5268 = smul.u32 16, %s23
          %p5269 = scmp.lt.s32.totalorder %s5268, 31
          %s5270 = scalar_select %p5269, %s5268, 31
          %s5271 = smul.addr %s5270, 8
          %s5272 = scalar_lea.vmem %s9, %s5271
        $region76: #{tpu_custom_call.1} parent=71 // pred_fallthru
          _
      $region72: #{tpu_custom_call.1} parent=5 // pred_fallthru
        _
    $region6: #{tpu_custom_call.1} parent=1 // loop_footer
      %s21 = sadd.s32 1, %s17
    $region7: #{tpu_custom_call.1} parent=1 // loop_footer_branch
      %16 = sbr.rel target = $region3
    $region8: #{tpu_custom_call.1} parent=1 // loop_exit
      _
    %5273 = vsyncpa [#allocation3], 1
    %s5274 = scalar_lea.sflag [#allocation3], 1
    %5275 = vsyncpa %s5274, 1
    %5276 = vsyncpa [#allocation5], 1

</llo_original>
